<compile_context>
chip_gen: v6e
topology: v6e:2x2x1
jax: 0.10.0
libtpu: 0.0.40
codegen_flags: <defaults>
</compile_context>

<pallas_src>
import functools

import jax
import jax.numpy as jnp
from jax.experimental import pallas as pl
from jax.experimental.pallas import tpu as pltpu

# ----------------------------- config -------------------------------------
NUM_CLASSES = 5          # incl. background (class 0)
MASK_DIM = 8             # prototype / coefficient dimension
NUM_AR = 3               # priors per feature-map location
ASPECT_RATIOS = (1.0, 0.5, 2.0)
FEAT_SIZE = 8            # prediction-head feature map is 8x8
PROTO_SIZE = 16          # prototype masks are 16x16
TOP_K = 16               # fixed number of detections returned

LANE = 128

# fused-head column segments (box | conf | mask | protonet-stem)
HEAD_BOX = (0, NUM_AR * 4)                                     # (0, 12)
HEAD_CONF = (HEAD_BOX[1], HEAD_BOX[1] + NUM_AR * NUM_CLASSES)  # (12, 27)
HEAD_MASK = (HEAD_CONF[1], HEAD_CONF[1] + NUM_AR * MASK_DIM)   # (27, 51)
HEAD_PR1 = (HEAD_MASK[1], HEAD_MASK[1] + 32)                   # (51, 83)


def _round_up(x, m):
    return ((x + m - 1) // m) * m


# ----------------- Pallas kernel: matmul + bias + fused act(s) --------------
def _mm_bias_act_kernel(a_ref, w_ref, b_ref, o_ref, *, acts):
    # bf16 operands, f32 MXU accumulation; bias + activation epilogue in f32.
    acc = jnp.dot(a_ref[...], w_ref[...], preferred_element_type=jnp.float32)
    acc = acc + b_ref[...]
    if isinstance(acts, str):
        if acts == "relu":
            acc = jnp.maximum(acc, 0.0)
        elif acts == "tanh":
            acc = jnp.tanh(acc)
    else:
        # per-column-segment activations for the fused prediction head
        col = jax.lax.broadcasted_iota(jnp.int32, acc.shape, 1)
        for (s, e, act) in acts:
            if act == "none":
                continue
            m = (col >= s) & (col < e)
            if act == "relu":
                acc = jnp.where(m, jnp.maximum(acc, 0.0), acc)
            elif act == "tanh":
                acc = jnp.where(m, jnp.tanh(acc), acc)
    o_ref[...] = acc.astype(o_ref.dtype)


def matmul_bias_act(a, w_p, b_p, acts="none", n_tiles=2):
    """a:(M,K) fp, w_p:(Kp,Np) bf16 pre-padded, b_p:(1,Np) f32 -> (M,Np) f32."""
    M, K = a.shape
    Kp, Np = w_p.shape
    if M % (8 * n_tiles) != 0:
        n_tiles = 1
    a = a.astype(jnp.bfloat16)
    if Kp != K:
        a = jnp.pad(a, ((0, 0), (0, Kp - K)))    # only A's K dim padded per call
    tm = M // n_tiles
    return pl.pallas_call(
        functools.partial(_mm_bias_act_kernel, acts=acts),
        out_shape=jax.ShapeDtypeStruct((M, Np), jnp.float32),
        grid=(n_tiles,),
        in_specs=[
            pl.BlockSpec((tm, Kp), lambda i: (i, 0)),
            pl.BlockSpec((Kp, Np), lambda i: (0, 0)),
            pl.BlockSpec((1, Np), lambda i: (0, 0)),
        ],
        out_specs=pl.BlockSpec((tm, Np), lambda i: (i, 0)),
        compiler_params=pltpu.CompilerParams(dimension_semantics=("parallel",)),
    )(a, w_p, b_p)


# ------------- Pallas kernel: detect scores (lane-dense layout) -------------
def _detect_kernel(c_ref, s_ref, k_ref):
    # c_ref: (NUM_CLASSES, NP) logits, priors on lanes -> lane-dense stores.
    x = c_ref[...]
    m = jnp.max(x, axis=0, keepdims=True)                  # cheap sublane reduce
    denom = jnp.sum(jnp.exp(x - m), axis=0, keepdims=True)
    best = x[1:2, :]                                       # foreground classes
    best_idx = jnp.zeros((1, x.shape[1]), jnp.int32)
    for c in range(2, NUM_CLASSES):
        xc = x[c:c + 1, :]
        upd = xc > best
        best = jnp.where(upd, xc, best)
        best_idx = jnp.where(upd, jnp.int32(c - 1), best_idx)
    s_ref[...] = jnp.exp(best - m) / denom                 # softmax prob of best fg
    k_ref[...] = best_idx


def detect_scores(conf_t):
    """conf_t: (NUM_CLASSES, num_priors) logits -> (scores, classes), (1,NP)."""
    C, NP = conf_t.shape
    return pl.pallas_call(
        _detect_kernel,
        out_shape=(jax.ShapeDtypeStruct((1, NP), jnp.float32),
                   jax.ShapeDtypeStruct((1, NP), jnp.int32)),
        grid=(1,),
        in_specs=[pl.BlockSpec((C, NP), lambda i: (0, 0))],
        out_specs=[pl.BlockSpec((1, NP), lambda i: (0, 0)),
                   pl.BlockSpec((1, NP), lambda i: (0, 0))],
    )(conf_t)


# ----------------------------- conv via im2col (NHWC) -----------------------
def im2col_nhwc(x, kh, kw, stride, padding):
    patches = jax.lax.conv_general_dilated_patches(
        x, (kh, kw), (stride, stride),
        [(padding, padding), (padding, padding)],
        dimension_numbers=("NHWC", "HWIO", "NHWC"))
    B, Ho, Wo, K = patches.shape
    return patches.reshape(B * Ho * Wo, K), (Ho, Wo)


def conv2d_nhwc(x, w_p, b_p, n_out, stride=1, padding=1, acts="none",
                kh=3, kw=3):
    """x: NHWC; w_p/b_p: pre-padded bf16 weight / f32 bias arrays.

    n_out, kh, kw, stride, padding are static Python ints (NOT pytree leaves),
    so shapes stay concrete under jit.  Returns NHWC f32.
    """
    B = x.shape[0]
    a, (Ho, Wo) = im2col_nhwc(x, kh, kw, stride, padding)
    out = matmul_bias_act(a, w_p, b_p, acts=acts)
    return out[:, :n_out].reshape(B, Ho, Wo, n_out)


# ----------------------------- priors / decode ------------------------------
def make_priors():
    s = FEAT_SIZE
    ys, xs = jnp.meshgrid(jnp.arange(s, dtype=jnp.float32),
                          jnp.arange(s, dtype=jnp.float32), indexing="ij")
    cx = (xs.reshape(-1, 1) + 0.5) / s
    cy = (ys.reshape(-1, 1) + 0.5) / s
    ars = jnp.array(ASPECT_RATIOS, jnp.float32)
    scale = 0.25
    w = scale * jnp.sqrt(ars)[None, :]
    h = scale / jnp.sqrt(ars)[None, :]
    n = s * s
    priors = jnp.stack([
        jnp.broadcast_to(cx, (n, NUM_AR)),
        jnp.broadcast_to(cy, (n, NUM_AR)),
        jnp.broadcast_to(w, (n, NUM_AR)),
        jnp.broadcast_to(h, (n, NUM_AR)),
    ], axis=-1)
    return priors.reshape(-1, 4)  # (num_priors, 4) cxcywh


def decode_boxes(loc, priors):
    v0, v1 = 0.1, 0.2
    cxcy = priors[:, :2] + loc[:, :2] * v0 * priors[:, 2:]
    wh = priors[:, 2:] * jnp.exp(loc[:, 2:] * v1)
    return jnp.concatenate([cxcy - wh / 2.0, cxcy + wh / 2.0], axis=-1)


# ----------------------------- parameters ----------------------------------
def _conv_init(key, cout, cin, k=3):
    kw_, kb_ = jax.random.split(key)
    fan_in = cin * k * k
    w = jax.random.normal(kw_, (cout, cin, k, k), jnp.float32) / jnp.sqrt(fan_in)
    b = 0.01 * jax.random.normal(kb_, (cout,), jnp.float32)
    return w, b


def _prep(w_oihw, b):
    """OIHW weight -> pre-padded matmul operands (arrays only, done ONCE)."""
    cout, cin, kh, kw = w_oihw.shape
    K = cin * kh * kw
    Kp = _round_up(K, LANE)
    Np = _round_up(cout, LANE)
    wm = jnp.zeros((Kp, Np), jnp.float32).at[:K, :cout].set(
        w_oihw.reshape(cout, K).T)
    bm = jnp.zeros((1, Np), jnp.float32).at[0, :cout].set(b)
    return wm.astype(jnp.bfloat16), bm


def init_params(key):
    ks = jax.random.split(key, 8)
    raw = {
        "bb1": _conv_init(ks[0], 16, 3),
        "bb2": _conv_init(ks[1], 32, 16),
        "neck": _conv_init(ks[2], 64, 32),
        "box": _conv_init(ks[3], NUM_AR * 4, 64),
        "conf": _conv_init(ks[4], NUM_AR * NUM_CLASSES, 64),
        "mask": _conv_init(ks[5], NUM_AR * MASK_DIM, 64),
        "pr1": _conv_init(ks[6], 32, 64),
        "pr2": _conv_init(ks[7], MASK_DIM, 32),
    }
    params = {}
    for name in ("bb1", "bb2", "neck", "pr2"):
        w, b = _prep(*raw[name])
        params[name + "_w"], params[name + "_b"] = w, b
    # fuse the four p3-consumer heads into one weight along Cout
    hw = jnp.concatenate([raw[k][0] for k in ("box", "conf", "mask", "pr1")],
                         axis=0)
    hb = jnp.concatenate([raw[k][1] for k in ("box", "conf", "mask", "pr1")],
                         axis=0)
    params["head_w"], params["head_b"] = _prep(hw, hb)
    params["priors"] = make_priors()
    return params


# ----------------------------- forward pass ---------------------------------
def yolact_wrapper_forward(params, x):
    B = x.shape[0]
    x = x.transpose(0, 2, 3, 1)  # module boundary NCHW -> NHWC once

    # tiny backbone (stand-in for ResNet/FPN of yolact_edge)
    f1 = conv2d_nhwc(x, params["bb1_w"], params["bb1_b"], 16,
                     stride=2, padding=1, acts="relu")
    f2 = conv2d_nhwc(f1, params["bb2_w"], params["bb2_b"], 32,
                     stride=2, padding=1, acts="relu")
    p3 = conv2d_nhwc(f2, params["neck_w"], params["neck_b"], 64,
                     stride=1, padding=1, acts="relu")

    # fused prediction head + protonet stem: one matmul on the shared p3 im2col
    a, (Ho, Wo) = im2col_nhwc(p3, 3, 3, 1, 1)
    head = matmul_bias_act(
        a, params["head_w"], params["head_b"],
        acts=((HEAD_MASK[0], HEAD_MASK[1], "tanh"),
              (HEAD_PR1[0], HEAD_PR1[1], "relu")))
    rows0 = Ho * Wo  # image-0 rows of the (B*Ho*Wo, Np) output

    loc0 = head[:rows0, HEAD_BOX[0]:HEAD_BOX[1]].reshape(-1, 4)          # (P,4)
    conf0 = head[:rows0, HEAD_CONF[0]:HEAD_CONF[1]].reshape(-1, NUM_CLASSES)
    mcoef0 = head[:rows0, HEAD_MASK[0]:HEAD_MASK[1]].reshape(-1, MASK_DIM)
    pr1 = head[:, HEAD_PR1[0]:HEAD_PR1[1]].reshape(B, Ho, Wo, 32)

    # protonet: nearest 2x upsample then conv (relu)
    # TODO(synk): yolact uses bilinear upsample; nearest used here.  Folding the
    #             upsample into the pr2 im2col gather would remove the repeat.
    pr = jnp.repeat(jnp.repeat(pr1, 2, axis=1), 2, axis=2)
    proto_full = conv2d_nhwc(pr, params["pr2_w"], params["pr2_b"], MASK_DIM,
                             stride=1, padding=1, acts="relu")
    proto = proto_full[0]                                  # (16,16,MASK_DIM)

    # Detect for image 0: softmax + foreground max/argmax in one lane-dense
    # kernel (priors on lanes, classes on sublanes).
    scores_row, classes_row = detect_scores(conf0.T)
    scores = scores_row[0]
    classes = classes_row[0]

    # TODO(synk): fast-NMS / conf_thresh filtering (variable-length output) not
    #             expressible as a static Pallas kernel; plain top-k used.
    top_scores, idx = jax.lax.top_k(scores, TOP_K)
    boxes0 = decode_boxes(loc0, params["priors"])

    out_class = classes[idx]           # (TOP_K,)
    out_score = top_scores             # (TOP_K,)
    out_box = boxes0[idx]              # (TOP_K, 4)
    out_mask = mcoef0[idx]             # (TOP_K, MASK_DIM)
    out_proto = proto                  # (PROTO_SIZE, PROTO_SIZE, MASK_DIM)
    return out_class, out_score, out_box, out_mask, out_proto


# ----------------------------- main -----------------------------------------
if __name__ == "__main__":
    key = jax.random.PRNGKey(0)
    k_x, k_p = jax.random.split(key)
    x = jax.random.normal(k_x, (2, 3, 32, 32), jnp.float32)   # NCHW
    params = init_params(k_p)

    fwd = jax.jit(yolact_wrapper_forward)
    cls, score, box, mask, proto = fwd(params, x)
    jax.block_until_ready((cls, score, box, mask, proto))

    assert cls.shape == (TOP_K,)
    assert score.shape == (TOP_K,)
    assert box.shape == (TOP_K, 4)
    assert mask.shape == (TOP_K, MASK_DIM)
    assert proto.shape == (PROTO_SIZE, PROTO_SIZE, MASK_DIM)
    print("KERNEL_OK")
</pallas_src>

<mosaic_0001>
module attributes {stable_mosaic.version = 11 : i64} {
  func.func @_mm_bias_act_kernel(%arg0: i32, %arg1: memref<256x128xbf16, #tpu.memory_space<vmem>>, %arg2: memref<128x128xbf16, #tpu.memory_space<vmem>>, %arg3: memref<1x128xf32, #tpu.memory_space<vmem>>, %arg4: memref<256x128xf32, #tpu.memory_space<vmem>>) attributes {dimension_semantics = [#tpu.dimension_semantics<parallel>], iteration_bounds = array<i64: 2>, scalar_prefetch = 0 : i64, scratch_operands = 0 : i64, tpu.core_type = #tpu.core_type<tc>, window_params = [{transform_indices = @transform_0, window_bounds = array<i64: 256, 128>}, {pipeline_mode = #tpu.pipeline_mode<synchronous>, transform_indices = @transform_1, window_bounds = array<i64: 128, 128>}, {pipeline_mode = #tpu.pipeline_mode<synchronous>, transform_indices = @transform_2, window_bounds = array<i64: 1, 128>}, {transform_indices = @transform_3, window_bounds = array<i64: 256, 128>}]} {
    %c0 = arith.constant 0 : index
    %c0_0 = arith.constant 0 : index
    %0 = vector.load %arg1[%c0, %c0_0] : memref<256x128xbf16, #tpu.memory_space<vmem>>, vector<256x128xbf16>
    %c0_1 = arith.constant 0 : index
    %c0_2 = arith.constant 0 : index
    %1 = vector.load %arg2[%c0_1, %c0_2] : memref<128x128xbf16, #tpu.memory_space<vmem>>, vector<128x128xbf16>
    %cst = arith.constant dense<0.000000e+00> : vector<256x128xf32>
    %2 = tpu.matmul %0, %1, %cst {dimension_numbers = #tpu.dot_dimension_numbers<[1], [0], [0], [1], [0, 0, 1, 1], [], []>} : vector<256x128xbf16>, vector<128x128xbf16>, vector<256x128xf32> -> vector<256x128xf32>
    %c0_3 = arith.constant 0 : index
    %c0_4 = arith.constant 0 : index
    %3 = vector.load %arg3[%c0_3, %c0_4] : memref<1x128xf32, #tpu.memory_space<vmem>>, vector<1x128xf32>
    %4 = vector.broadcast %3 : vector<1x128xf32> to vector<256x128xf32>
    %5 = arith.addf %2, %4 : vector<256x128xf32>
    %cst_5 = arith.constant 0.000000e+00 : f32
    %6 = vector.broadcast %cst_5 : f32 to vector<256x128xf32>
    %7 = arith.maximumf %5, %6 : vector<256x128xf32>
    %c0_6 = arith.constant 0 : index
    %c0_7 = arith.constant 0 : index
    %8 = vector.load %arg4[%c0_6, %c0_7] : memref<256x128xf32, #tpu.memory_space<vmem>>, vector<256x128xf32>
    tpu.vector_store %arg4[%c0_6, %c0_7], %7 {strides = array<i32>} : memref<256x128xf32, #tpu.memory_space<vmem>>, vector<256x128xf32>,
    return
  }
  func.func @transform_0(%arg0: i32) -> (i32, i32) {
    %c0_i32 = arith.constant 0 : i32
    %c0_i32_0 = arith.constant 0 : i32
    return %arg0, %c0_i32 : i32, i32
  }
  func.func @transform_1(%arg0: i32) -> (i32, i32) {
    %c0_i32 = arith.constant 0 : i32
    %c0_i32_0 = arith.constant 0 : i32
    %c0_i32_1 = arith.constant 0 : i32
    return %c0_i32, %c0_i32_0 : i32, i32
  }
  func.func @transform_2(%arg0: i32) -> (i32, i32) {
    %c0_i32 = arith.constant 0 : i32
    %c0_i32_0 = arith.constant 0 : i32
    %c0_i32_1 = arith.constant 0 : i32
    return %c0_i32, %c0_i32_0 : i32, i32
  }
  func.func @transform_3(%arg0: i32) -> (i32, i32) {
    %c0_i32 = arith.constant 0 : i32
    %c0_i32_0 = arith.constant 0 : i32
    return %arg0, %c0_i32 : i32, i32
  }
}

module attributes {stable_mosaic.version = 11 : i64} {
  func.func @_mm_bias_act_kernel(%arg0: i32, %arg1: memref<64x256xbf16, #tpu.memory_space<vmem>>, %arg2: memref<256x128xbf16, #tpu.memory_space<vmem>>, %arg3: memref<1x128xf32, #tpu.memory_space<vmem>>, %arg4: memref<64x128xf32, #tpu.memory_space<vmem>>) attributes {dimension_semantics = [#tpu.dimension_semantics<parallel>], iteration_bounds = array<i64: 2>, scalar_prefetch = 0 : i64, scratch_operands = 0 : i64, tpu.core_type = #tpu.core_type<tc>, window_params = [{transform_indices = @transform_0, window_bounds = array<i64: 64, 256>}, {pipeline_mode = #tpu.pipeline_mode<synchronous>, transform_indices = @transform_1, window_bounds = array<i64: 256, 128>}, {pipeline_mode = #tpu.pipeline_mode<synchronous>, transform_indices = @transform_2, window_bounds = array<i64: 1, 128>}, {transform_indices = @transform_3, window_bounds = array<i64: 64, 128>}]} {
    %c0 = arith.constant 0 : index
    %c0_0 = arith.constant 0 : index
    %0 = vector.load %arg1[%c0, %c0_0] : memref<64x256xbf16, #tpu.memory_space<vmem>>, vector<64x256xbf16>
    %c0_1 = arith.constant 0 : index
    %c0_2 = arith.constant 0 : index
    %1 = vector.load %arg2[%c0_1, %c0_2] : memref<256x128xbf16, #tpu.memory_space<vmem>>, vector<256x128xbf16>
    %cst = arith.constant dense<0.000000e+00> : vector<64x128xf32>
    %2 = tpu.matmul %0, %1, %cst {dimension_numbers = #tpu.dot_dimension_numbers<[1], [0], [0], [1], [0, 0, 1, 1], [], []>} : vector<64x256xbf16>, vector<256x128xbf16>, vector<64x128xf32> -> vector<64x128xf32>
    %c0_3 = arith.constant 0 : index
    %c0_4 = arith.constant 0 : index
    %3 = vector.load %arg3[%c0_3, %c0_4] : memref<1x128xf32, #tpu.memory_space<vmem>>, vector<1x128xf32>
    %4 = vector.broadcast %3 : vector<1x128xf32> to vector<64x128xf32>
    %5 = arith.addf %2, %4 : vector<64x128xf32>
    %cst_5 = arith.constant 0.000000e+00 : f32
    %6 = vector.broadcast %cst_5 : f32 to vector<64x128xf32>
    %7 = arith.maximumf %5, %6 : vector<64x128xf32>
    %c0_6 = arith.constant 0 : index
    %c0_7 = arith.constant 0 : index
    %8 = vector.load %arg4[%c0_6, %c0_7] : memref<64x128xf32, #tpu.memory_space<vmem>>, vector<64x128xf32>
    tpu.vector_store %arg4[%c0_6, %c0_7], %7 {strides = array<i32>} : memref<64x128xf32, #tpu.memory_space<vmem>>, vector<64x128xf32>,
    return
  }
  func.func @transform_0(%arg0: i32) -> (i32, i32) {
    %c0_i32 = arith.constant 0 : i32
    %c0_i32_0 = arith.constant 0 : i32
    return %arg0, %c0_i32 : i32, i32
  }
  func.func @transform_1(%arg0: i32) -> (i32, i32) {
    %c0_i32 = arith.constant 0 : i32
    %c0_i32_0 = arith.constant 0 : i32
    %c0_i32_1 = arith.constant 0 : i32
    return %c0_i32, %c0_i32_0 : i32, i32
  }
  func.func @transform_2(%arg0: i32) -> (i32, i32) {
    %c0_i32 = arith.constant 0 : i32
    %c0_i32_0 = arith.constant 0 : i32
    %c0_i32_1 = arith.constant 0 : i32
    return %c0_i32, %c0_i32_0 : i32, i32
  }
  func.func @transform_3(%arg0: i32) -> (i32, i32) {
    %c0_i32 = arith.constant 0 : i32
    %c0_i32_0 = arith.constant 0 : i32
    return %arg0, %c0_i32 : i32, i32
  }
}

module attributes {stable_mosaic.version = 11 : i64} {
  func.func @_mm_bias_act_kernel(%arg0: i32, %arg1: memref<64x384xbf16, #tpu.memory_space<vmem>>, %arg2: memref<384x128xbf16, #tpu.memory_space<vmem>>, %arg3: memref<1x128xf32, #tpu.memory_space<vmem>>, %arg4: memref<64x128xf32, #tpu.memory_space<vmem>>) attributes {dimension_semantics = [#tpu.dimension_semantics<parallel>], iteration_bounds = array<i64: 2>, scalar_prefetch = 0 : i64, scratch_operands = 0 : i64, tpu.core_type = #tpu.core_type<tc>, window_params = [{transform_indices = @transform_0, window_bounds = array<i64: 64, 384>}, {pipeline_mode = #tpu.pipeline_mode<synchronous>, transform_indices = @transform_1, window_bounds = array<i64: 384, 128>}, {pipeline_mode = #tpu.pipeline_mode<synchronous>, transform_indices = @transform_2, window_bounds = array<i64: 1, 128>}, {transform_indices = @transform_3, window_bounds = array<i64: 64, 128>}]} {
    %c0 = arith.constant 0 : index
    %c0_0 = arith.constant 0 : index
    %0 = vector.load %arg1[%c0, %c0_0] : memref<64x384xbf16, #tpu.memory_space<vmem>>, vector<64x384xbf16>
    %c0_1 = arith.constant 0 : index
    %c0_2 = arith.constant 0 : index
    %1 = vector.load %arg2[%c0_1, %c0_2] : memref<384x128xbf16, #tpu.memory_space<vmem>>, vector<384x128xbf16>
    %cst = arith.constant dense<0.000000e+00> : vector<64x128xf32>
    %2 = tpu.matmul %0, %1, %cst {dimension_numbers = #tpu.dot_dimension_numbers<[1], [0], [0], [1], [0, 0, 1, 1], [], []>} : vector<64x384xbf16>, vector<384x128xbf16>, vector<64x128xf32> -> vector<64x128xf32>
    %c0_3 = arith.constant 0 : index
    %c0_4 = arith.constant 0 : index
    %3 = vector.load %arg3[%c0_3, %c0_4] : memref<1x128xf32, #tpu.memory_space<vmem>>, vector<1x128xf32>
    %4 = vector.broadcast %3 : vector<1x128xf32> to vector<64x128xf32>
    %5 = arith.addf %2, %4 : vector<64x128xf32>
    %cst_5 = arith.constant 0.000000e+00 : f32
    %6 = vector.broadcast %cst_5 : f32 to vector<64x128xf32>
    %7 = arith.maximumf %5, %6 : vector<64x128xf32>
    %c0_6 = arith.constant 0 : index
    %c0_7 = arith.constant 0 : index
    %8 = vector.load %arg4[%c0_6, %c0_7] : memref<64x128xf32, #tpu.memory_space<vmem>>, vector<64x128xf32>
    tpu.vector_store %arg4[%c0_6, %c0_7], %7 {strides = array<i32>} : memref<64x128xf32, #tpu.memory_space<vmem>>, vector<64x128xf32>,
    return
  }
  func.func @transform_0(%arg0: i32) -> (i32, i32) {
    %c0_i32 = arith.constant 0 : i32
    %c0_i32_0 = arith.constant 0 : i32
    return %arg0, %c0_i32 : i32, i32
  }
  func.func @transform_1(%arg0: i32) -> (i32, i32) {
    %c0_i32 = arith.constant 0 : i32
    %c0_i32_0 = arith.constant 0 : i32
    %c0_i32_1 = arith.constant 0 : i32
    return %c0_i32, %c0_i32_0 : i32, i32
  }
  func.func @transform_2(%arg0: i32) -> (i32, i32) {
    %c0_i32 = arith.constant 0 : i32
    %c0_i32_0 = arith.constant 0 : i32
    %c0_i32_1 = arith.constant 0 : i32
    return %c0_i32, %c0_i32_0 : i32, i32
  }
  func.func @transform_3(%arg0: i32) -> (i32, i32) {
    %c0_i32 = arith.constant 0 : i32
    %c0_i32_0 = arith.constant 0 : i32
    return %arg0, %c0_i32 : i32, i32
  }
}

module attributes {stable_mosaic.version = 11 : i64} {
  func.func @_mm_bias_act_kernel(%arg0: i32, %arg1: memref<64x640xbf16, #tpu.memory_space<vmem>>, %arg2: memref<640x128xbf16, #tpu.memory_space<vmem>>, %arg3: memref<1x128xf32, #tpu.memory_space<vmem>>, %arg4: memref<64x128xf32, #tpu.memory_space<vmem>>) attributes {dimension_semantics = [#tpu.dimension_semantics<parallel>], iteration_bounds = array<i64: 2>, scalar_prefetch = 0 : i64, scratch_operands = 0 : i64, tpu.core_type = #tpu.core_type<tc>, window_params = [{transform_indices = @transform_0, window_bounds = array<i64: 64, 640>}, {pipeline_mode = #tpu.pipeline_mode<synchronous>, transform_indices = @transform_1, window_bounds = array<i64: 640, 128>}, {pipeline_mode = #tpu.pipeline_mode<synchronous>, transform_indices = @transform_2, window_bounds = array<i64: 1, 128>}, {transform_indices = @transform_3, window_bounds = array<i64: 64, 128>}]} {
    %c0 = arith.constant 0 : index
    %c0_0 = arith.constant 0 : index
    %0 = vector.load %arg1[%c0, %c0_0] : memref<64x640xbf16, #tpu.memory_space<vmem>>, vector<64x640xbf16>
    %c0_1 = arith.constant 0 : index
    %c0_2 = arith.constant 0 : index
    %1 = vector.load %arg2[%c0_1, %c0_2] : memref<640x128xbf16, #tpu.memory_space<vmem>>, vector<640x128xbf16>
    %cst = arith.constant dense<0.000000e+00> : vector<64x128xf32>
    %2 = tpu.matmul %0, %1, %cst {dimension_numbers = #tpu.dot_dimension_numbers<[1], [0], [0], [1], [0, 0, 1, 1], [], []>} : vector<64x640xbf16>, vector<640x128xbf16>, vector<64x128xf32> -> vector<64x128xf32>
    %c0_3 = arith.constant 0 : index
    %c0_4 = arith.constant 0 : index
    %3 = vector.load %arg3[%c0_3, %c0_4] : memref<1x128xf32, #tpu.memory_space<vmem>>, vector<1x128xf32>
    %4 = vector.broadcast %3 : vector<1x128xf32> to vector<64x128xf32>
    %5 = arith.addf %2, %4 : vector<64x128xf32>
    %6 = tpu.iota {dimensions = array<i32: 1>} : vector<64x128xi32>
    %c27_i32 = arith.constant 27 : i32
    %7 = vector.broadcast %c27_i32 : i32 to vector<64x128xi32>
    %8 = arith.cmpi sge, %6, %7 : vector<64x128xi32>
    %c51_i32 = arith.constant 51 : i32
    %9 = vector.broadcast %c51_i32 : i32 to vector<64x128xi32>
    %10 = arith.cmpi slt, %6, %9 : vector<64x128xi32>
    %11 = arith.andi %8, %10 : vector<64x128xi1>
    %12 = math.tanh %5 : vector<64x128xf32>
    %13 = arith.select %11, %12, %5 : vector<64x128xi1>, vector<64x128xf32>
    %c51_i32_5 = arith.constant 51 : i32
    %14 = vector.broadcast %c51_i32_5 : i32 to vector<64x128xi32>
    %15 = arith.cmpi sge, %6, %14 : vector<64x128xi32>
    %c83_i32 = arith.constant 83 : i32
    %16 = vector.broadcast %c83_i32 : i32 to vector<64x128xi32>
    %17 = arith.cmpi slt, %6, %16 : vector<64x128xi32>
    %18 = arith.andi %15, %17 : vector<64x128xi1>
    %cst_6 = arith.constant 0.000000e+00 : f32
    %19 = vector.broadcast %cst_6 : f32 to vector<64x128xf32>
    %20 = arith.maximumf %13, %19 : vector<64x128xf32>
    %21 = arith.select %18, %20, %13 : vector<64x128xi1>, vector<64x128xf32>
    %c0_7 = arith.constant 0 : index
    %c0_8 = arith.constant 0 : index
    %22 = vector.load %arg4[%c0_7, %c0_8] : memref<64x128xf32, #tpu.memory_space<vmem>>, vector<64x128xf32>
    tpu.vector_store %arg4[%c0_7, %c0_8], %21 {strides = array<i32>} : memref<64x128xf32, #tpu.memory_space<vmem>>, vector<64x128xf32>,
    return
  }
  func.func @transform_0(%arg0: i32) -> (i32, i32) {
    %c0_i32 = arith.constant 0 : i32
    %c0_i32_0 = arith.constant 0 : i32
    return %arg0, %c0_i32 : i32, i32
  }
  func.func @transform_1(%arg0: i32) -> (i32, i32) {
    %c0_i32 = arith.constant 0 : i32
    %c0_i32_0 = arith.constant 0 : i32
    %c0_i32_1 = arith.constant 0 : i32
    return %c0_i32, %c0_i32_0 : i32, i32
  }
  func.func @transform_2(%arg0: i32) -> (i32, i32) {
    %c0_i32 = arith.constant 0 : i32
    %c0_i32_0 = arith.constant 0 : i32
    %c0_i32_1 = arith.constant 0 : i32
    return %c0_i32, %c0_i32_0 : i32, i32
  }
  func.func @transform_3(%arg0: i32) -> (i32, i32) {
    %c0_i32 = arith.constant 0 : i32
    %c0_i32_0 = arith.constant 0 : i32
    return %arg0, %c0_i32 : i32, i32
  }
}

module attributes {stable_mosaic.version = 11 : i64} {
  func.func @_detect_kernel(%arg0: i32, %arg1: memref<5x192xf32, #tpu.memory_space<vmem>>, %arg2: memref<1x192xf32, #tpu.memory_space<vmem>>, %arg3: memref<1x192xi32, #tpu.memory_space<vmem>>) attributes {dimension_semantics = [#tpu.dimension_semantics<arbitrary>], iteration_bounds = array<i64: 1>, scalar_prefetch = 0 : i64, scratch_operands = 0 : i64, tpu.core_type = #tpu.core_type<tc>, window_params = [{pipeline_mode = #tpu.pipeline_mode<synchronous>, transform_indices = @transform_0, window_bounds = array<i64: 5, 192>}, {pipeline_mode = #tpu.pipeline_mode<synchronous>, transform_indices = @transform_1, window_bounds = array<i64: 1, 192>}, {pipeline_mode = #tpu.pipeline_mode<synchronous>, transform_indices = @transform_2, window_bounds = array<i64: 1, 192>}]} {
    %c0 = arith.constant 0 : index
    %c0_0 = arith.constant 0 : index
    %0 = vector.load %arg1[%c0, %c0_0] : memref<5x192xf32, #tpu.memory_space<vmem>>, vector<5x192xf32>
    %cst = arith.constant dense<0xFF800000> : vector<192xf32>
    %1 = vector.multi_reduction <maximumf>, %0, %cst [0] : vector<5x192xf32> to vector<192xf32>
    %2 = vector.shape_cast %1 : vector<192xf32> to vector<1x192xf32>
    %3 = vector.broadcast %2 : vector<1x192xf32> to vector<5x192xf32>
    %4 = arith.subf %0, %3 : vector<5x192xf32>
    %5 = math.exp %4 : vector<5x192xf32>
    %cst_1 = arith.constant dense<0.000000e+00> : vector<192xf32>
    %6 = vector.multi_reduction <add>, %5, %cst_1 [0] : vector<5x192xf32> to vector<192xf32>
    %7 = vector.shape_cast %6 : vector<192xf32> to vector<1x192xf32>
    %8 = vector.extract_strided_slice %0 {offsets = [1, 0], sizes = [1, 192], strides = [1, 1]} : vector<5x192xf32> to vector<1x192xf32>
    %c0_i32 = arith.constant 0 : i32
    %9 = vector.broadcast %c0_i32 : i32 to vector<1x192xi32>
    %10 = vector.extract_strided_slice %0 {offsets = [2, 0], sizes = [1, 192], strides = [1, 1]} : vector<5x192xf32> to vector<1x192xf32>
    %11 = arith.cmpf ogt, %10, %8 : vector<1x192xf32>
    %12 = arith.select %11, %10, %8 : vector<1x192xi1>, vector<1x192xf32>
    %c1_i32 = arith.constant 1 : i32
    %13 = vector.broadcast %c1_i32 : i32 to vector<1x192xi32>
    %14 = arith.select %11, %13, %9 : vector<1x192xi1>, vector<1x192xi32>
    %15 = vector.extract_strided_slice %0 {offsets = [3, 0], sizes = [1, 192], strides = [1, 1]} : vector<5x192xf32> to vector<1x192xf32>
    %16 = arith.cmpf ogt, %15, %12 : vector<1x192xf32>
    %17 = arith.select %16, %15, %12 : vector<1x192xi1>, vector<1x192xf32>
    %c2_i32 = arith.constant 2 : i32
    %18 = vector.broadcast %c2_i32 : i32 to vector<1x192xi32>
    %19 = arith.select %16, %18, %14 : vector<1x192xi1>, vector<1x192xi32>
    %20 = vector.extract_strided_slice %0 {offsets = [4, 0], sizes = [1, 192], strides = [1, 1]} : vector<5x192xf32> to vector<1x192xf32>
    %21 = arith.cmpf ogt, %20, %17 : vector<1x192xf32>
    %22 = arith.select %21, %20, %17 : vector<1x192xi1>, vector<1x192xf32>
    %c3_i32 = arith.constant 3 : i32
    %23 = vector.broadcast %c3_i32 : i32 to vector<1x192xi32>
    %24 = arith.select %21, %23, %19 : vector<1x192xi1>, vector<1x192xi32>
    %25 = arith.subf %22, %2 : vector<1x192xf32>
    %26 = math.exp %25 : vector<1x192xf32>
    %27 = arith.divf %26, %7 : vector<1x192xf32>
    %c0_2 = arith.constant 0 : index
    %c0_3 = arith.constant 0 : index
    %28 = vector.load %arg2[%c0_2, %c0_3] : memref<1x192xf32, #tpu.memory_space<vmem>>, vector<1x192xf32>
    tpu.vector_store %arg2[%c0_2, %c0_3], %27 {strides = array<i32>} : memref<1x192xf32, #tpu.memory_space<vmem>>, vector<1x192xf32>,
    %c0_4 = arith.constant 0 : index
    %c0_5 = arith.constant 0 : index
    %29 = vector.load %arg3[%c0_4, %c0_5] : memref<1x192xi32, #tpu.memory_space<vmem>>, vector<1x192xi32>
    tpu.vector_store %arg3[%c0_4, %c0_5], %24 {strides = array<i32>} : memref<1x192xi32, #tpu.memory_space<vmem>>, vector<1x192xi32>,
    return
  }
  func.func @transform_0(%arg0: i32) -> (i32, i32) {
    %c0_i32 = arith.constant 0 : i32
    %c0_i32_0 = arith.constant 0 : i32
    %c0_i32_1 = arith.constant 0 : i32
    return %c0_i32, %c0_i32_0 : i32, i32
  }
  func.func @transform_1(%arg0: i32) -> (i32, i32) {
    %c0_i32 = arith.constant 0 : i32
    %c0_i32_0 = arith.constant 0 : i32
    %c0_i32_1 = arith.constant 0 : i32
    return %c0_i32, %c0_i32_0 : i32, i32
  }
  func.func @transform_2(%arg0: i32) -> (i32, i32) {
    %c0_i32 = arith.constant 0 : i32
    %c0_i32_0 = arith.constant 0 : i32
    %c0_i32_1 = arith.constant 0 : i32
    return %c0_i32, %c0_i32_0 : i32, i32
  }
}

module attributes {stable_mosaic.version = 11 : i64} {
  func.func @_mm_bias_act_kernel(%arg0: i32, %arg1: memref<256x384xbf16, #tpu.memory_space<vmem>>, %arg2: memref<384x128xbf16, #tpu.memory_space<vmem>>, %arg3: memref<1x128xf32, #tpu.memory_space<vmem>>, %arg4: memref<256x128xf32, #tpu.memory_space<vmem>>) attributes {dimension_semantics = [#tpu.dimension_semantics<parallel>], iteration_bounds = array<i64: 2>, scalar_prefetch = 0 : i64, scratch_operands = 0 : i64, tpu.core_type = #tpu.core_type<tc>, window_params = [{transform_indices = @transform_0, window_bounds = array<i64: 256, 384>}, {pipeline_mode = #tpu.pipeline_mode<synchronous>, transform_indices = @transform_1, window_bounds = array<i64: 384, 128>}, {pipeline_mode = #tpu.pipeline_mode<synchronous>, transform_indices = @transform_2, window_bounds = array<i64: 1, 128>}, {transform_indices = @transform_3, window_bounds = array<i64: 256, 128>}]} {
    %c0 = arith.constant 0 : index
    %c0_0 = arith.constant 0 : index
    %0 = vector.load %arg1[%c0, %c0_0] : memref<256x384xbf16, #tpu.memory_space<vmem>>, vector<256x384xbf16>
    %c0_1 = arith.constant 0 : index
    %c0_2 = arith.constant 0 : index
    %1 = vector.load %arg2[%c0_1, %c0_2] : memref<384x128xbf16, #tpu.memory_space<vmem>>, vector<384x128xbf16>
    %cst = arith.constant dense<0.000000e+00> : vector<256x128xf32>
    %2 = tpu.matmul %0, %1, %cst {dimension_numbers = #tpu.dot_dimension_numbers<[1], [0], [0], [1], [0, 0, 1, 1], [], []>} : vector<256x384xbf16>, vector<384x128xbf16>, vector<256x128xf32> -> vector<256x128xf32>
    %c0_3 = arith.constant 0 : index
    %c0_4 = arith.constant 0 : index
    %3 = vector.load %arg3[%c0_3, %c0_4] : memref<1x128xf32, #tpu.memory_space<vmem>>, vector<1x128xf32>
    %4 = vector.broadcast %3 : vector<1x128xf32> to vector<256x128xf32>
    %5 = arith.addf %2, %4 : vector<256x128xf32>
    %cst_5 = arith.constant 0.000000e+00 : f32
    %6 = vector.broadcast %cst_5 : f32 to vector<256x128xf32>
    %7 = arith.maximumf %5, %6 : vector<256x128xf32>
    %c0_6 = arith.constant 0 : index
    %c0_7 = arith.constant 0 : index
    %8 = vector.load %arg4[%c0_6, %c0_7] : memref<256x128xf32, #tpu.memory_space<vmem>>, vector<256x128xf32>
    tpu.vector_store %arg4[%c0_6, %c0_7], %7 {strides = array<i32>} : memref<256x128xf32, #tpu.memory_space<vmem>>, vector<256x128xf32>,
    return
  }
  func.func @transform_0(%arg0: i32) -> (i32, i32) {
    %c0_i32 = arith.constant 0 : i32
    %c0_i32_0 = arith.constant 0 : i32
    return %arg0, %c0_i32 : i32, i32
  }
  func.func @transform_1(%arg0: i32) -> (i32, i32) {
    %c0_i32 = arith.constant 0 : i32
    %c0_i32_0 = arith.constant 0 : i32
    %c0_i32_1 = arith.constant 0 : i32
    return %c0_i32, %c0_i32_0 : i32, i32
  }
  func.func @transform_2(%arg0: i32) -> (i32, i32) {
    %c0_i32 = arith.constant 0 : i32
    %c0_i32_0 = arith.constant 0 : i32
    %c0_i32_1 = arith.constant 0 : i32
    return %c0_i32, %c0_i32_0 : i32, i32
  }
  func.func @transform_3(%arg0: i32) -> (i32, i32) {
    %c0_i32 = arith.constant 0 : i32
    %c0_i32_0 = arith.constant 0 : i32
    return %arg0, %c0_i32 : i32, i32
  }
}

</mosaic_0001>

<llo_original>
// kernel: yolact_wrapper_forward.6
$region0: #{yolact_wrapper_forward.6}
  #allocation0 [shape = 'u32[]', space=smem, size = 0x4, offset = 0x4, fixed_abs, tag = 'smem constant byte address 0x4 - core index']
  #allocation1 [shape = 'u32[144,128]{1,0:T(1,128)}', space=vmem, size = 0x12000, scoped, tag = 'internal scratch']
  %s0 = inlined_call_operand.vmem [shape: bf16[512,128], index: 0, kind: input, shape index: {}]
  %s1 = inlined_call_operand.vmem [shape: bf16[128,128], index: 1, kind: input, shape index: {}]
  %s2 = inlined_call_operand.vmem [shape: f32[1,128], index: 2, kind: input, shape index: {}]
  %s3 = inlined_call_operand.vmem [shape: f32[512,128], index: 3, kind: output, shape index: {}]
  %s4 = sld [smem:[#allocation0]]
  $region45: #{yolact_wrapper_forward.6} parent=0
    _
  %s6 = ssub.s32 1, %s4
  %s7 = scalar_select 0, %s6, %s4
  loop: start=0, step=1, limit=4
  $region2: #{yolact_wrapper_forward.6} parent=0 // loop_pre_header
    _
  $region3: #{yolact_wrapper_forward.6} parent=0 // loop_header
    %s9 = sphi 0, %s13
    %p10 = scmp.ge.s32.totalorder %s9, 4
    %s19 = sphi 0, %s21
    %s22 = sphi 0, %s19
    %s23 = sphi 0, %s22
    %s39 = sphi 0, %s23
    %s43 = sphi 0, %s43
    %s45 = sphi 0, %s43
    %s46 = sphi 0, %s45
    %s60 = sphi 0, %s46
    %s64 = sphi 0, %s64
    %s66 = sphi 0, %s64
    %s67 = sphi 0, %s66
    %s81 = sphi 0, %s67
    %s87 = sphi 0, %s89
    %s90 = sphi 0, %s87
    %s91 = sphi 0, %s90
    %s107 = sphi 0, %s91
  $region4: #{yolact_wrapper_forward.6} parent=0 // loop_header_branch
    %12 = sbr.rel (%p10) target = $region8
  $region5: #{yolact_wrapper_forward.6} parent=0 // loop_body
    %s14 = ssub.s32 %s9, 1
    %s15 = ssub.s32 %s9, 2
    %s16 = sadd.s32 %s9, 1
    %s17 = ssub.s32 %s9, %s16
    %p18 = scmp.eq.s32.totalorder %s17, 0
    %s20 = sadd.s32 %s19, 1
    %s21 = scalar_select %p18, %s19, %s20
    %p24 = pneg %p18
    %p25 = scmp.eq.s32.totalorder %s9, 1
    %p26 = por %p24, %p25
    %p27 = scmp.ne.s32.totalorder %s19, %s22
    %p28 = scmp.eq.s32.totalorder %s9, 0
    %p29 = por %p27, %p28
    %p30 = scmp.ne.s32.totalorder %s19, %s22
    %p31 = scmp.eq.s32.totalorder %s14, 1
    %p32 = por %p30, %p31
    %p33 = scmp.ne.s32.totalorder %s22, %s23
    %p34 = scmp.eq.s32.totalorder %s14, 0
    %p35 = por %p33, %p34
    %p36 = scmp.ne.s32.totalorder %s22, %s23
    %p37 = scmp.eq.s32.totalorder %s15, 1
    %p38 = por %p36, %p37
    %p40 = scmp.ne.s32.totalorder %s23, %s39
    %p41 = scmp.eq.s32.totalorder %s15, 0
    %p42 = por %p40, %p41
    %s44 = sadd.s32 %s43, 1
    %p47 = scmp.eq.s32.totalorder %s9, 1
    %p48 = scmp.ne.s32.totalorder %s43, %s45
    %p49 = scmp.eq.s32.totalorder %s9, 0
    %p50 = por %p48, %p49
    %p51 = scmp.ne.s32.totalorder %s43, %s45
    %p52 = scmp.eq.s32.totalorder %s14, 1
    %p53 = por %p51, %p52
    %p54 = scmp.ne.s32.totalorder %s45, %s46
    %p55 = scmp.eq.s32.totalorder %s14, 0
    %p56 = por %p54, %p55
    %p57 = scmp.ne.s32.totalorder %s45, %s46
    %p58 = scmp.eq.s32.totalorder %s15, 1
    %p59 = por %p57, %p58
    %p61 = scmp.ne.s32.totalorder %s46, %s60
    %p62 = scmp.eq.s32.totalorder %s15, 0
    %p63 = por %p61, %p62
    %s65 = sadd.s32 %s64, 1
    %p68 = scmp.eq.s32.totalorder %s9, 1
    %p69 = scmp.ne.s32.totalorder %s64, %s66
    %p70 = scmp.eq.s32.totalorder %s9, 0
    %p71 = por %p69, %p70
    %p72 = scmp.ne.s32.totalorder %s64, %s66
    %p73 = scmp.eq.s32.totalorder %s14, 1
    %p74 = por %p72, %p73
    %p75 = scmp.ne.s32.totalorder %s66, %s67
    %p76 = scmp.eq.s32.totalorder %s14, 0
    %p77 = por %p75, %p76
    %p78 = scmp.ne.s32.totalorder %s66, %s67
    %p79 = scmp.eq.s32.totalorder %s15, 1
    %p80 = por %p78, %p79
    %p82 = scmp.ne.s32.totalorder %s67, %s81
    %p83 = scmp.eq.s32.totalorder %s15, 0
    %p84 = por %p82, %p83
    %s85 = ssub.s32 %s9, %s16
    %p86 = scmp.eq.s32.totalorder %s85, 0
    %s88 = sadd.s32 %s87, 1
    %s89 = scalar_select %p86, %s87, %s88
    %p92 = pneg %p86
    %p93 = scmp.eq.s32.totalorder %s9, 1
    %p94 = por %p92, %p93
    %p95 = scmp.ne.s32.totalorder %s87, %s90
    %p96 = scmp.eq.s32.totalorder %s9, 0
    %p97 = por %p95, %p96
    %p98 = scmp.ne.s32.totalorder %s87, %s90
    %p99 = scmp.eq.s32.totalorder %s14, 1
    %p100 = por %p98, %p99
    %p101 = scmp.ne.s32.totalorder %s90, %s91
    %p102 = scmp.eq.s32.totalorder %s14, 0
    %p103 = por %p101, %p102
    %p104 = scmp.ne.s32.totalorder %s90, %s91
    %p105 = scmp.eq.s32.totalorder %s15, 1
    %p106 = por %p104, %p105
    %p108 = scmp.ne.s32.totalorder %s91, %s107
    %p109 = scmp.eq.s32.totalorder %s15, 0
    %p110 = por %p108, %p109
    %p111 = scmp.le.s32.totalorder 1, %s9
    %p112 = scmp.lt.s32.totalorder %s9, 3
    %p113 = pnand %p111, %p112
    %p114 = pneg %p113
    // Predicated region
    $region9: #{yolact_wrapper_forward.6} parent=5 // pred_check
      _
    $region10: #{yolact_wrapper_forward.6} parent=5 // pred_check_branch
      %116 = sbr.rel (%p113) target = $region12
    $region11: #{yolact_wrapper_forward.6} parent=5 // pred_region
      %s117 = ssub.s32 %s9, 1
      // Predicated region
      $region13: #{yolact_wrapper_forward.6} parent=11 // pred_check
        %p118 = pneg %p56
      $region14: #{yolact_wrapper_forward.6} parent=11 // pred_check_branch
        %120 = sbr.rel (%p118) target = $region16
      $region15: #{yolact_wrapper_forward.6} parent=11 // pred_region
        _
      $region16: #{yolact_wrapper_forward.6} parent=11 // pred_fallthru
        _
      // Predicated region
      $region17: #{yolact_wrapper_forward.6} parent=11 // pred_check
        %p121 = pneg %p77
      $region18: #{yolact_wrapper_forward.6} parent=11 // pred_check_branch
        %123 = sbr.rel (%p121) target = $region20
      $region19: #{yolact_wrapper_forward.6} parent=11 // pred_region
        _
      $region20: #{yolact_wrapper_forward.6} parent=11 // pred_fallthru
        _
    $region12: #{yolact_wrapper_forward.6} parent=5 // pred_fallthru
      _
    %p124 = scmp.lt.s32.totalorder %s9, 2
    // Predicated region
    $region21: #{yolact_wrapper_forward.6} parent=5 // pred_check
      %p125 = pneg %p124
    $region22: #{yolact_wrapper_forward.6} parent=5 // pred_check_branch
      %127 = sbr.rel (%p125) target = $region24
    $region23: #{yolact_wrapper_forward.6} parent=5 // pred_region
      // Predicated region
      $region25: #{yolact_wrapper_forward.6} parent=23 // pred_check
        %p128 = pneg %p29
      $region26: #{yolact_wrapper_forward.6} parent=23 // pred_check_branch
        %130 = sbr.rel (%p128) target = $region28
      $region27: #{yolact_wrapper_forward.6} parent=23 // pred_region
        %s131 = smul.u32 32, %s9
        %p132 = scmp.lt.s32.totalorder %s131, 63
        %s133 = scalar_select %p132, %s131, 63
        %s134 = smul.addr %s133, 4
        %s135 = scalar_lea.vmem %s0, %s134
        %s136 = smul.u32 32, %s9
      $region28: #{yolact_wrapper_forward.6} parent=23 // pred_fallthru
        _
    $region24: #{yolact_wrapper_forward.6} parent=5 // pred_fallthru
      _
    %p137 = scmp.le.s32.totalorder 1, %s9
    %p138 = scmp.lt.s32.totalorder %s9, 3
    %p139 = pnand %p137, %p138
    %p140 = pneg %p139
    // Predicated region
    $region29: #{yolact_wrapper_forward.6} parent=5 // pred_check
      _
    $region30: #{yolact_wrapper_forward.6} parent=5 // pred_check_branch
      %142 = sbr.rel (%p139) target = $region32
    $region31: #{yolact_wrapper_forward.6} parent=5 // pred_region
      %s143 = ssub.s32 %s9, 1
      %s144 = smul.u32 32, %s14
      %p145 = scmp.lt.s32.totalorder %s144, 63
      %s146 = scalar_select %p145, %s144, 63
      %s147 = smul.addr %s146, 4
      %s148 = scalar_lea.vmem %s0, %s147
      %p149 = pneg %p35
      %p150 = pneg %p32
      %p151 = pneg %p56
      %p152 = pneg %p53
      %p153 = pneg %p77
      %p154 = pneg %p74
      %p155 = pneg %p103
      %p156 = pneg %p100
      %s157 = smul.u32 32, %s14
      %p158 = scmp.lt.s32.totalorder %s157, 63
      %s159 = scalar_select %p158, %s157, 63
      %s160 = smul.addr %s159, 8
      %s161 = scalar_lea.vmem %s3, %s160
      %s162 = smul.u32 32, %s14
      %p163 = scmp.lt.s32.totalorder %s162, 63
      %s164 = scalar_select %p163, %s162, 63
      %s165 = smul.addr %s164, 4
      %s166 = scalar_lea.vmem %s0, %s165
      %s167 = smul.u32 32, %s14
      %s168 = smul.u32 32, %s14
      %p169 = scmp.lt.s32.totalorder %s168, 63
      %s170 = scalar_select %p169, %s168, 63
      %s171 = smul.addr %s170, 8
      %s172 = scalar_lea.vmem %s3, %s171
      %s173 = smul.u32 32, %s14
      %v175 = vld [vmem:[%s166] sm:$0xf]
      %v176 = vld [vmem:[%s166 + $0x4] sm:$0xf]
      %v177 = vld [vmem:[%s166 + $0x8] sm:$0xf]
      %v178 = vld [vmem:[%s166 + $0xc] sm:$0xf]
      %v179 = vld [vmem:[%s166 + $0x10] sm:$0xf]
      %v180 = vld [vmem:[%s166 + $0x14] sm:$0xf]
      %v181 = vld [vmem:[%s166 + $0x18] sm:$0xf]
      %v182 = vld [vmem:[%s166 + $0x1c] sm:$0xf]
      %v183 = vld [vmem:[%s166 + $0x20] sm:$0xf]
      %v184 = vld [vmem:[%s166 + $0x24] sm:$0xf]
      %v185 = vld [vmem:[%s166 + $0x28] sm:$0xf]
      %v186 = vld [vmem:[%s166 + $0x2c] sm:$0xf]
      %v187 = vld [vmem:[%s166 + $0x30] sm:$0xf]
      %v188 = vld [vmem:[%s166 + $0x34] sm:$0xf]
      %v189 = vld [vmem:[%s166 + $0x38] sm:$0xf]
      %v190 = vld [vmem:[%s166 + $0x3c] sm:$0xf]
      %v191 = vld [vmem:[%s166 + $0x40] sm:$0xf]
      %v192 = vld [vmem:[%s166 + $0x44] sm:$0xf]
      %v193 = vld [vmem:[%s166 + $0x48] sm:$0xf]
      %v194 = vld [vmem:[%s166 + $0x4c] sm:$0xf]
      %v195 = vld [vmem:[%s166 + $0x50] sm:$0xf]
      %v196 = vld [vmem:[%s166 + $0x54] sm:$0xf]
      %v197 = vld [vmem:[%s166 + $0x58] sm:$0xf]
      %v198 = vld [vmem:[%s166 + $0x5c] sm:$0xf]
      %v199 = vld [vmem:[%s166 + $0x60] sm:$0xf]
      %v200 = vld [vmem:[%s166 + $0x64] sm:$0xf]
      %v201 = vld [vmem:[%s166 + $0x68] sm:$0xf]
      %v202 = vld [vmem:[%s166 + $0x6c] sm:$0xf]
      %v203 = vld [vmem:[%s166 + $0x70] sm:$0xf]
      %v204 = vld [vmem:[%s166 + $0x74] sm:$0xf]
      %v205 = vld [vmem:[%s166 + $0x78] sm:$0xf]
      %v206 = vld [vmem:[%s166 + $0x7c] sm:$0xf]
      %v207 = vld [vmem:[%s1] sm:$0xf]
      %v208 = vld [vmem:[%s1 + $0x4] sm:$0xf]
      %v209 = vld [vmem:[%s1 + $0x8] sm:$0xf]
      %v210 = vld [vmem:[%s1 + $0xc] sm:$0xf]
      %v211 = vld [vmem:[%s1 + $0x10] sm:$0xf]
      %v212 = vld [vmem:[%s1 + $0x14] sm:$0xf]
      %v213 = vld [vmem:[%s1 + $0x18] sm:$0xf]
      %v214 = vld [vmem:[%s1 + $0x1c] sm:$0xf]
      %v215 = vld [vmem:[%s1 + $0x20] sm:$0xf]
      %v216 = vld [vmem:[%s1 + $0x24] sm:$0xf]
      %v217 = vld [vmem:[%s1 + $0x28] sm:$0xf]
      %v218 = vld [vmem:[%s1 + $0x2c] sm:$0xf]
      %v219 = vld [vmem:[%s1 + $0x30] sm:$0xf]
      %v220 = vld [vmem:[%s1 + $0x34] sm:$0xf]
      %v221 = vld [vmem:[%s1 + $0x38] sm:$0xf]
      %v222 = vld [vmem:[%s1 + $0x3c] sm:$0xf]
      %v223 = vld [vmem:[%s2] sm:$0x1]
      %v225 = vlaneseq
      %v226 = vshrl.u32 %v225, 7
      %v227 = vsub.s32 0, %v226
      %v228 = vrot.slane %v223, %v227
      %v262 = vunpack.c.l.b16 %v175
      %v263 = vunpack.c.l.b16 %v176
      %v264 = vunpack.c.l.b16 %v177
      %v265 = vunpack.c.l.b16 %v178
      %v266 = vunpack.c.l.b16 %v179
      %v267 = vunpack.c.l.b16 %v180
      %v268 = vunpack.c.l.b16 %v181
      %v269 = vunpack.c.l.b16 %v182
      %v270 = vunpack.c.l.b16 %v183
      %v271 = vunpack.c.l.b16 %v184
      %v272 = vunpack.c.l.b16 %v185
      %v273 = vunpack.c.l.b16 %v186
      %v274 = vunpack.c.l.b16 %v187
      %v275 = vunpack.c.l.b16 %v188
      %v276 = vunpack.c.l.b16 %v189
      %v277 = vunpack.c.l.b16 %v190
      %v278 = vunpack.c.l.b16 %v191
      %v279 = vunpack.c.l.b16 %v192
      %v280 = vunpack.c.l.b16 %v193
      %v281 = vunpack.c.l.b16 %v194
      %v282 = vunpack.c.l.b16 %v195
      %v283 = vunpack.c.l.b16 %v196
      %v284 = vunpack.c.l.b16 %v197
      %v285 = vunpack.c.l.b16 %v198
      %v286 = vunpack.c.l.b16 %v199
      %v287 = vunpack.c.l.b16 %v200
      %v288 = vunpack.c.l.b16 %v201
      %v289 = vunpack.c.l.b16 %v202
      %v290 = vunpack.c.l.b16 %v203
      %v291 = vunpack.c.l.b16 %v204
      %v292 = vunpack.c.l.b16 %v205
      %v293 = vunpack.c.l.b16 %v206
      %v294 = vpack.c.b16 %v263, %v262
      %v295 = vpack.c.b16 %v265, %v264
      %v296 = vpack.c.b16 %v267, %v266
      %v297 = vpack.c.b16 %v269, %v268
      %v298 = vpack.c.b16 %v271, %v270
      %v299 = vpack.c.b16 %v273, %v272
      %v300 = vpack.c.b16 %v275, %v274
      %v301 = vpack.c.b16 %v277, %v276
      %v302 = vpack.c.b16 %v279, %v278
      %v303 = vpack.c.b16 %v281, %v280
      %v304 = vpack.c.b16 %v283, %v282
      %v305 = vpack.c.b16 %v285, %v284
      %v306 = vpack.c.b16 %v287, %v286
      %v307 = vpack.c.b16 %v289, %v288
      %v308 = vpack.c.b16 %v291, %v290
      %v309 = vpack.c.b16 %v293, %v292
      %v342 = vunpack.c.l.b16 %v207
      %v343 = vunpack.c.l.b16 %v208
      %v344 = vunpack.c.l.b16 %v209
      %v345 = vunpack.c.l.b16 %v210
      %v346 = vunpack.c.l.b16 %v211
      %v347 = vunpack.c.l.b16 %v212
      %v348 = vunpack.c.l.b16 %v213
      %v349 = vunpack.c.l.b16 %v214
      %v350 = vunpack.c.l.b16 %v215
      %v351 = vunpack.c.l.b16 %v216
      %v352 = vunpack.c.l.b16 %v217
      %v353 = vunpack.c.l.b16 %v218
      %v354 = vunpack.c.l.b16 %v219
      %v355 = vunpack.c.l.b16 %v220
      %v356 = vunpack.c.l.b16 %v221
      %v357 = vunpack.c.l.b16 %v222
      %v358 = vpack.c.b16 %v343, %v342
      %v359 = vpack.c.b16 %v345, %v344
      %v360 = vpack.c.b16 %v347, %v346
      %v361 = vpack.c.b16 %v349, %v348
      %v362 = vpack.c.b16 %v351, %v350
      %v363 = vpack.c.b16 %v353, %v352
      %v364 = vpack.c.b16 %v355, %v354
      %v365 = vpack.c.b16 %v357, %v356
      %374 = vmatprep.subr.bf16.mxu0 0
      %375 = vmatpush1.bf16.msra.mxu0 %v365
      %376 = vmatprep.subr.bf16.mxu0 0
      %377 = vmatpush1.bf16.msra.mxu0 %v364
      %378 = vmatprep.subr.bf16.mxu0 0
      %379 = vmatpush1.bf16.msra.mxu0 %v363
      %380 = vmatprep.subr.bf16.mxu0 0
      %381 = vmatpush1.bf16.msra.mxu0 %v362
      %382 = vmatprep.subr.bf16.mxu0 0
      %383 = vmatpush1.bf16.msra.mxu0 %v361
      %384 = vmatprep.subr.bf16.mxu0 0
      %385 = vmatpush1.bf16.msra.mxu0 %v360
      %386 = vmatprep.subr.bf16.mxu0 0
      %387 = vmatpush1.bf16.msra.mxu0 %v359
      %388 = vmatprep.subr.bf16.mxu0 0
      %389 = vmatpush1.bf16.msra.mxu0 %v358
      %390 = vmatprep.subr.bf16.mxu0 0
      %391 = vmatpush2.bf16.msra.mxu0 0
      %392 = vmatprep.subr.bf16.mxu0 0
      %393 = vmatpush2.bf16.msra.mxu0 0
      %394 = vmatprep.subr.bf16.mxu0 0
      %395 = vmatpush2.bf16.msra.mxu0 0
      %396 = vmatprep.subr.bf16.mxu0 0
      %397 = vmatpush2.bf16.msra.mxu0 0
      %398 = vmatprep.subr.bf16.mxu0 0
      %399 = vmatpush2.bf16.msra.mxu0 0
      %400 = vmatprep.subr.bf16.mxu0 0
      %401 = vmatpush2.bf16.msra.mxu0 0
      %402 = vmatprep.subr.bf16.mxu0 0
      %403 = vmatpush2.bf16.msra.mxu0 0
      %404 = vmatprep.subr.bf16.mxu0 0
      %405 = vmatpush2.bf16.msra.mxu0 0
      %406 = vmatprep.mubr.bf16.mxu0 0
      %407 = vmatmul.mubr.bf16.gmra.mxu0 %v294
      %v408 = vpop.f32.mrf.mxu0
      %v409 = vadd.f32 %v228, %v408
      %v410 = vpop.f32.mrf.mxu0
      %v411 = vpop.f32.mrf.mxu0
      %v412 = vadd.f32 %v228, %v411
      %v413 = vpop.f32.mrf.mxu0
      %414 = vmatprep.mubr.bf16.mxu0 0
      %415 = vmatmul.mubr.bf16.gmra.mxu0 %v295
      %v416 = vpop.f32.mrf.mxu0
      %v417 = vadd.f32 %v228, %v416
      %v418 = vpop.f32.mrf.mxu0
      %v419 = vpop.f32.mrf.mxu0
      %v420 = vadd.f32 %v228, %v419
      %v421 = vpop.f32.mrf.mxu0
      %422 = vmatprep.mubr.bf16.mxu0 0
      %423 = vmatmul.mubr.bf16.gmra.mxu0 %v296
      %v424 = vpop.f32.mrf.mxu0
      %v425 = vadd.f32 %v228, %v424
      %v426 = vpop.f32.mrf.mxu0
      %v427 = vpop.f32.mrf.mxu0
      %v428 = vadd.f32 %v228, %v427
      %v429 = vpop.f32.mrf.mxu0
      %430 = vmatprep.mubr.bf16.mxu0 0
      %431 = vmatmul.mubr.bf16.gmra.mxu0 %v297
      %v432 = vpop.f32.mrf.mxu0
      %v433 = vadd.f32 %v228, %v432
      %v434 = vpop.f32.mrf.mxu0
      %v435 = vpop.f32.mrf.mxu0
      %v436 = vadd.f32 %v228, %v435
      %v437 = vpop.f32.mrf.mxu0
      %438 = vmatprep.mubr.bf16.mxu0 0
      %439 = vmatmul.mubr.bf16.gmra.mxu0 %v298
      %v440 = vpop.f32.mrf.mxu0
      %v441 = vadd.f32 %v228, %v440
      %v442 = vpop.f32.mrf.mxu0
      %v443 = vpop.f32.mrf.mxu0
      %v444 = vadd.f32 %v228, %v443
      %v445 = vpop.f32.mrf.mxu0
      %446 = vmatprep.mubr.bf16.mxu0 0
      %447 = vmatmul.mubr.bf16.gmra.mxu0 %v299
      %v448 = vpop.f32.mrf.mxu0
      %v449 = vadd.f32 %v228, %v448
      %v450 = vpop.f32.mrf.mxu0
      %v451 = vpop.f32.mrf.mxu0
      %v452 = vadd.f32 %v228, %v451
      %v453 = vpop.f32.mrf.mxu0
      %454 = vmatprep.mubr.bf16.mxu0 0
      %455 = vmatmul.mubr.bf16.gmra.mxu0 %v300
      %v456 = vpop.f32.mrf.mxu0
      %v457 = vadd.f32 %v228, %v456
      %v458 = vpop.f32.mrf.mxu0
      %v459 = vpop.f32.mrf.mxu0
      %v460 = vadd.f32 %v228, %v459
      %v461 = vpop.f32.mrf.mxu0
      %462 = vmatprep.mubr.bf16.mxu0 0
      %463 = vmatmul.mubr.bf16.gmra.mxu0 %v301
      %v464 = vpop.f32.mrf.mxu0
      %v465 = vadd.f32 %v228, %v464
      %v466 = vpop.f32.mrf.mxu0
      %v467 = vpop.f32.mrf.mxu0
      %v468 = vadd.f32 %v228, %v467
      %v469 = vpop.f32.mrf.mxu0
      %470 = vmatprep.mubr.bf16.mxu0 0
      %471 = vmatmul.mubr.bf16.gmra.mxu0 %v302
      %v472 = vpop.f32.mrf.mxu0
      %v473 = vadd.f32 %v228, %v472
      %v474 = vpop.f32.mrf.mxu0
      %v475 = vpop.f32.mrf.mxu0
      %v476 = vadd.f32 %v228, %v475
      %v477 = vpop.f32.mrf.mxu0
      %478 = vmatprep.mubr.bf16.mxu0 0
      %479 = vmatmul.mubr.bf16.gmra.mxu0 %v303
      %v480 = vpop.f32.mrf.mxu0
      %v481 = vadd.f32 %v228, %v480
      %v482 = vpop.f32.mrf.mxu0
      %v483 = vpop.f32.mrf.mxu0
      %v484 = vadd.f32 %v228, %v483
      %v485 = vpop.f32.mrf.mxu0
      %486 = vmatprep.mubr.bf16.mxu0 0
      %487 = vmatmul.mubr.bf16.gmra.mxu0 %v304
      %v488 = vpop.f32.mrf.mxu0
      %v489 = vadd.f32 %v228, %v488
      %v490 = vpop.f32.mrf.mxu0
      %v491 = vpop.f32.mrf.mxu0
      %v492 = vadd.f32 %v228, %v491
      %v493 = vpop.f32.mrf.mxu0
      %494 = vmatprep.mubr.bf16.mxu0 0
      %495 = vmatmul.mubr.bf16.gmra.mxu0 %v305
      %v496 = vpop.f32.mrf.mxu0
      %v497 = vadd.f32 %v228, %v496
      %v498 = vpop.f32.mrf.mxu0
      %v499 = vpop.f32.mrf.mxu0
      %v500 = vadd.f32 %v228, %v499
      %v501 = vpop.f32.mrf.mxu0
      %502 = vmatprep.mubr.bf16.mxu0 0
      %503 = vmatmul.mubr.bf16.gmra.mxu0 %v306
      %v504 = vpop.f32.mrf.mxu0
      %v505 = vadd.f32 %v228, %v504
      %v506 = vpop.f32.mrf.mxu0
      %v507 = vpop.f32.mrf.mxu0
      %v508 = vadd.f32 %v228, %v507
      %v509 = vpop.f32.mrf.mxu0
      %510 = vmatprep.mubr.bf16.mxu0 0
      %511 = vmatmul.mubr.bf16.gmra.mxu0 %v307
      %v512 = vpop.f32.mrf.mxu0
      %v513 = vadd.f32 %v228, %v512
      %v514 = vpop.f32.mrf.mxu0
      %v515 = vpop.f32.mrf.mxu0
      %v516 = vadd.f32 %v228, %v515
      %v517 = vpop.f32.mrf.mxu0
      %518 = vmatprep.mubr.bf16.mxu0 0
      %519 = vmatmul.mubr.bf16.gmra.mxu0 %v308
      %v520 = vpop.f32.mrf.mxu0
      %v521 = vadd.f32 %v228, %v520
      %v522 = vpop.f32.mrf.mxu0
      %v523 = vpop.f32.mrf.mxu0
      %v524 = vadd.f32 %v228, %v523
      %v525 = vpop.f32.mrf.mxu0
      %526 = vmatprep.mubr.bf16.mxu0 0
      %527 = vmatmul.mubr.bf16.gmra.mxu0 %v309
      %v528 = vpop.f32.mrf.mxu0
      %v529 = vadd.f32 %v228, %v528
      %v530 = vpop.f32.mrf.mxu0
      %v531 = vpop.f32.mrf.mxu0
      %v532 = vadd.f32 %v228, %v531
      %v533 = vpop.f32.mrf.mxu0
      %534 = vdwg.mxu0
      %v535 = vmax.f32 %v409, 0.0
      %v536 = vmax.f32 %v412, 0.0
      %v537 = vmax.f32 %v417, 0.0
      %v538 = vmax.f32 %v420, 0.0
      %v539 = vmax.f32 %v425, 0.0
      %v540 = vmax.f32 %v428, 0.0
      %v541 = vmax.f32 %v433, 0.0
      %v542 = vmax.f32 %v436, 0.0
      %v543 = vmax.f32 %v441, 0.0
      %v544 = vmax.f32 %v444, 0.0
      %v545 = vmax.f32 %v449, 0.0
      %v546 = vmax.f32 %v452, 0.0
      %v547 = vmax.f32 %v457, 0.0
      %v548 = vmax.f32 %v460, 0.0
      %v549 = vmax.f32 %v465, 0.0
      %v550 = vmax.f32 %v468, 0.0
      %v551 = vmax.f32 %v473, 0.0
      %v552 = vmax.f32 %v476, 0.0
      %v553 = vmax.f32 %v481, 0.0
      %v554 = vmax.f32 %v484, 0.0
      %v555 = vmax.f32 %v489, 0.0
      %v556 = vmax.f32 %v492, 0.0
      %v557 = vmax.f32 %v497, 0.0
      %v558 = vmax.f32 %v500, 0.0
      %v559 = vmax.f32 %v505, 0.0
      %v560 = vmax.f32 %v508, 0.0
      %v561 = vmax.f32 %v513, 0.0
      %v562 = vmax.f32 %v516, 0.0
      %v563 = vmax.f32 %v521, 0.0
      %v564 = vmax.f32 %v524, 0.0
      %v565 = vmax.f32 %v529, 0.0
      %v566 = vmax.f32 %v532, 0.0
      %567 = vst [vmem:[%s172] sm:$0xff] %v535
      %568 = vst [vmem:[%s172 + $0x8] sm:$0xff] %v536
      %569 = vst [vmem:[%s172 + $0x10] sm:$0xff] %v537
      %570 = vst [vmem:[%s172 + $0x18] sm:$0xff] %v538
      %571 = vst [vmem:[%s172 + $0x20] sm:$0xff] %v539
      %572 = vst [vmem:[%s172 + $0x28] sm:$0xff] %v540
      %573 = vst [vmem:[%s172 + $0x30] sm:$0xff] %v541
      %574 = vst [vmem:[%s172 + $0x38] sm:$0xff] %v542
      %575 = vst [vmem:[%s172 + $0x40] sm:$0xff] %v543
      %576 = vst [vmem:[%s172 + $0x48] sm:$0xff] %v544
      %577 = vst [vmem:[%s172 + $0x50] sm:$0xff] %v545
      %578 = vst [vmem:[%s172 + $0x58] sm:$0xff] %v546
      %579 = vst [vmem:[%s172 + $0x60] sm:$0xff] %v547
      %580 = vst [vmem:[%s172 + $0x68] sm:$0xff] %v548
      %581 = vst [vmem:[%s172 + $0x70] sm:$0xff] %v549
      %582 = vst [vmem:[%s172 + $0x78] sm:$0xff] %v550
      %583 = vst [vmem:[%s172 + $0x80] sm:$0xff] %v551
      %584 = vst [vmem:[%s172 + $0x88] sm:$0xff] %v552
      %585 = vst [vmem:[%s172 + $0x90] sm:$0xff] %v553
      %586 = vst [vmem:[%s172 + $0x98] sm:$0xff] %v554
      %587 = vst [vmem:[%s172 + $0xa0] sm:$0xff] %v555
      %588 = vst [vmem:[%s172 + $0xa8] sm:$0xff] %v556
      %589 = vst [vmem:[%s172 + $0xb0] sm:$0xff] %v557
      %590 = vst [vmem:[%s172 + $0xb8] sm:$0xff] %v558
      %591 = vst [vmem:[%s172 + $0xc0] sm:$0xff] %v559
      %592 = vst [vmem:[%s172 + $0xc8] sm:$0xff] %v560
      %593 = vst [vmem:[%s172 + $0xd0] sm:$0xff] %v561
      %594 = vst [vmem:[%s172 + $0xd8] sm:$0xff] %v562
      %595 = vst [vmem:[%s172 + $0xe0] sm:$0xff] %v563
      %596 = vst [vmem:[%s172 + $0xe8] sm:$0xff] %v564
      %597 = vst [vmem:[%s172 + $0xf0] sm:$0xff] %v565
      %598 = vst [vmem:[%s172 + $0xf8] sm:$0xff] %v566
      %s599 = smul.u32 32, %s14
      %p600 = scmp.lt.s32.totalorder %s599, 63
      %s601 = scalar_select %p600, %s599, 63
      %s602 = smul.addr %s601, 8
      %s603 = scalar_lea.vmem %s3, %s602
      // Predicated region
      $region33: #{yolact_wrapper_forward.6} parent=31 // pred_check
        %p604 = pneg %p100
      $region34: #{yolact_wrapper_forward.6} parent=31 // pred_check_branch
        %606 = sbr.rel (%p604) target = $region36
      $region35: #{yolact_wrapper_forward.6} parent=31 // pred_region
        %s607 = smul.u32 32, %s14
      $region36: #{yolact_wrapper_forward.6} parent=31 // pred_fallthru
        _
    $region32: #{yolact_wrapper_forward.6} parent=5 // pred_fallthru
      _
    %p608 = scmp.le.s32.totalorder 2, %s9
    // Predicated region
    $region37: #{yolact_wrapper_forward.6} parent=5 // pred_check
      %p609 = pneg %p608
    $region38: #{yolact_wrapper_forward.6} parent=5 // pred_check_branch
      %611 = sbr.rel (%p609) target = $region40
    $region39: #{yolact_wrapper_forward.6} parent=5 // pred_region
      %s612 = ssub.s32 %s9, 2
      // Predicated region
      $region41: #{yolact_wrapper_forward.6} parent=39 // pred_check
        %p613 = pneg %p106
      $region42: #{yolact_wrapper_forward.6} parent=39 // pred_check_branch
        %615 = sbr.rel (%p613) target = $region44
      $region43: #{yolact_wrapper_forward.6} parent=39 // pred_region
        %s616 = smul.u32 32, %s15
        %p617 = scmp.lt.s32.totalorder %s616, 63
        %s618 = scalar_select %p617, %s616, 63
        %s619 = smul.addr %s618, 8
        %s620 = scalar_lea.vmem %s3, %s619
      $region44: #{yolact_wrapper_forward.6} parent=39 // pred_fallthru
        _
    $region40: #{yolact_wrapper_forward.6} parent=5 // pred_fallthru
      _
  $region6: #{yolact_wrapper_forward.6} parent=0 // loop_footer
    %s13 = sadd.s32 1, %s9
  $region7: #{yolact_wrapper_forward.6} parent=0 // loop_footer_branch
    %8 = sbr.rel target = $region3
  $region8: #{yolact_wrapper_forward.6} parent=0 // loop_exit
    _

// kernel: yolact_wrapper_forward.7
$region0: #{yolact_wrapper_forward.7}
  #allocation0 [shape = 'u32[]', space=smem, size = 0x4, offset = 0x4, fixed_abs, tag = 'smem constant byte address 0x4 - core index']
  #allocation1 [shape = 'u32[144,128]{1,0:T(1,128)}', space=vmem, size = 0x12000, scoped, tag = 'internal scratch']
  %s0 = inlined_call_operand.vmem [shape: bf16[128,256], index: 0, kind: input, shape index: {}]
  %s1 = inlined_call_operand.vmem [shape: bf16[256,128], index: 1, kind: input, shape index: {}]
  %s2 = inlined_call_operand.vmem [shape: f32[1,128], index: 2, kind: input, shape index: {}]
  %s3 = inlined_call_operand.vmem [shape: f32[128,128], index: 3, kind: output, shape index: {}]
  %s4 = sld [smem:[#allocation0]]
  $region45: #{yolact_wrapper_forward.7} parent=0
    _
  %s6 = ssub.s32 1, %s4
  %s7 = scalar_select 0, %s6, %s4
  loop: start=0, step=1, limit=4
  $region2: #{yolact_wrapper_forward.7} parent=0 // loop_pre_header
    _
  $region3: #{yolact_wrapper_forward.7} parent=0 // loop_header
    %s9 = sphi 0, %s13
    %p10 = scmp.ge.s32.totalorder %s9, 4
    %s19 = sphi 0, %s21
    %s22 = sphi 0, %s19
    %s23 = sphi 0, %s22
    %s39 = sphi 0, %s23
    %s43 = sphi 0, %s43
    %s45 = sphi 0, %s43
    %s46 = sphi 0, %s45
    %s60 = sphi 0, %s46
    %s64 = sphi 0, %s64
    %s66 = sphi 0, %s64
    %s67 = sphi 0, %s66
    %s81 = sphi 0, %s67
    %s87 = sphi 0, %s89
    %s90 = sphi 0, %s87
    %s91 = sphi 0, %s90
    %s107 = sphi 0, %s91
  $region4: #{yolact_wrapper_forward.7} parent=0 // loop_header_branch
    %12 = sbr.rel (%p10) target = $region8
  $region5: #{yolact_wrapper_forward.7} parent=0 // loop_body
    %s14 = ssub.s32 %s9, 1
    %s15 = ssub.s32 %s9, 2
    %s16 = sadd.s32 %s9, 1
    %s17 = ssub.s32 %s9, %s16
    %p18 = scmp.eq.s32.totalorder %s17, 0
    %s20 = sadd.s32 %s19, 1
    %s21 = scalar_select %p18, %s19, %s20
    %p24 = pneg %p18
    %p25 = scmp.eq.s32.totalorder %s9, 1
    %p26 = por %p24, %p25
    %p27 = scmp.ne.s32.totalorder %s19, %s22
    %p28 = scmp.eq.s32.totalorder %s9, 0
    %p29 = por %p27, %p28
    %p30 = scmp.ne.s32.totalorder %s19, %s22
    %p31 = scmp.eq.s32.totalorder %s14, 1
    %p32 = por %p30, %p31
    %p33 = scmp.ne.s32.totalorder %s22, %s23
    %p34 = scmp.eq.s32.totalorder %s14, 0
    %p35 = por %p33, %p34
    %p36 = scmp.ne.s32.totalorder %s22, %s23
    %p37 = scmp.eq.s32.totalorder %s15, 1
    %p38 = por %p36, %p37
    %p40 = scmp.ne.s32.totalorder %s23, %s39
    %p41 = scmp.eq.s32.totalorder %s15, 0
    %p42 = por %p40, %p41
    %s44 = sadd.s32 %s43, 1
    %p47 = scmp.eq.s32.totalorder %s9, 1
    %p48 = scmp.ne.s32.totalorder %s43, %s45
    %p49 = scmp.eq.s32.totalorder %s9, 0
    %p50 = por %p48, %p49
    %p51 = scmp.ne.s32.totalorder %s43, %s45
    %p52 = scmp.eq.s32.totalorder %s14, 1
    %p53 = por %p51, %p52
    %p54 = scmp.ne.s32.totalorder %s45, %s46
    %p55 = scmp.eq.s32.totalorder %s14, 0
    %p56 = por %p54, %p55
    %p57 = scmp.ne.s32.totalorder %s45, %s46
    %p58 = scmp.eq.s32.totalorder %s15, 1
    %p59 = por %p57, %p58
    %p61 = scmp.ne.s32.totalorder %s46, %s60
    %p62 = scmp.eq.s32.totalorder %s15, 0
    %p63 = por %p61, %p62
    %s65 = sadd.s32 %s64, 1
    %p68 = scmp.eq.s32.totalorder %s9, 1
    %p69 = scmp.ne.s32.totalorder %s64, %s66
    %p70 = scmp.eq.s32.totalorder %s9, 0
    %p71 = por %p69, %p70
    %p72 = scmp.ne.s32.totalorder %s64, %s66
    %p73 = scmp.eq.s32.totalorder %s14, 1
    %p74 = por %p72, %p73
    %p75 = scmp.ne.s32.totalorder %s66, %s67
    %p76 = scmp.eq.s32.totalorder %s14, 0
    %p77 = por %p75, %p76
    %p78 = scmp.ne.s32.totalorder %s66, %s67
    %p79 = scmp.eq.s32.totalorder %s15, 1
    %p80 = por %p78, %p79
    %p82 = scmp.ne.s32.totalorder %s67, %s81
    %p83 = scmp.eq.s32.totalorder %s15, 0
    %p84 = por %p82, %p83
    %s85 = ssub.s32 %s9, %s16
    %p86 = scmp.eq.s32.totalorder %s85, 0
    %s88 = sadd.s32 %s87, 1
    %s89 = scalar_select %p86, %s87, %s88
    %p92 = pneg %p86
    %p93 = scmp.eq.s32.totalorder %s9, 1
    %p94 = por %p92, %p93
    %p95 = scmp.ne.s32.totalorder %s87, %s90
    %p96 = scmp.eq.s32.totalorder %s9, 0
    %p97 = por %p95, %p96
    %p98 = scmp.ne.s32.totalorder %s87, %s90
    %p99 = scmp.eq.s32.totalorder %s14, 1
    %p100 = por %p98, %p99
    %p101 = scmp.ne.s32.totalorder %s90, %s91
    %p102 = scmp.eq.s32.totalorder %s14, 0
    %p103 = por %p101, %p102
    %p104 = scmp.ne.s32.totalorder %s90, %s91
    %p105 = scmp.eq.s32.totalorder %s15, 1
    %p106 = por %p104, %p105
    %p108 = scmp.ne.s32.totalorder %s91, %s107
    %p109 = scmp.eq.s32.totalorder %s15, 0
    %p110 = por %p108, %p109
    %p111 = scmp.le.s32.totalorder 1, %s9
    %p112 = scmp.lt.s32.totalorder %s9, 3
    %p113 = pnand %p111, %p112
    %p114 = pneg %p113
    // Predicated region
    $region9: #{yolact_wrapper_forward.7} parent=5 // pred_check
      _
    $region10: #{yolact_wrapper_forward.7} parent=5 // pred_check_branch
      %116 = sbr.rel (%p113) target = $region12
    $region11: #{yolact_wrapper_forward.7} parent=5 // pred_region
      %s117 = ssub.s32 %s9, 1
      // Predicated region
      $region13: #{yolact_wrapper_forward.7} parent=11 // pred_check
        %p118 = pneg %p56
      $region14: #{yolact_wrapper_forward.7} parent=11 // pred_check_branch
        %120 = sbr.rel (%p118) target = $region16
      $region15: #{yolact_wrapper_forward.7} parent=11 // pred_region
        _
      $region16: #{yolact_wrapper_forward.7} parent=11 // pred_fallthru
        _
      // Predicated region
      $region17: #{yolact_wrapper_forward.7} parent=11 // pred_check
        %p121 = pneg %p77
      $region18: #{yolact_wrapper_forward.7} parent=11 // pred_check_branch
        %123 = sbr.rel (%p121) target = $region20
      $region19: #{yolact_wrapper_forward.7} parent=11 // pred_region
        _
      $region20: #{yolact_wrapper_forward.7} parent=11 // pred_fallthru
        _
    $region12: #{yolact_wrapper_forward.7} parent=5 // pred_fallthru
      _
    %p124 = scmp.lt.s32.totalorder %s9, 2
    // Predicated region
    $region21: #{yolact_wrapper_forward.7} parent=5 // pred_check
      %p125 = pneg %p124
    $region22: #{yolact_wrapper_forward.7} parent=5 // pred_check_branch
      %127 = sbr.rel (%p125) target = $region24
    $region23: #{yolact_wrapper_forward.7} parent=5 // pred_region
      // Predicated region
      $region25: #{yolact_wrapper_forward.7} parent=23 // pred_check
        %p128 = pneg %p29
      $region26: #{yolact_wrapper_forward.7} parent=23 // pred_check_branch
        %130 = sbr.rel (%p128) target = $region28
      $region27: #{yolact_wrapper_forward.7} parent=23 // pred_region
        %s131 = smul.u32 8, %s9
        %p132 = scmp.lt.s32.totalorder %s131, 15
        %s133 = scalar_select %p132, %s131, 15
        %s134 = smul.addr %s133, 2
        %s135 = smul.addr %s134, 4
        %s136 = scalar_lea.vmem %s0, %s135
        %s137 = smul.u32 8, %s9
      $region28: #{yolact_wrapper_forward.7} parent=23 // pred_fallthru
        _
    $region24: #{yolact_wrapper_forward.7} parent=5 // pred_fallthru
      _
    %p138 = scmp.le.s32.totalorder 1, %s9
    %p139 = scmp.lt.s32.totalorder %s9, 3
    %p140 = pnand %p138, %p139
    %p141 = pneg %p140
    // Predicated region
    $region29: #{yolact_wrapper_forward.7} parent=5 // pred_check
      _
    $region30: #{yolact_wrapper_forward.7} parent=5 // pred_check_branch
      %143 = sbr.rel (%p140) target = $region32
    $region31: #{yolact_wrapper_forward.7} parent=5 // pred_region
      %s144 = ssub.s32 %s9, 1
      %s145 = smul.u32 8, %s14
      %p146 = scmp.lt.s32.totalorder %s145, 15
      %s147 = scalar_select %p146, %s145, 15
      %s148 = smul.addr %s147, 2
      %s149 = smul.addr %s148, 4
      %s150 = scalar_lea.vmem %s0, %s149
      %p151 = pneg %p35
      %p152 = pneg %p32
      %p153 = pneg %p56
      %p154 = pneg %p53
      %p155 = pneg %p77
      %p156 = pneg %p74
      %p157 = pneg %p103
      %p158 = pneg %p100
      %s159 = smul.u32 8, %s14
      %p160 = scmp.lt.s32.totalorder %s159, 15
      %s161 = scalar_select %p160, %s159, 15
      %s162 = smul.addr %s161, 8
      %s163 = scalar_lea.vmem %s3, %s162
      %s164 = smul.u32 8, %s14
      %p165 = scmp.lt.s32.totalorder %s164, 15
      %s166 = scalar_select %p165, %s164, 15
      %s167 = smul.addr %s166, 2
      %s168 = smul.addr %s167, 4
      %s169 = scalar_lea.vmem %s0, %s168
      %s170 = smul.u32 8, %s14
      %s171 = smul.u32 8, %s14
      %p172 = scmp.lt.s32.totalorder %s171, 15
      %s173 = scalar_select %p172, %s171, 15
      %s174 = smul.addr %s173, 8
      %s175 = scalar_lea.vmem %s3, %s174
      %s176 = smul.u32 8, %s14
      %v178 = vld [vmem:[%s169] sm:$0xff]
      %v179 = vld [vmem:[%s169 + $0x8] sm:$0xff]
      %v180 = vld [vmem:[%s169 + $0x10] sm:$0xff]
      %v181 = vld [vmem:[%s169 + $0x18] sm:$0xff]
      %v182 = vld [vmem:[%s169 + $0x20] sm:$0xff]
      %v183 = vld [vmem:[%s169 + $0x28] sm:$0xff]
      %v184 = vld [vmem:[%s169 + $0x30] sm:$0xff]
      %v185 = vld [vmem:[%s169 + $0x38] sm:$0xff]
      %v186 = vld [vmem:[%s1] sm:$0xf]
      %v187 = vld [vmem:[%s1 + $0x4] sm:$0xf]
      %v188 = vld [vmem:[%s1 + $0x8] sm:$0xf]
      %v189 = vld [vmem:[%s1 + $0xc] sm:$0xf]
      %v190 = vld [vmem:[%s1 + $0x10] sm:$0xf]
      %v191 = vld [vmem:[%s1 + $0x14] sm:$0xf]
      %v192 = vld [vmem:[%s1 + $0x18] sm:$0xf]
      %v193 = vld [vmem:[%s1 + $0x1c] sm:$0xf]
      %v194 = vld [vmem:[%s1 + $0x20] sm:$0xf]
      %v195 = vld [vmem:[%s1 + $0x24] sm:$0xf]
      %v196 = vld [vmem:[%s1 + $0x28] sm:$0xf]
      %v197 = vld [vmem:[%s1 + $0x2c] sm:$0xf]
      %v198 = vld [vmem:[%s1 + $0x30] sm:$0xf]
      %v199 = vld [vmem:[%s1 + $0x34] sm:$0xf]
      %v200 = vld [vmem:[%s1 + $0x38] sm:$0xf]
      %v201 = vld [vmem:[%s1 + $0x3c] sm:$0xf]
      %v202 = vld [vmem:[%s1 + $0x40] sm:$0xf]
      %v203 = vld [vmem:[%s1 + $0x44] sm:$0xf]
      %v204 = vld [vmem:[%s1 + $0x48] sm:$0xf]
      %v205 = vld [vmem:[%s1 + $0x4c] sm:$0xf]
      %v206 = vld [vmem:[%s1 + $0x50] sm:$0xf]
      %v207 = vld [vmem:[%s1 + $0x54] sm:$0xf]
      %v208 = vld [vmem:[%s1 + $0x58] sm:$0xf]
      %v209 = vld [vmem:[%s1 + $0x5c] sm:$0xf]
      %v210 = vld [vmem:[%s1 + $0x60] sm:$0xf]
      %v211 = vld [vmem:[%s1 + $0x64] sm:$0xf]
      %v212 = vld [vmem:[%s1 + $0x68] sm:$0xf]
      %v213 = vld [vmem:[%s1 + $0x6c] sm:$0xf]
      %v214 = vld [vmem:[%s1 + $0x70] sm:$0xf]
      %v215 = vld [vmem:[%s1 + $0x74] sm:$0xf]
      %v216 = vld [vmem:[%s1 + $0x78] sm:$0xf]
      %v217 = vld [vmem:[%s1 + $0x7c] sm:$0xf]
      %v218 = vld [vmem:[%s2] sm:$0x1]
      %v220 = vlaneseq
      %v221 = vshrl.u32 %v220, 7
      %v222 = vsub.s32 0, %v221
      %v223 = vrot.slane %v218, %v222
      %v233 = vunpack.c.l.b16 %v178
      %v234 = vunpack.c.h.b16 %v178
      %v235 = vunpack.c.l.b16 %v179
      %v236 = vunpack.c.h.b16 %v179
      %v237 = vunpack.c.l.b16 %v180
      %v238 = vunpack.c.h.b16 %v180
      %v239 = vunpack.c.l.b16 %v181
      %v240 = vunpack.c.h.b16 %v181
      %v241 = vunpack.c.l.b16 %v182
      %v242 = vunpack.c.h.b16 %v182
      %v243 = vunpack.c.l.b16 %v183
      %v244 = vunpack.c.h.b16 %v183
      %v245 = vunpack.c.l.b16 %v184
      %v246 = vunpack.c.h.b16 %v184
      %v247 = vunpack.c.l.b16 %v185
      %v248 = vunpack.c.h.b16 %v185
      %v249 = vpack.c.b16 %v235, %v233
      %v250 = vpack.c.b16 %v236, %v234
      %v251 = vpack.c.b16 %v239, %v237
      %v252 = vpack.c.b16 %v240, %v238
      %v253 = vpack.c.b16 %v243, %v241
      %v254 = vpack.c.b16 %v244, %v242
      %v255 = vpack.c.b16 %v247, %v245
      %v256 = vpack.c.b16 %v248, %v246
      %v297 = vunpack.c.l.b16 %v186
      %v298 = vunpack.c.l.b16 %v187
      %v299 = vunpack.c.l.b16 %v188
      %v300 = vunpack.c.l.b16 %v189
      %v301 = vunpack.c.l.b16 %v190
      %v302 = vunpack.c.l.b16 %v191
      %v303 = vunpack.c.l.b16 %v192
      %v304 = vunpack.c.l.b16 %v193
      %v305 = vunpack.c.l.b16 %v194
      %v306 = vunpack.c.l.b16 %v195
      %v307 = vunpack.c.l.b16 %v196
      %v308 = vunpack.c.l.b16 %v197
      %v309 = vunpack.c.l.b16 %v198
      %v310 = vunpack.c.l.b16 %v199
      %v311 = vunpack.c.l.b16 %v200
      %v312 = vunpack.c.l.b16 %v201
      %v313 = vunpack.c.l.b16 %v202
      %v314 = vunpack.c.l.b16 %v203
      %v315 = vunpack.c.l.b16 %v204
      %v316 = vunpack.c.l.b16 %v205
      %v317 = vunpack.c.l.b16 %v206
      %v318 = vunpack.c.l.b16 %v207
      %v319 = vunpack.c.l.b16 %v208
      %v320 = vunpack.c.l.b16 %v209
      %v321 = vunpack.c.l.b16 %v210
      %v322 = vunpack.c.l.b16 %v211
      %v323 = vunpack.c.l.b16 %v212
      %v324 = vunpack.c.l.b16 %v213
      %v325 = vunpack.c.l.b16 %v214
      %v326 = vunpack.c.l.b16 %v215
      %v327 = vunpack.c.l.b16 %v216
      %v328 = vunpack.c.l.b16 %v217
      %v329 = vpack.c.b16 %v298, %v297
      %v330 = vpack.c.b16 %v300, %v299
      %v331 = vpack.c.b16 %v302, %v301
      %v332 = vpack.c.b16 %v304, %v303
      %v333 = vpack.c.b16 %v306, %v305
      %v334 = vpack.c.b16 %v308, %v307
      %v335 = vpack.c.b16 %v310, %v309
      %v336 = vpack.c.b16 %v312, %v311
      %v337 = vpack.c.b16 %v314, %v313
      %v338 = vpack.c.b16 %v316, %v315
      %v339 = vpack.c.b16 %v318, %v317
      %v340 = vpack.c.b16 %v320, %v319
      %v341 = vpack.c.b16 %v322, %v321
      %v342 = vpack.c.b16 %v324, %v323
      %v343 = vpack.c.b16 %v326, %v325
      %v344 = vpack.c.b16 %v328, %v327
      %361 = vmatprep.subr.bf16.mxu0 0
      %362 = vmatpush1.bf16.msra.mxu0 %v336
      %363 = vmatprep.subr.bf16.mxu0 0
      %364 = vmatpush1.bf16.msra.mxu0 %v335
      %365 = vmatprep.subr.bf16.mxu0 0
      %366 = vmatpush1.bf16.msra.mxu0 %v334
      %367 = vmatprep.subr.bf16.mxu0 0
      %368 = vmatpush1.bf16.msra.mxu0 %v333
      %369 = vmatprep.subr.bf16.mxu0 0
      %370 = vmatpush1.bf16.msra.mxu0 %v332
      %371 = vmatprep.subr.bf16.mxu0 0
      %372 = vmatpush1.bf16.msra.mxu0 %v331
      %373 = vmatprep.subr.bf16.mxu0 0
      %374 = vmatpush1.bf16.msra.mxu0 %v330
      %375 = vmatprep.subr.bf16.mxu0 0
      %376 = vmatpush1.bf16.msra.mxu0 %v329
      %377 = vmatprep.subr.bf16.mxu0 0
      %378 = vmatpush2.bf16.msra.mxu0 %v344
      %379 = vmatprep.subr.bf16.mxu0 0
      %380 = vmatpush2.bf16.msra.mxu0 %v343
      %381 = vmatprep.subr.bf16.mxu0 0
      %382 = vmatpush2.bf16.msra.mxu0 %v342
      %383 = vmatprep.subr.bf16.mxu0 0
      %384 = vmatpush2.bf16.msra.mxu0 %v341
      %385 = vmatprep.subr.bf16.mxu0 0
      %386 = vmatpush2.bf16.msra.mxu0 %v340
      %387 = vmatprep.subr.bf16.mxu0 0
      %388 = vmatpush2.bf16.msra.mxu0 %v339
      %389 = vmatprep.subr.bf16.mxu0 0
      %390 = vmatpush2.bf16.msra.mxu0 %v338
      %391 = vmatprep.subr.bf16.mxu0 0
      %392 = vmatpush2.bf16.msra.mxu0 %v337
      %393 = vmatprep.mubr.bf16.mxu0 %v250
      %394 = vmatmul.mubr.bf16.gmra.mxu0 %v249
      %v395 = vpop.f32.mrf.mxu0
      %v396 = vadd.f32 %v223, %v395
      %v397 = vpop.f32.mrf.mxu0
      %v398 = vpop.f32.mrf.mxu0
      %v399 = vadd.f32 %v223, %v398
      %v400 = vpop.f32.mrf.mxu0
      %401 = vmatprep.mubr.bf16.mxu0 %v252
      %402 = vmatmul.mubr.bf16.gmra.mxu0 %v251
      %v403 = vpop.f32.mrf.mxu0
      %v404 = vadd.f32 %v223, %v403
      %v405 = vpop.f32.mrf.mxu0
      %v406 = vpop.f32.mrf.mxu0
      %v407 = vadd.f32 %v223, %v406
      %v408 = vpop.f32.mrf.mxu0
      %409 = vmatprep.mubr.bf16.mxu0 %v254
      %410 = vmatmul.mubr.bf16.gmra.mxu0 %v253
      %v411 = vpop.f32.mrf.mxu0
      %v412 = vadd.f32 %v223, %v411
      %v413 = vpop.f32.mrf.mxu0
      %v414 = vpop.f32.mrf.mxu0
      %v415 = vadd.f32 %v223, %v414
      %v416 = vpop.f32.mrf.mxu0
      %417 = vmatprep.mubr.bf16.mxu0 %v256
      %418 = vmatmul.mubr.bf16.gmra.mxu0 %v255
      %v419 = vpop.f32.mrf.mxu0
      %v420 = vadd.f32 %v223, %v419
      %v421 = vpop.f32.mrf.mxu0
      %v422 = vpop.f32.mrf.mxu0
      %v423 = vadd.f32 %v223, %v422
      %v424 = vpop.f32.mrf.mxu0
      %425 = vdwg.mxu0
      %v426 = vmax.f32 %v396, 0.0
      %v427 = vmax.f32 %v399, 0.0
      %v428 = vmax.f32 %v404, 0.0
      %v429 = vmax.f32 %v407, 0.0
      %v430 = vmax.f32 %v412, 0.0
      %v431 = vmax.f32 %v415, 0.0
      %v432 = vmax.f32 %v420, 0.0
      %v433 = vmax.f32 %v423, 0.0
      %434 = vst [vmem:[%s175] sm:$0xff] %v426
      %435 = vst [vmem:[%s175 + $0x8] sm:$0xff] %v427
      %436 = vst [vmem:[%s175 + $0x10] sm:$0xff] %v428
      %437 = vst [vmem:[%s175 + $0x18] sm:$0xff] %v429
      %438 = vst [vmem:[%s175 + $0x20] sm:$0xff] %v430
      %439 = vst [vmem:[%s175 + $0x28] sm:$0xff] %v431
      %440 = vst [vmem:[%s175 + $0x30] sm:$0xff] %v432
      %441 = vst [vmem:[%s175 + $0x38] sm:$0xff] %v433
      %s442 = smul.u32 8, %s14
      %p443 = scmp.lt.s32.totalorder %s442, 15
      %s444 = scalar_select %p443, %s442, 15
      %s445 = smul.addr %s444, 8
      %s446 = scalar_lea.vmem %s3, %s445
      // Predicated region
      $region33: #{yolact_wrapper_forward.7} parent=31 // pred_check
        %p447 = pneg %p100
      $region34: #{yolact_wrapper_forward.7} parent=31 // pred_check_branch
        %449 = sbr.rel (%p447) target = $region36
      $region35: #{yolact_wrapper_forward.7} parent=31 // pred_region
        %s450 = smul.u32 8, %s14
      $region36: #{yolact_wrapper_forward.7} parent=31 // pred_fallthru
        _
    $region32: #{yolact_wrapper_forward.7} parent=5 // pred_fallthru
      _
    %p451 = scmp.le.s32.totalorder 2, %s9
    // Predicated region
    $region37: #{yolact_wrapper_forward.7} parent=5 // pred_check
      %p452 = pneg %p451
    $region38: #{yolact_wrapper_forward.7} parent=5 // pred_check_branch
      %454 = sbr.rel (%p452) target = $region40
    $region39: #{yolact_wrapper_forward.7} parent=5 // pred_region
      %s455 = ssub.s32 %s9, 2
      // Predicated region
      $region41: #{yolact_wrapper_forward.7} parent=39 // pred_check
        %p456 = pneg %p106
      $region42: #{yolact_wrapper_forward.7} parent=39 // pred_check_branch
        %458 = sbr.rel (%p456) target = $region44
      $region43: #{yolact_wrapper_forward.7} parent=39 // pred_region
        %s459 = smul.u32 8, %s15
        %p460 = scmp.lt.s32.totalorder %s459, 15
        %s461 = scalar_select %p460, %s459, 15
        %s462 = smul.addr %s461, 8
        %s463 = scalar_lea.vmem %s3, %s462
      $region44: #{yolact_wrapper_forward.7} parent=39 // pred_fallthru
        _
    $region40: #{yolact_wrapper_forward.7} parent=5 // pred_fallthru
      _
  $region6: #{yolact_wrapper_forward.7} parent=0 // loop_footer
    %s13 = sadd.s32 1, %s9
  $region7: #{yolact_wrapper_forward.7} parent=0 // loop_footer_branch
    %8 = sbr.rel target = $region3
  $region8: #{yolact_wrapper_forward.7} parent=0 // loop_exit
    _

// kernel: yolact_wrapper_forward.8
$region0: #{yolact_wrapper_forward.8}
  #allocation0 [shape = 'u32[]', space=smem, size = 0x4, offset = 0x4, fixed_abs, tag = 'smem constant byte address 0x4 - core index']
  #allocation1 [shape = 'u32[144,128]{1,0:T(1,128)}', space=vmem, size = 0x12000, scoped, tag = 'internal scratch']
  %s0 = inlined_call_operand.vmem [shape: bf16[128,384], index: 0, kind: input, shape index: {}]
  %s1 = inlined_call_operand.vmem [shape: bf16[384,128], index: 1, kind: input, shape index: {}]
  %s2 = inlined_call_operand.vmem [shape: f32[1,128], index: 2, kind: input, shape index: {}]
  %s3 = inlined_call_operand.vmem [shape: f32[128,128], index: 3, kind: output, shape index: {}]
  %s4 = sld [smem:[#allocation0]]
  $region45: #{yolact_wrapper_forward.8} parent=0
    _
  %s6 = ssub.s32 1, %s4
  %s7 = scalar_select 0, %s6, %s4
  loop: start=0, step=1, limit=4
  $region2: #{yolact_wrapper_forward.8} parent=0 // loop_pre_header
    _
  $region3: #{yolact_wrapper_forward.8} parent=0 // loop_header
    %s9 = sphi 0, %s13
    %p10 = scmp.ge.s32.totalorder %s9, 4
    %s19 = sphi 0, %s21
    %s22 = sphi 0, %s19
    %s23 = sphi 0, %s22
    %s39 = sphi 0, %s23
    %s43 = sphi 0, %s43
    %s45 = sphi 0, %s43
    %s46 = sphi 0, %s45
    %s60 = sphi 0, %s46
    %s64 = sphi 0, %s64
    %s66 = sphi 0, %s64
    %s67 = sphi 0, %s66
    %s81 = sphi 0, %s67
    %s87 = sphi 0, %s89
    %s90 = sphi 0, %s87
    %s91 = sphi 0, %s90
    %s107 = sphi 0, %s91
  $region4: #{yolact_wrapper_forward.8} parent=0 // loop_header_branch
    %12 = sbr.rel (%p10) target = $region8
  $region5: #{yolact_wrapper_forward.8} parent=0 // loop_body
    %s14 = ssub.s32 %s9, 1
    %s15 = ssub.s32 %s9, 2
    %s16 = sadd.s32 %s9, 1
    %s17 = ssub.s32 %s9, %s16
    %p18 = scmp.eq.s32.totalorder %s17, 0
    %s20 = sadd.s32 %s19, 1
    %s21 = scalar_select %p18, %s19, %s20
    %p24 = pneg %p18
    %p25 = scmp.eq.s32.totalorder %s9, 1
    %p26 = por %p24, %p25
    %p27 = scmp.ne.s32.totalorder %s19, %s22
    %p28 = scmp.eq.s32.totalorder %s9, 0
    %p29 = por %p27, %p28
    %p30 = scmp.ne.s32.totalorder %s19, %s22
    %p31 = scmp.eq.s32.totalorder %s14, 1
    %p32 = por %p30, %p31
    %p33 = scmp.ne.s32.totalorder %s22, %s23
    %p34 = scmp.eq.s32.totalorder %s14, 0
    %p35 = por %p33, %p34
    %p36 = scmp.ne.s32.totalorder %s22, %s23
    %p37 = scmp.eq.s32.totalorder %s15, 1
    %p38 = por %p36, %p37
    %p40 = scmp.ne.s32.totalorder %s23, %s39
    %p41 = scmp.eq.s32.totalorder %s15, 0
    %p42 = por %p40, %p41
    %s44 = sadd.s32 %s43, 1
    %p47 = scmp.eq.s32.totalorder %s9, 1
    %p48 = scmp.ne.s32.totalorder %s43, %s45
    %p49 = scmp.eq.s32.totalorder %s9, 0
    %p50 = por %p48, %p49
    %p51 = scmp.ne.s32.totalorder %s43, %s45
    %p52 = scmp.eq.s32.totalorder %s14, 1
    %p53 = por %p51, %p52
    %p54 = scmp.ne.s32.totalorder %s45, %s46
    %p55 = scmp.eq.s32.totalorder %s14, 0
    %p56 = por %p54, %p55
    %p57 = scmp.ne.s32.totalorder %s45, %s46
    %p58 = scmp.eq.s32.totalorder %s15, 1
    %p59 = por %p57, %p58
    %p61 = scmp.ne.s32.totalorder %s46, %s60
    %p62 = scmp.eq.s32.totalorder %s15, 0
    %p63 = por %p61, %p62
    %s65 = sadd.s32 %s64, 1
    %p68 = scmp.eq.s32.totalorder %s9, 1
    %p69 = scmp.ne.s32.totalorder %s64, %s66
    %p70 = scmp.eq.s32.totalorder %s9, 0
    %p71 = por %p69, %p70
    %p72 = scmp.ne.s32.totalorder %s64, %s66
    %p73 = scmp.eq.s32.totalorder %s14, 1
    %p74 = por %p72, %p73
    %p75 = scmp.ne.s32.totalorder %s66, %s67
    %p76 = scmp.eq.s32.totalorder %s14, 0
    %p77 = por %p75, %p76
    %p78 = scmp.ne.s32.totalorder %s66, %s67
    %p79 = scmp.eq.s32.totalorder %s15, 1
    %p80 = por %p78, %p79
    %p82 = scmp.ne.s32.totalorder %s67, %s81
    %p83 = scmp.eq.s32.totalorder %s15, 0
    %p84 = por %p82, %p83
    %s85 = ssub.s32 %s9, %s16
    %p86 = scmp.eq.s32.totalorder %s85, 0
    %s88 = sadd.s32 %s87, 1
    %s89 = scalar_select %p86, %s87, %s88
    %p92 = pneg %p86
    %p93 = scmp.eq.s32.totalorder %s9, 1
    %p94 = por %p92, %p93
    %p95 = scmp.ne.s32.totalorder %s87, %s90
    %p96 = scmp.eq.s32.totalorder %s9, 0
    %p97 = por %p95, %p96
    %p98 = scmp.ne.s32.totalorder %s87, %s90
    %p99 = scmp.eq.s32.totalorder %s14, 1
    %p100 = por %p98, %p99
    %p101 = scmp.ne.s32.totalorder %s90, %s91
    %p102 = scmp.eq.s32.totalorder %s14, 0
    %p103 = por %p101, %p102
    %p104 = scmp.ne.s32.totalorder %s90, %s91
    %p105 = scmp.eq.s32.totalorder %s15, 1
    %p106 = por %p104, %p105
    %p108 = scmp.ne.s32.totalorder %s91, %s107
    %p109 = scmp.eq.s32.totalorder %s15, 0
    %p110 = por %p108, %p109
    %p111 = scmp.le.s32.totalorder 1, %s9
    %p112 = scmp.lt.s32.totalorder %s9, 3
    %p113 = pnand %p111, %p112
    %p114 = pneg %p113
    // Predicated region
    $region9: #{yolact_wrapper_forward.8} parent=5 // pred_check
      _
    $region10: #{yolact_wrapper_forward.8} parent=5 // pred_check_branch
      %116 = sbr.rel (%p113) target = $region12
    $region11: #{yolact_wrapper_forward.8} parent=5 // pred_region
      %s117 = ssub.s32 %s9, 1
      // Predicated region
      $region13: #{yolact_wrapper_forward.8} parent=11 // pred_check
        %p118 = pneg %p56
      $region14: #{yolact_wrapper_forward.8} parent=11 // pred_check_branch
        %120 = sbr.rel (%p118) target = $region16
      $region15: #{yolact_wrapper_forward.8} parent=11 // pred_region
        _
      $region16: #{yolact_wrapper_forward.8} parent=11 // pred_fallthru
        _
      // Predicated region
      $region17: #{yolact_wrapper_forward.8} parent=11 // pred_check
        %p121 = pneg %p77
      $region18: #{yolact_wrapper_forward.8} parent=11 // pred_check_branch
        %123 = sbr.rel (%p121) target = $region20
      $region19: #{yolact_wrapper_forward.8} parent=11 // pred_region
        _
      $region20: #{yolact_wrapper_forward.8} parent=11 // pred_fallthru
        _
    $region12: #{yolact_wrapper_forward.8} parent=5 // pred_fallthru
      _
    %p124 = scmp.lt.s32.totalorder %s9, 2
    // Predicated region
    $region21: #{yolact_wrapper_forward.8} parent=5 // pred_check
      %p125 = pneg %p124
    $region22: #{yolact_wrapper_forward.8} parent=5 // pred_check_branch
      %127 = sbr.rel (%p125) target = $region24
    $region23: #{yolact_wrapper_forward.8} parent=5 // pred_region
      // Predicated region
      $region25: #{yolact_wrapper_forward.8} parent=23 // pred_check
        %p128 = pneg %p29
      $region26: #{yolact_wrapper_forward.8} parent=23 // pred_check_branch
        %130 = sbr.rel (%p128) target = $region28
      $region27: #{yolact_wrapper_forward.8} parent=23 // pred_region
        %s131 = smul.u32 8, %s9
        %p132 = scmp.lt.s32.totalorder %s131, 15
        %s133 = scalar_select %p132, %s131, 15
        %s134 = smul.addr %s133, 3
        %s135 = smul.addr %s134, 4
        %s136 = scalar_lea.vmem %s0, %s135
        %s137 = smul.u32 8, %s9
      $region28: #{yolact_wrapper_forward.8} parent=23 // pred_fallthru
        _
    $region24: #{yolact_wrapper_forward.8} parent=5 // pred_fallthru
      _
    %p138 = scmp.le.s32.totalorder 1, %s9
    %p139 = scmp.lt.s32.totalorder %s9, 3
    %p140 = pnand %p138, %p139
    %p141 = pneg %p140
    // Predicated region
    $region29: #{yolact_wrapper_forward.8} parent=5 // pred_check
      _
    $region30: #{yolact_wrapper_forward.8} parent=5 // pred_check_branch
      %143 = sbr.rel (%p140) target = $region32
    $region31: #{yolact_wrapper_forward.8} parent=5 // pred_region
      %s144 = ssub.s32 %s9, 1
      %s145 = smul.u32 8, %s14
      %p146 = scmp.lt.s32.totalorder %s145, 15
      %s147 = scalar_select %p146, %s145, 15
      %s148 = smul.addr %s147, 3
      %s149 = smul.addr %s148, 4
      %s150 = scalar_lea.vmem %s0, %s149
      %p151 = pneg %p35
      %p152 = pneg %p32
      %p153 = pneg %p56
      %p154 = pneg %p53
      %p155 = pneg %p77
      %p156 = pneg %p74
      %p157 = pneg %p103
      %p158 = pneg %p100
      %s159 = smul.u32 8, %s14
      %p160 = scmp.lt.s32.totalorder %s159, 15
      %s161 = scalar_select %p160, %s159, 15
      %s162 = smul.addr %s161, 8
      %s163 = scalar_lea.vmem %s3, %s162
      %s164 = smul.u32 8, %s14
      %p165 = scmp.lt.s32.totalorder %s164, 15
      %s166 = scalar_select %p165, %s164, 15
      %s167 = smul.addr %s166, 3
      %s168 = smul.addr %s167, 4
      %s169 = scalar_lea.vmem %s0, %s168
      %s170 = smul.u32 8, %s14
      %s171 = smul.u32 8, %s14
      %p172 = scmp.lt.s32.totalorder %s171, 15
      %s173 = scalar_select %p172, %s171, 15
      %s174 = smul.addr %s173, 8
      %s175 = scalar_lea.vmem %s3, %s174
      %s176 = smul.u32 8, %s14
      %v178 = vld [vmem:[%s169] sm:$0xff]
      %v179 = vld [vmem:[%s169 + $0x8] sm:$0xf]
      %v180 = vld [vmem:[%s169 + $0xc] sm:$0xff]
      %v181 = vld [vmem:[%s169 + $0x14] sm:$0xf]
      %v182 = vld [vmem:[%s169 + $0x18] sm:$0xff]
      %v183 = vld [vmem:[%s169 + $0x20] sm:$0xf]
      %v184 = vld [vmem:[%s169 + $0x24] sm:$0xff]
      %v185 = vld [vmem:[%s169 + $0x2c] sm:$0xf]
      %v186 = vld [vmem:[%s169 + $0x30] sm:$0xff]
      %v187 = vld [vmem:[%s169 + $0x38] sm:$0xf]
      %v188 = vld [vmem:[%s169 + $0x3c] sm:$0xff]
      %v189 = vld [vmem:[%s169 + $0x44] sm:$0xf]
      %v190 = vld [vmem:[%s169 + $0x48] sm:$0xff]
      %v191 = vld [vmem:[%s169 + $0x50] sm:$0xf]
      %v192 = vld [vmem:[%s169 + $0x54] sm:$0xff]
      %v193 = vld [vmem:[%s169 + $0x5c] sm:$0xf]
      %v194 = vld [vmem:[%s1] sm:$0xf]
      %v195 = vld [vmem:[%s1 + $0x4] sm:$0xf]
      %v196 = vld [vmem:[%s1 + $0x8] sm:$0xf]
      %v197 = vld [vmem:[%s1 + $0xc] sm:$0xf]
      %v198 = vld [vmem:[%s1 + $0x10] sm:$0xf]
      %v199 = vld [vmem:[%s1 + $0x14] sm:$0xf]
      %v200 = vld [vmem:[%s1 + $0x18] sm:$0xf]
      %v201 = vld [vmem:[%s1 + $0x1c] sm:$0xf]
      %v202 = vld [vmem:[%s1 + $0x20] sm:$0xf]
      %v203 = vld [vmem:[%s1 + $0x24] sm:$0xf]
      %v204 = vld [vmem:[%s1 + $0x28] sm:$0xf]
      %v205 = vld [vmem:[%s1 + $0x2c] sm:$0xf]
      %v206 = vld [vmem:[%s1 + $0x30] sm:$0xf]
      %v207 = vld [vmem:[%s1 + $0x34] sm:$0xf]
      %v208 = vld [vmem:[%s1 + $0x38] sm:$0xf]
      %v209 = vld [vmem:[%s1 + $0x3c] sm:$0xf]
      %v210 = vld [vmem:[%s1 + $0x40] sm:$0xf]
      %v211 = vld [vmem:[%s1 + $0x44] sm:$0xf]
      %v212 = vld [vmem:[%s1 + $0x48] sm:$0xf]
      %v213 = vld [vmem:[%s1 + $0x4c] sm:$0xf]
      %v214 = vld [vmem:[%s1 + $0x50] sm:$0xf]
      %v215 = vld [vmem:[%s1 + $0x54] sm:$0xf]
      %v216 = vld [vmem:[%s1 + $0x58] sm:$0xf]
      %v217 = vld [vmem:[%s1 + $0x5c] sm:$0xf]
      %v218 = vld [vmem:[%s1 + $0x60] sm:$0xf]
      %v219 = vld [vmem:[%s1 + $0x64] sm:$0xf]
      %v220 = vld [vmem:[%s1 + $0x68] sm:$0xf]
      %v221 = vld [vmem:[%s1 + $0x6c] sm:$0xf]
      %v222 = vld [vmem:[%s1 + $0x70] sm:$0xf]
      %v223 = vld [vmem:[%s1 + $0x74] sm:$0xf]
      %v224 = vld [vmem:[%s1 + $0x78] sm:$0xf]
      %v225 = vld [vmem:[%s1 + $0x7c] sm:$0xf]
      %v226 = vld [vmem:[%s1 + $0x80] sm:$0xf]
      %v227 = vld [vmem:[%s1 + $0x84] sm:$0xf]
      %v228 = vld [vmem:[%s1 + $0x88] sm:$0xf]
      %v229 = vld [vmem:[%s1 + $0x8c] sm:$0xf]
      %v230 = vld [vmem:[%s1 + $0x90] sm:$0xf]
      %v231 = vld [vmem:[%s1 + $0x94] sm:$0xf]
      %v232 = vld [vmem:[%s1 + $0x98] sm:$0xf]
      %v233 = vld [vmem:[%s1 + $0x9c] sm:$0xf]
      %v234 = vld [vmem:[%s1 + $0xa0] sm:$0xf]
      %v235 = vld [vmem:[%s1 + $0xa4] sm:$0xf]
      %v236 = vld [vmem:[%s1 + $0xa8] sm:$0xf]
      %v237 = vld [vmem:[%s1 + $0xac] sm:$0xf]
      %v238 = vld [vmem:[%s1 + $0xb0] sm:$0xf]
      %v239 = vld [vmem:[%s1 + $0xb4] sm:$0xf]
      %v240 = vld [vmem:[%s1 + $0xb8] sm:$0xf]
      %v241 = vld [vmem:[%s1 + $0xbc] sm:$0xf]
      %v242 = vld [vmem:[%s2] sm:$0x1]
      %v244 = vlaneseq
      %v245 = vshrl.u32 %v244, 7
      %v246 = vsub.s32 0, %v245
      %v247 = vrot.slane %v242, %v246
      %v265 = vunpack.c.l.b16 %v178
      %v266 = vunpack.c.h.b16 %v178
      %v267 = vunpack.c.l.b16 %v179
      %v268 = vunpack.c.l.b16 %v180
      %v269 = vunpack.c.h.b16 %v180
      %v270 = vunpack.c.l.b16 %v181
      %v271 = vunpack.c.l.b16 %v182
      %v272 = vunpack.c.h.b16 %v182
      %v273 = vunpack.c.l.b16 %v183
      %v274 = vunpack.c.l.b16 %v184
      %v275 = vunpack.c.h.b16 %v184
      %v276 = vunpack.c.l.b16 %v185
      %v277 = vunpack.c.l.b16 %v186
      %v278 = vunpack.c.h.b16 %v186
      %v279 = vunpack.c.l.b16 %v187
      %v280 = vunpack.c.l.b16 %v188
      %v281 = vunpack.c.h.b16 %v188
      %v282 = vunpack.c.l.b16 %v189
      %v283 = vunpack.c.l.b16 %v190
      %v284 = vunpack.c.h.b16 %v190
      %v285 = vunpack.c.l.b16 %v191
      %v286 = vunpack.c.l.b16 %v192
      %v287 = vunpack.c.h.b16 %v192
      %v288 = vunpack.c.l.b16 %v193
      %v289 = vpack.c.b16 %v268, %v265
      %v290 = vpack.c.b16 %v269, %v266
      %v291 = vpack.c.b16 %v270, %v267
      %v292 = vpack.c.b16 %v274, %v271
      %v293 = vpack.c.b16 %v275, %v272
      %v294 = vpack.c.b16 %v276, %v273
      %v295 = vpack.c.b16 %v280, %v277
      %v296 = vpack.c.b16 %v281, %v278
      %v297 = vpack.c.b16 %v282, %v279
      %v298 = vpack.c.b16 %v286, %v283
      %v299 = vpack.c.b16 %v287, %v284
      %v300 = vpack.c.b16 %v288, %v285
      %v361 = vunpack.c.l.b16 %v194
      %v362 = vunpack.c.l.b16 %v195
      %v363 = vunpack.c.l.b16 %v196
      %v364 = vunpack.c.l.b16 %v197
      %v365 = vunpack.c.l.b16 %v198
      %v366 = vunpack.c.l.b16 %v199
      %v367 = vunpack.c.l.b16 %v200
      %v368 = vunpack.c.l.b16 %v201
      %v369 = vunpack.c.l.b16 %v202
      %v370 = vunpack.c.l.b16 %v203
      %v371 = vunpack.c.l.b16 %v204
      %v372 = vunpack.c.l.b16 %v205
      %v373 = vunpack.c.l.b16 %v206
      %v374 = vunpack.c.l.b16 %v207
      %v375 = vunpack.c.l.b16 %v208
      %v376 = vunpack.c.l.b16 %v209
      %v377 = vunpack.c.l.b16 %v210
      %v378 = vunpack.c.l.b16 %v211
      %v379 = vunpack.c.l.b16 %v212
      %v380 = vunpack.c.l.b16 %v213
      %v381 = vunpack.c.l.b16 %v214
      %v382 = vunpack.c.l.b16 %v215
      %v383 = vunpack.c.l.b16 %v216
      %v384 = vunpack.c.l.b16 %v217
      %v385 = vunpack.c.l.b16 %v218
      %v386 = vunpack.c.l.b16 %v219
      %v387 = vunpack.c.l.b16 %v220
      %v388 = vunpack.c.l.b16 %v221
      %v389 = vunpack.c.l.b16 %v222
      %v390 = vunpack.c.l.b16 %v223
      %v391 = vunpack.c.l.b16 %v224
      %v392 = vunpack.c.l.b16 %v225
      %v393 = vunpack.c.l.b16 %v226
      %v394 = vunpack.c.l.b16 %v227
      %v395 = vunpack.c.l.b16 %v228
      %v396 = vunpack.c.l.b16 %v229
      %v397 = vunpack.c.l.b16 %v230
      %v398 = vunpack.c.l.b16 %v231
      %v399 = vunpack.c.l.b16 %v232
      %v400 = vunpack.c.l.b16 %v233
      %v401 = vunpack.c.l.b16 %v234
      %v402 = vunpack.c.l.b16 %v235
      %v403 = vunpack.c.l.b16 %v236
      %v404 = vunpack.c.l.b16 %v237
      %v405 = vunpack.c.l.b16 %v238
      %v406 = vunpack.c.l.b16 %v239
      %v407 = vunpack.c.l.b16 %v240
      %v408 = vunpack.c.l.b16 %v241
      %v409 = vpack.c.b16 %v362, %v361
      %v410 = vpack.c.b16 %v364, %v363
      %v411 = vpack.c.b16 %v366, %v365
      %v412 = vpack.c.b16 %v368, %v367
      %v413 = vpack.c.b16 %v370, %v369
      %v414 = vpack.c.b16 %v372, %v371
      %v415 = vpack.c.b16 %v374, %v373
      %v416 = vpack.c.b16 %v376, %v375
      %v417 = vpack.c.b16 %v378, %v377
      %v418 = vpack.c.b16 %v380, %v379
      %v419 = vpack.c.b16 %v382, %v381
      %v420 = vpack.c.b16 %v384, %v383
      %v421 = vpack.c.b16 %v386, %v385
      %v422 = vpack.c.b16 %v388, %v387
      %v423 = vpack.c.b16 %v390, %v389
      %v424 = vpack.c.b16 %v392, %v391
      %v425 = vpack.c.b16 %v394, %v393
      %v426 = vpack.c.b16 %v396, %v395
      %v427 = vpack.c.b16 %v398, %v397
      %v428 = vpack.c.b16 %v400, %v399
      %v429 = vpack.c.b16 %v402, %v401
      %v430 = vpack.c.b16 %v404, %v403
      %v431 = vpack.c.b16 %v406, %v405
      %v432 = vpack.c.b16 %v408, %v407
      %457 = vmatprep.subr.bf16.mxu0 0
      %458 = vmatpush1.bf16.msra.mxu0 %v416
      %459 = vmatprep.subr.bf16.mxu0 0
      %460 = vmatpush1.bf16.msra.mxu0 %v415
      %461 = vmatprep.subr.bf16.mxu0 0
      %462 = vmatpush1.bf16.msra.mxu0 %v414
      %463 = vmatprep.subr.bf16.mxu0 0
      %464 = vmatpush1.bf16.msra.mxu0 %v413
      %465 = vmatprep.subr.bf16.mxu0 0
      %466 = vmatpush1.bf16.msra.mxu0 %v412
      %467 = vmatprep.subr.bf16.mxu0 0
      %468 = vmatpush1.bf16.msra.mxu0 %v411
      %469 = vmatprep.subr.bf16.mxu0 0
      %470 = vmatpush1.bf16.msra.mxu0 %v410
      %471 = vmatprep.subr.bf16.mxu0 0
      %472 = vmatpush1.bf16.msra.mxu0 %v409
      %473 = vmatprep.subr.bf16.mxu0 0
      %474 = vmatpush2.bf16.msra.mxu0 %v424
      %475 = vmatprep.subr.bf16.mxu0 0
      %476 = vmatpush2.bf16.msra.mxu0 %v423
      %477 = vmatprep.subr.bf16.mxu0 0
      %478 = vmatpush2.bf16.msra.mxu0 %v422
      %479 = vmatprep.subr.bf16.mxu0 0
      %480 = vmatpush2.bf16.msra.mxu0 %v421
      %481 = vmatprep.subr.bf16.mxu0 0
      %482 = vmatpush2.bf16.msra.mxu0 %v420
      %483 = vmatprep.subr.bf16.mxu0 0
      %484 = vmatpush2.bf16.msra.mxu0 %v419
      %485 = vmatprep.subr.bf16.mxu0 0
      %486 = vmatpush2.bf16.msra.mxu0 %v418
      %487 = vmatprep.subr.bf16.mxu0 0
      %488 = vmatpush2.bf16.msra.mxu0 %v417
      %489 = vmatprep.mubr.bf16.mxu0 %v290
      %490 = vmatmul.mubr.bf16.gmra.mxu0 %v289
      %v491 = vpop.f32.mrf.mxu0
      %v492 = vadd.f32 %v247, %v491
      %v493 = vpop.f32.mrf.mxu0
      %v494 = vpop.f32.mrf.mxu0
      %v495 = vadd.f32 %v247, %v494
      %v496 = vpop.f32.mrf.mxu0
      %497 = vmatprep.mubr.bf16.mxu0 %v293
      %498 = vmatmul.mubr.bf16.gmra.mxu0 %v292
      %v499 = vpop.f32.mrf.mxu0
      %v500 = vadd.f32 %v247, %v499
      %v501 = vpop.f32.mrf.mxu0
      %v502 = vpop.f32.mrf.mxu0
      %v503 = vadd.f32 %v247, %v502
      %v504 = vpop.f32.mrf.mxu0
      %505 = vmatprep.mubr.bf16.mxu0 %v296
      %506 = vmatmul.mubr.bf16.gmra.mxu0 %v295
      %v507 = vpop.f32.mrf.mxu0
      %v508 = vadd.f32 %v247, %v507
      %v509 = vpop.f32.mrf.mxu0
      %v510 = vpop.f32.mrf.mxu0
      %v511 = vadd.f32 %v247, %v510
      %v512 = vpop.f32.mrf.mxu0
      %513 = vmatprep.mubr.bf16.mxu0 %v299
      %514 = vmatmul.mubr.bf16.gmra.mxu0 %v298
      %v515 = vpop.f32.mrf.mxu0
      %v516 = vadd.f32 %v247, %v515
      %v517 = vpop.f32.mrf.mxu0
      %v518 = vpop.f32.mrf.mxu0
      %v519 = vadd.f32 %v247, %v518
      %v520 = vpop.f32.mrf.mxu0
      %521 = vdwg.mxu0
      %522 = vmatprep.subr.bf16.mxu0 0
      %523 = vmatpush1.bf16.msra.mxu0 %v432
      %524 = vmatprep.subr.bf16.mxu0 0
      %525 = vmatpush1.bf16.msra.mxu0 %v431
      %526 = vmatprep.subr.bf16.mxu0 0
      %527 = vmatpush1.bf16.msra.mxu0 %v430
      %528 = vmatprep.subr.bf16.mxu0 0
      %529 = vmatpush1.bf16.msra.mxu0 %v429
      %530 = vmatprep.subr.bf16.mxu0 0
      %531 = vmatpush1.bf16.msra.mxu0 %v428
      %532 = vmatprep.subr.bf16.mxu0 0
      %533 = vmatpush1.bf16.msra.mxu0 %v427
      %534 = vmatprep.subr.bf16.mxu0 0
      %535 = vmatpush1.bf16.msra.mxu0 %v426
      %536 = vmatprep.subr.bf16.mxu0 0
      %537 = vmatpush1.bf16.msra.mxu0 %v425
      %538 = vmatprep.subr.bf16.mxu0 0
      %539 = vmatpush2.bf16.msra.mxu0 0
      %540 = vmatprep.subr.bf16.mxu0 0
      %541 = vmatpush2.bf16.msra.mxu0 0
      %542 = vmatprep.subr.bf16.mxu0 0
      %543 = vmatpush2.bf16.msra.mxu0 0
      %544 = vmatprep.subr.bf16.mxu0 0
      %545 = vmatpush2.bf16.msra.mxu0 0
      %546 = vmatprep.subr.bf16.mxu0 0
      %547 = vmatpush2.bf16.msra.mxu0 0
      %548 = vmatprep.subr.bf16.mxu0 0
      %549 = vmatpush2.bf16.msra.mxu0 0
      %550 = vmatprep.subr.bf16.mxu0 0
      %551 = vmatpush2.bf16.msra.mxu0 0
      %552 = vmatprep.subr.bf16.mxu0 0
      %553 = vmatpush2.bf16.msra.mxu0 0
      %554 = vmatprep.mubr.bf16.mxu0 0
      %555 = vmatmul.mubr.bf16.gmra.mxu0 %v291
      %v556 = vpop.f32.mrf.mxu0
      %v557 = vadd.f32 %v492, %v556
      %v558 = vpop.f32.mrf.mxu0
      %v559 = vpop.f32.mrf.mxu0
      %v560 = vadd.f32 %v495, %v559
      %v561 = vpop.f32.mrf.mxu0
      %562 = vmatprep.mubr.bf16.mxu0 0
      %563 = vmatmul.mubr.bf16.gmra.mxu0 %v294
      %v564 = vpop.f32.mrf.mxu0
      %v565 = vadd.f32 %v500, %v564
      %v566 = vpop.f32.mrf.mxu0
      %v567 = vpop.f32.mrf.mxu0
      %v568 = vadd.f32 %v503, %v567
      %v569 = vpop.f32.mrf.mxu0
      %570 = vmatprep.mubr.bf16.mxu0 0
      %571 = vmatmul.mubr.bf16.gmra.mxu0 %v297
      %v572 = vpop.f32.mrf.mxu0
      %v573 = vadd.f32 %v508, %v572
      %v574 = vpop.f32.mrf.mxu0
      %v575 = vpop.f32.mrf.mxu0
      %v576 = vadd.f32 %v511, %v575
      %v577 = vpop.f32.mrf.mxu0
      %578 = vmatprep.mubr.bf16.mxu0 0
      %579 = vmatmul.mubr.bf16.gmra.mxu0 %v300
      %v580 = vpop.f32.mrf.mxu0
      %v581 = vadd.f32 %v516, %v580
      %v582 = vpop.f32.mrf.mxu0
      %v583 = vpop.f32.mrf.mxu0
      %v584 = vadd.f32 %v519, %v583
      %v585 = vpop.f32.mrf.mxu0
      %586 = vdwg.mxu0
      %v587 = vmax.f32 %v557, 0.0
      %v588 = vmax.f32 %v560, 0.0
      %v589 = vmax.f32 %v565, 0.0
      %v590 = vmax.f32 %v568, 0.0
      %v591 = vmax.f32 %v573, 0.0
      %v592 = vmax.f32 %v576, 0.0
      %v593 = vmax.f32 %v581, 0.0
      %v594 = vmax.f32 %v584, 0.0
      %595 = vst [vmem:[%s175] sm:$0xff] %v587
      %596 = vst [vmem:[%s175 + $0x8] sm:$0xff] %v588
      %597 = vst [vmem:[%s175 + $0x10] sm:$0xff] %v589
      %598 = vst [vmem:[%s175 + $0x18] sm:$0xff] %v590
      %599 = vst [vmem:[%s175 + $0x20] sm:$0xff] %v591
      %600 = vst [vmem:[%s175 + $0x28] sm:$0xff] %v592
      %601 = vst [vmem:[%s175 + $0x30] sm:$0xff] %v593
      %602 = vst [vmem:[%s175 + $0x38] sm:$0xff] %v594
      %s603 = smul.u32 8, %s14
      %p604 = scmp.lt.s32.totalorder %s603, 15
      %s605 = scalar_select %p604, %s603, 15
      %s606 = smul.addr %s605, 8
      %s607 = scalar_lea.vmem %s3, %s606
      // Predicated region
      $region33: #{yolact_wrapper_forward.8} parent=31 // pred_check
        %p608 = pneg %p100
      $region34: #{yolact_wrapper_forward.8} parent=31 // pred_check_branch
        %610 = sbr.rel (%p608) target = $region36
      $region35: #{yolact_wrapper_forward.8} parent=31 // pred_region
        %s611 = smul.u32 8, %s14
      $region36: #{yolact_wrapper_forward.8} parent=31 // pred_fallthru
        _
    $region32: #{yolact_wrapper_forward.8} parent=5 // pred_fallthru
      _
    %p612 = scmp.le.s32.totalorder 2, %s9
    // Predicated region
    $region37: #{yolact_wrapper_forward.8} parent=5 // pred_check
      %p613 = pneg %p612
    $region38: #{yolact_wrapper_forward.8} parent=5 // pred_check_branch
      %615 = sbr.rel (%p613) target = $region40
    $region39: #{yolact_wrapper_forward.8} parent=5 // pred_region
      %s616 = ssub.s32 %s9, 2
      // Predicated region
      $region41: #{yolact_wrapper_forward.8} parent=39 // pred_check
        %p617 = pneg %p106
      $region42: #{yolact_wrapper_forward.8} parent=39 // pred_check_branch
        %619 = sbr.rel (%p617) target = $region44
      $region43: #{yolact_wrapper_forward.8} parent=39 // pred_region
        %s620 = smul.u32 8, %s15
        %p621 = scmp.lt.s32.totalorder %s620, 15
        %s622 = scalar_select %p621, %s620, 15
        %s623 = smul.addr %s622, 8
        %s624 = scalar_lea.vmem %s3, %s623
      $region44: #{yolact_wrapper_forward.8} parent=39 // pred_fallthru
        _
    $region40: #{yolact_wrapper_forward.8} parent=5 // pred_fallthru
      _
  $region6: #{yolact_wrapper_forward.8} parent=0 // loop_footer
    %s13 = sadd.s32 1, %s9
  $region7: #{yolact_wrapper_forward.8} parent=0 // loop_footer_branch
    %8 = sbr.rel target = $region3
  $region8: #{yolact_wrapper_forward.8} parent=0 // loop_exit
    _

// kernel: yolact_wrapper_forward.9
$region0: #{yolact_wrapper_forward.9}
  #allocation0 [shape = 'u32[]', space=smem, size = 0x4, offset = 0x4, fixed_abs, tag = 'smem constant byte address 0x4 - core index']
  #allocation1 [shape = 'u32[144,128]{1,0:T(1,128)}', space=vmem, size = 0x12000, scoped, tag = 'internal scratch']
  %s0 = inlined_call_operand.vmem [shape: bf16[128,640], index: 0, kind: input, shape index: {}]
  %s1 = inlined_call_operand.vmem [shape: bf16[640,128], index: 1, kind: input, shape index: {}]
  %s2 = inlined_call_operand.vmem [shape: f32[1,128], index: 2, kind: input, shape index: {}]
  %s3 = inlined_call_operand.vmem [shape: f32[128,128], index: 3, kind: output, shape index: {}]
  %s4 = sld [smem:[#allocation0]]
  $region45: #{yolact_wrapper_forward.9} parent=0
    _
  %s6 = ssub.s32 1, %s4
  %s7 = scalar_select 0, %s6, %s4
  loop: start=0, step=1, limit=4
  $region2: #{yolact_wrapper_forward.9} parent=0 // loop_pre_header
    _
  $region3: #{yolact_wrapper_forward.9} parent=0 // loop_header
    %s9 = sphi 0, %s13
    %p10 = scmp.ge.s32.totalorder %s9, 4
    %s19 = sphi 0, %s21
    %s22 = sphi 0, %s19
    %s23 = sphi 0, %s22
    %s39 = sphi 0, %s23
    %s43 = sphi 0, %s43
    %s45 = sphi 0, %s43
    %s46 = sphi 0, %s45
    %s60 = sphi 0, %s46
    %s64 = sphi 0, %s64
    %s66 = sphi 0, %s64
    %s67 = sphi 0, %s66
    %s81 = sphi 0, %s67
    %s87 = sphi 0, %s89
    %s90 = sphi 0, %s87
    %s91 = sphi 0, %s90
    %s107 = sphi 0, %s91
  $region4: #{yolact_wrapper_forward.9} parent=0 // loop_header_branch
    %12 = sbr.rel (%p10) target = $region8
  $region5: #{yolact_wrapper_forward.9} parent=0 // loop_body
    %s14 = ssub.s32 %s9, 1
    %s15 = ssub.s32 %s9, 2
    %s16 = sadd.s32 %s9, 1
    %s17 = ssub.s32 %s9, %s16
    %p18 = scmp.eq.s32.totalorder %s17, 0
    %s20 = sadd.s32 %s19, 1
    %s21 = scalar_select %p18, %s19, %s20
    %p24 = pneg %p18
    %p25 = scmp.eq.s32.totalorder %s9, 1
    %p26 = por %p24, %p25
    %p27 = scmp.ne.s32.totalorder %s19, %s22
    %p28 = scmp.eq.s32.totalorder %s9, 0
    %p29 = por %p27, %p28
    %p30 = scmp.ne.s32.totalorder %s19, %s22
    %p31 = scmp.eq.s32.totalorder %s14, 1
    %p32 = por %p30, %p31
    %p33 = scmp.ne.s32.totalorder %s22, %s23
    %p34 = scmp.eq.s32.totalorder %s14, 0
    %p35 = por %p33, %p34
    %p36 = scmp.ne.s32.totalorder %s22, %s23
    %p37 = scmp.eq.s32.totalorder %s15, 1
    %p38 = por %p36, %p37
    %p40 = scmp.ne.s32.totalorder %s23, %s39
    %p41 = scmp.eq.s32.totalorder %s15, 0
    %p42 = por %p40, %p41
    %s44 = sadd.s32 %s43, 1
    %p47 = scmp.eq.s32.totalorder %s9, 1
    %p48 = scmp.ne.s32.totalorder %s43, %s45
    %p49 = scmp.eq.s32.totalorder %s9, 0
    %p50 = por %p48, %p49
    %p51 = scmp.ne.s32.totalorder %s43, %s45
    %p52 = scmp.eq.s32.totalorder %s14, 1
    %p53 = por %p51, %p52
    %p54 = scmp.ne.s32.totalorder %s45, %s46
    %p55 = scmp.eq.s32.totalorder %s14, 0
    %p56 = por %p54, %p55
    %p57 = scmp.ne.s32.totalorder %s45, %s46
    %p58 = scmp.eq.s32.totalorder %s15, 1
    %p59 = por %p57, %p58
    %p61 = scmp.ne.s32.totalorder %s46, %s60
    %p62 = scmp.eq.s32.totalorder %s15, 0
    %p63 = por %p61, %p62
    %s65 = sadd.s32 %s64, 1
    %p68 = scmp.eq.s32.totalorder %s9, 1
    %p69 = scmp.ne.s32.totalorder %s64, %s66
    %p70 = scmp.eq.s32.totalorder %s9, 0
    %p71 = por %p69, %p70
    %p72 = scmp.ne.s32.totalorder %s64, %s66
    %p73 = scmp.eq.s32.totalorder %s14, 1
    %p74 = por %p72, %p73
    %p75 = scmp.ne.s32.totalorder %s66, %s67
    %p76 = scmp.eq.s32.totalorder %s14, 0
    %p77 = por %p75, %p76
    %p78 = scmp.ne.s32.totalorder %s66, %s67
    %p79 = scmp.eq.s32.totalorder %s15, 1
    %p80 = por %p78, %p79
    %p82 = scmp.ne.s32.totalorder %s67, %s81
    %p83 = scmp.eq.s32.totalorder %s15, 0
    %p84 = por %p82, %p83
    %s85 = ssub.s32 %s9, %s16
    %p86 = scmp.eq.s32.totalorder %s85, 0
    %s88 = sadd.s32 %s87, 1
    %s89 = scalar_select %p86, %s87, %s88
    %p92 = pneg %p86
    %p93 = scmp.eq.s32.totalorder %s9, 1
    %p94 = por %p92, %p93
    %p95 = scmp.ne.s32.totalorder %s87, %s90
    %p96 = scmp.eq.s32.totalorder %s9, 0
    %p97 = por %p95, %p96
    %p98 = scmp.ne.s32.totalorder %s87, %s90
    %p99 = scmp.eq.s32.totalorder %s14, 1
    %p100 = por %p98, %p99
    %p101 = scmp.ne.s32.totalorder %s90, %s91
    %p102 = scmp.eq.s32.totalorder %s14, 0
    %p103 = por %p101, %p102
    %p104 = scmp.ne.s32.totalorder %s90, %s91
    %p105 = scmp.eq.s32.totalorder %s15, 1
    %p106 = por %p104, %p105
    %p108 = scmp.ne.s32.totalorder %s91, %s107
    %p109 = scmp.eq.s32.totalorder %s15, 0
    %p110 = por %p108, %p109
    %p111 = scmp.le.s32.totalorder 1, %s9
    %p112 = scmp.lt.s32.totalorder %s9, 3
    %p113 = pnand %p111, %p112
    %p114 = pneg %p113
    // Predicated region
    $region9: #{yolact_wrapper_forward.9} parent=5 // pred_check
      _
    $region10: #{yolact_wrapper_forward.9} parent=5 // pred_check_branch
      %116 = sbr.rel (%p113) target = $region12
    $region11: #{yolact_wrapper_forward.9} parent=5 // pred_region
      %s117 = ssub.s32 %s9, 1
      // Predicated region
      $region13: #{yolact_wrapper_forward.9} parent=11 // pred_check
        %p118 = pneg %p56
      $region14: #{yolact_wrapper_forward.9} parent=11 // pred_check_branch
        %120 = sbr.rel (%p118) target = $region16
      $region15: #{yolact_wrapper_forward.9} parent=11 // pred_region
        _
      $region16: #{yolact_wrapper_forward.9} parent=11 // pred_fallthru
        _
      // Predicated region
      $region17: #{yolact_wrapper_forward.9} parent=11 // pred_check
        %p121 = pneg %p77
      $region18: #{yolact_wrapper_forward.9} parent=11 // pred_check_branch
        %123 = sbr.rel (%p121) target = $region20
      $region19: #{yolact_wrapper_forward.9} parent=11 // pred_region
        _
      $region20: #{yolact_wrapper_forward.9} parent=11 // pred_fallthru
        _
    $region12: #{yolact_wrapper_forward.9} parent=5 // pred_fallthru
      _
    %p124 = scmp.lt.s32.totalorder %s9, 2
    // Predicated region
    $region21: #{yolact_wrapper_forward.9} parent=5 // pred_check
      %p125 = pneg %p124
    $region22: #{yolact_wrapper_forward.9} parent=5 // pred_check_branch
      %127 = sbr.rel (%p125) target = $region24
    $region23: #{yolact_wrapper_forward.9} parent=5 // pred_region
      // Predicated region
      $region25: #{yolact_wrapper_forward.9} parent=23 // pred_check
        %p128 = pneg %p29
      $region26: #{yolact_wrapper_forward.9} parent=23 // pred_check_branch
        %130 = sbr.rel (%p128) target = $region28
      $region27: #{yolact_wrapper_forward.9} parent=23 // pred_region
        %s131 = smul.u32 8, %s9
        %p132 = scmp.lt.s32.totalorder %s131, 15
        %s133 = scalar_select %p132, %s131, 15
        %s134 = smul.addr %s133, 5
        %s135 = smul.addr %s134, 4
        %s136 = scalar_lea.vmem %s0, %s135
        %s137 = smul.u32 8, %s9
      $region28: #{yolact_wrapper_forward.9} parent=23 // pred_fallthru
        _
    $region24: #{yolact_wrapper_forward.9} parent=5 // pred_fallthru
      _
    %p138 = scmp.le.s32.totalorder 1, %s9
    %p139 = scmp.lt.s32.totalorder %s9, 3
    %p140 = pnand %p138, %p139
    %p141 = pneg %p140
    // Predicated region
    $region29: #{yolact_wrapper_forward.9} parent=5 // pred_check
      _
    $region30: #{yolact_wrapper_forward.9} parent=5 // pred_check_branch
      %143 = sbr.rel (%p140) target = $region32
    $region31: #{yolact_wrapper_forward.9} parent=5 // pred_region
      %s144 = ssub.s32 %s9, 1
      %s145 = smul.u32 8, %s14
      %p146 = scmp.lt.s32.totalorder %s145, 15
      %s147 = scalar_select %p146, %s145, 15
      %s148 = smul.addr %s147, 5
      %s149 = smul.addr %s148, 4
      %s150 = scalar_lea.vmem %s0, %s149
      %p151 = pneg %p35
      %p152 = pneg %p32
      %p153 = pneg %p56
      %p154 = pneg %p53
      %p155 = pneg %p77
      %p156 = pneg %p74
      %p157 = pneg %p103
      %p158 = pneg %p100
      %s159 = smul.u32 8, %s14
      %p160 = scmp.lt.s32.totalorder %s159, 15
      %s161 = scalar_select %p160, %s159, 15
      %s162 = smul.addr %s161, 8
      %s163 = scalar_lea.vmem %s3, %s162
      %s164 = smul.u32 8, %s14
      %p165 = scmp.lt.s32.totalorder %s164, 15
      %s166 = scalar_select %p165, %s164, 15
      %s167 = smul.addr %s166, 5
      %s168 = smul.addr %s167, 4
      %s169 = scalar_lea.vmem %s0, %s168
      %s170 = smul.u32 8, %s14
      %s171 = smul.u32 8, %s14
      %p172 = scmp.lt.s32.totalorder %s171, 15
      %s173 = scalar_select %p172, %s171, 15
      %s174 = smul.addr %s173, 8
      %s175 = scalar_lea.vmem %s3, %s174
      %s176 = smul.u32 8, %s14
      %v178 = vld [vmem:[%s169] sm:$0xff]
      %v179 = vld [vmem:[%s169 + $0x8] sm:$0xff]
      %v180 = vld [vmem:[%s169 + $0x10] sm:$0xf]
      %v181 = vld [vmem:[%s169 + $0x14] sm:$0xff]
      %v182 = vld [vmem:[%s169 + $0x1c] sm:$0xff]
      %v183 = vld [vmem:[%s169 + $0x24] sm:$0xf]
      %v184 = vld [vmem:[%s169 + $0x28] sm:$0xff]
      %v185 = vld [vmem:[%s169 + $0x30] sm:$0xff]
      %v186 = vld [vmem:[%s169 + $0x38] sm:$0xf]
      %v187 = vld [vmem:[%s169 + $0x3c] sm:$0xff]
      %v188 = vld [vmem:[%s169 + $0x44] sm:$0xff]
      %v189 = vld [vmem:[%s169 + $0x4c] sm:$0xf]
      %v190 = vld [vmem:[%s169 + $0x50] sm:$0xff]
      %v191 = vld [vmem:[%s169 + $0x58] sm:$0xff]
      %v192 = vld [vmem:[%s169 + $0x60] sm:$0xf]
      %v193 = vld [vmem:[%s169 + $0x64] sm:$0xff]
      %v194 = vld [vmem:[%s169 + $0x6c] sm:$0xff]
      %v195 = vld [vmem:[%s169 + $0x74] sm:$0xf]
      %v196 = vld [vmem:[%s169 + $0x78] sm:$0xff]
      %v197 = vld [vmem:[%s169 + $0x80] sm:$0xff]
      %v198 = vld [vmem:[%s169 + $0x88] sm:$0xf]
      %v199 = vld [vmem:[%s169 + $0x8c] sm:$0xff]
      %v200 = vld [vmem:[%s169 + $0x94] sm:$0xff]
      %v201 = vld [vmem:[%s169 + $0x9c] sm:$0xf]
      %v202 = vld [vmem:[%s1] sm:$0xf]
      %v203 = vld [vmem:[%s1 + $0x4] sm:$0xf]
      %v204 = vld [vmem:[%s1 + $0x8] sm:$0xf]
      %v205 = vld [vmem:[%s1 + $0xc] sm:$0xf]
      %v206 = vld [vmem:[%s1 + $0x10] sm:$0xf]
      %v207 = vld [vmem:[%s1 + $0x14] sm:$0xf]
      %v208 = vld [vmem:[%s1 + $0x18] sm:$0xf]
      %v209 = vld [vmem:[%s1 + $0x1c] sm:$0xf]
      %v210 = vld [vmem:[%s1 + $0x20] sm:$0xf]
      %v211 = vld [vmem:[%s1 + $0x24] sm:$0xf]
      %v212 = vld [vmem:[%s1 + $0x28] sm:$0xf]
      %v213 = vld [vmem:[%s1 + $0x2c] sm:$0xf]
      %v214 = vld [vmem:[%s1 + $0x30] sm:$0xf]
      %v215 = vld [vmem:[%s1 + $0x34] sm:$0xf]
      %v216 = vld [vmem:[%s1 + $0x38] sm:$0xf]
      %v217 = vld [vmem:[%s1 + $0x3c] sm:$0xf]
      %v218 = vld [vmem:[%s1 + $0x40] sm:$0xf]
      %v219 = vld [vmem:[%s1 + $0x44] sm:$0xf]
      %v220 = vld [vmem:[%s1 + $0x48] sm:$0xf]
      %v221 = vld [vmem:[%s1 + $0x4c] sm:$0xf]
      %v222 = vld [vmem:[%s1 + $0x50] sm:$0xf]
      %v223 = vld [vmem:[%s1 + $0x54] sm:$0xf]
      %v224 = vld [vmem:[%s1 + $0x58] sm:$0xf]
      %v225 = vld [vmem:[%s1 + $0x5c] sm:$0xf]
      %v226 = vld [vmem:[%s1 + $0x60] sm:$0xf]
      %v227 = vld [vmem:[%s1 + $0x64] sm:$0xf]
      %v228 = vld [vmem:[%s1 + $0x68] sm:$0xf]
      %v229 = vld [vmem:[%s1 + $0x6c] sm:$0xf]
      %v230 = vld [vmem:[%s1 + $0x70] sm:$0xf]
      %v231 = vld [vmem:[%s1 + $0x74] sm:$0xf]
      %v232 = vld [vmem:[%s1 + $0x78] sm:$0xf]
      %v233 = vld [vmem:[%s1 + $0x7c] sm:$0xf]
      %v234 = vld [vmem:[%s1 + $0x80] sm:$0xf]
      %v235 = vld [vmem:[%s1 + $0x84] sm:$0xf]
      %v236 = vld [vmem:[%s1 + $0x88] sm:$0xf]
      %v237 = vld [vmem:[%s1 + $0x8c] sm:$0xf]
      %v238 = vld [vmem:[%s1 + $0x90] sm:$0xf]
      %v239 = vld [vmem:[%s1 + $0x94] sm:$0xf]
      %v240 = vld [vmem:[%s1 + $0x98] sm:$0xf]
      %v241 = vld [vmem:[%s1 + $0x9c] sm:$0xf]
      %v242 = vld [vmem:[%s1 + $0xa0] sm:$0xf]
      %v243 = vld [vmem:[%s1 + $0xa4] sm:$0xf]
      %v244 = vld [vmem:[%s1 + $0xa8] sm:$0xf]
      %v245 = vld [vmem:[%s1 + $0xac] sm:$0xf]
      %v246 = vld [vmem:[%s1 + $0xb0] sm:$0xf]
      %v247 = vld [vmem:[%s1 + $0xb4] sm:$0xf]
      %v248 = vld [vmem:[%s1 + $0xb8] sm:$0xf]
      %v249 = vld [vmem:[%s1 + $0xbc] sm:$0xf]
      %v250 = vld [vmem:[%s1 + $0xc0] sm:$0xf]
      %v251 = vld [vmem:[%s1 + $0xc4] sm:$0xf]
      %v252 = vld [vmem:[%s1 + $0xc8] sm:$0xf]
      %v253 = vld [vmem:[%s1 + $0xcc] sm:$0xf]
      %v254 = vld [vmem:[%s1 + $0xd0] sm:$0xf]
      %v255 = vld [vmem:[%s1 + $0xd4] sm:$0xf]
      %v256 = vld [vmem:[%s1 + $0xd8] sm:$0xf]
      %v257 = vld [vmem:[%s1 + $0xdc] sm:$0xf]
      %v258 = vld [vmem:[%s1 + $0xe0] sm:$0xf]
      %v259 = vld [vmem:[%s1 + $0xe4] sm:$0xf]
      %v260 = vld [vmem:[%s1 + $0xe8] sm:$0xf]
      %v261 = vld [vmem:[%s1 + $0xec] sm:$0xf]
      %v262 = vld [vmem:[%s1 + $0xf0] sm:$0xf]
      %v263 = vld [vmem:[%s1 + $0xf4] sm:$0xf]
      %v264 = vld [vmem:[%s1 + $0xf8] sm:$0xf]
      %v265 = vld [vmem:[%s1 + $0xfc] sm:$0xf]
      %v266 = vld [vmem:[%s1 + $0x100] sm:$0xf]
      %v267 = vld [vmem:[%s1 + $0x104] sm:$0xf]
      %v268 = vld [vmem:[%s1 + $0x108] sm:$0xf]
      %v269 = vld [vmem:[%s1 + $0x10c] sm:$0xf]
      %v270 = vld [vmem:[%s1 + $0x110] sm:$0xf]
      %v271 = vld [vmem:[%s1 + $0x114] sm:$0xf]
      %v272 = vld [vmem:[%s1 + $0x118] sm:$0xf]
      %v273 = vld [vmem:[%s1 + $0x11c] sm:$0xf]
      %v274 = vld [vmem:[%s1 + $0x120] sm:$0xf]
      %v275 = vld [vmem:[%s1 + $0x124] sm:$0xf]
      %v276 = vld [vmem:[%s1 + $0x128] sm:$0xf]
      %v277 = vld [vmem:[%s1 + $0x12c] sm:$0xf]
      %v278 = vld [vmem:[%s1 + $0x130] sm:$0xf]
      %v279 = vld [vmem:[%s1 + $0x134] sm:$0xf]
      %v280 = vld [vmem:[%s1 + $0x138] sm:$0xf]
      %v281 = vld [vmem:[%s1 + $0x13c] sm:$0xf]
      %v282 = vld [vmem:[%s2] sm:$0x1]
      %v284 = vlaneseq
      %v285 = vshrl.u32 %v284, 7
      %v286 = vsub.s32 0, %v285
      %v287 = vrot.slane %v282, %v286
      %v313 = vunpack.c.l.b16 %v178
      %v314 = vunpack.c.h.b16 %v178
      %v315 = vunpack.c.l.b16 %v179
      %v316 = vunpack.c.h.b16 %v179
      %v317 = vunpack.c.l.b16 %v180
      %v318 = vunpack.c.l.b16 %v181
      %v319 = vunpack.c.h.b16 %v181
      %v320 = vunpack.c.l.b16 %v182
      %v321 = vunpack.c.h.b16 %v182
      %v322 = vunpack.c.l.b16 %v183
      %v323 = vunpack.c.l.b16 %v184
      %v324 = vunpack.c.h.b16 %v184
      %v325 = vunpack.c.l.b16 %v185
      %v326 = vunpack.c.h.b16 %v185
      %v327 = vunpack.c.l.b16 %v186
      %v328 = vunpack.c.l.b16 %v187
      %v329 = vunpack.c.h.b16 %v187
      %v330 = vunpack.c.l.b16 %v188
      %v331 = vunpack.c.h.b16 %v188
      %v332 = vunpack.c.l.b16 %v189
      %v333 = vunpack.c.l.b16 %v190
      %v334 = vunpack.c.h.b16 %v190
      %v335 = vunpack.c.l.b16 %v191
      %v336 = vunpack.c.h.b16 %v191
      %v337 = vunpack.c.l.b16 %v192
      %v338 = vunpack.c.l.b16 %v193
      %v339 = vunpack.c.h.b16 %v193
      %v340 = vunpack.c.l.b16 %v194
      %v341 = vunpack.c.h.b16 %v194
      %v342 = vunpack.c.l.b16 %v195
      %v343 = vunpack.c.l.b16 %v196
      %v344 = vunpack.c.h.b16 %v196
      %v345 = vunpack.c.l.b16 %v197
      %v346 = vunpack.c.h.b16 %v197
      %v347 = vunpack.c.l.b16 %v198
      %v348 = vunpack.c.l.b16 %v199
      %v349 = vunpack.c.h.b16 %v199
      %v350 = vunpack.c.l.b16 %v200
      %v351 = vunpack.c.h.b16 %v200
      %v352 = vunpack.c.l.b16 %v201
      %v353 = vpack.c.b16 %v318, %v313
      %v354 = vpack.c.b16 %v319, %v314
      %v355 = vpack.c.b16 %v320, %v315
      %v356 = vpack.c.b16 %v321, %v316
      %v357 = vpack.c.b16 %v322, %v317
      %v358 = vpack.c.b16 %v328, %v323
      %v359 = vpack.c.b16 %v329, %v324
      %v360 = vpack.c.b16 %v330, %v325
      %v361 = vpack.c.b16 %v331, %v326
      %v362 = vpack.c.b16 %v332, %v327
      %v363 = vpack.c.b16 %v338, %v333
      %v364 = vpack.c.b16 %v339, %v334
      %v365 = vpack.c.b16 %v340, %v335
      %v366 = vpack.c.b16 %v341, %v336
      %v367 = vpack.c.b16 %v342, %v337
      %v368 = vpack.c.b16 %v348, %v343
      %v369 = vpack.c.b16 %v349, %v344
      %v370 = vpack.c.b16 %v350, %v345
      %v371 = vpack.c.b16 %v351, %v346
      %v372 = vpack.c.b16 %v352, %v347
      %v473 = vunpack.c.l.b16 %v202
      %v474 = vunpack.c.l.b16 %v203
      %v475 = vunpack.c.l.b16 %v204
      %v476 = vunpack.c.l.b16 %v205
      %v477 = vunpack.c.l.b16 %v206
      %v478 = vunpack.c.l.b16 %v207
      %v479 = vunpack.c.l.b16 %v208
      %v480 = vunpack.c.l.b16 %v209
      %v481 = vunpack.c.l.b16 %v210
      %v482 = vunpack.c.l.b16 %v211
      %v483 = vunpack.c.l.b16 %v212
      %v484 = vunpack.c.l.b16 %v213
      %v485 = vunpack.c.l.b16 %v214
      %v486 = vunpack.c.l.b16 %v215
      %v487 = vunpack.c.l.b16 %v216
      %v488 = vunpack.c.l.b16 %v217
      %v489 = vunpack.c.l.b16 %v218
      %v490 = vunpack.c.l.b16 %v219
      %v491 = vunpack.c.l.b16 %v220
      %v492 = vunpack.c.l.b16 %v221
      %v493 = vunpack.c.l.b16 %v222
      %v494 = vunpack.c.l.b16 %v223
      %v495 = vunpack.c.l.b16 %v224
      %v496 = vunpack.c.l.b16 %v225
      %v497 = vunpack.c.l.b16 %v226
      %v498 = vunpack.c.l.b16 %v227
      %v499 = vunpack.c.l.b16 %v228
      %v500 = vunpack.c.l.b16 %v229
      %v501 = vunpack.c.l.b16 %v230
      %v502 = vunpack.c.l.b16 %v231
      %v503 = vunpack.c.l.b16 %v232
      %v504 = vunpack.c.l.b16 %v233
      %v505 = vunpack.c.l.b16 %v234
      %v506 = vunpack.c.l.b16 %v235
      %v507 = vunpack.c.l.b16 %v236
      %v508 = vunpack.c.l.b16 %v237
      %v509 = vunpack.c.l.b16 %v238
      %v510 = vunpack.c.l.b16 %v239
      %v511 = vunpack.c.l.b16 %v240
      %v512 = vunpack.c.l.b16 %v241
      %v513 = vunpack.c.l.b16 %v242
      %v514 = vunpack.c.l.b16 %v243
      %v515 = vunpack.c.l.b16 %v244
      %v516 = vunpack.c.l.b16 %v245
      %v517 = vunpack.c.l.b16 %v246
      %v518 = vunpack.c.l.b16 %v247
      %v519 = vunpack.c.l.b16 %v248
      %v520 = vunpack.c.l.b16 %v249
      %v521 = vunpack.c.l.b16 %v250
      %v522 = vunpack.c.l.b16 %v251
      %v523 = vunpack.c.l.b16 %v252
      %v524 = vunpack.c.l.b16 %v253
      %v525 = vunpack.c.l.b16 %v254
      %v526 = vunpack.c.l.b16 %v255
      %v527 = vunpack.c.l.b16 %v256
      %v528 = vunpack.c.l.b16 %v257
      %v529 = vunpack.c.l.b16 %v258
      %v530 = vunpack.c.l.b16 %v259
      %v531 = vunpack.c.l.b16 %v260
      %v532 = vunpack.c.l.b16 %v261
      %v533 = vunpack.c.l.b16 %v262
      %v534 = vunpack.c.l.b16 %v263
      %v535 = vunpack.c.l.b16 %v264
      %v536 = vunpack.c.l.b16 %v265
      %v537 = vunpack.c.l.b16 %v266
      %v538 = vunpack.c.l.b16 %v267
      %v539 = vunpack.c.l.b16 %v268
      %v540 = vunpack.c.l.b16 %v269
      %v541 = vunpack.c.l.b16 %v270
      %v542 = vunpack.c.l.b16 %v271
      %v543 = vunpack.c.l.b16 %v272
      %v544 = vunpack.c.l.b16 %v273
      %v545 = vunpack.c.l.b16 %v274
      %v546 = vunpack.c.l.b16 %v275
      %v547 = vunpack.c.l.b16 %v276
      %v548 = vunpack.c.l.b16 %v277
      %v549 = vunpack.c.l.b16 %v278
      %v550 = vunpack.c.l.b16 %v279
      %v551 = vunpack.c.l.b16 %v280
      %v552 = vunpack.c.l.b16 %v281
      %v553 = vpack.c.b16 %v474, %v473
      %v554 = vpack.c.b16 %v476, %v475
      %v555 = vpack.c.b16 %v478, %v477
      %v556 = vpack.c.b16 %v480, %v479
      %v557 = vpack.c.b16 %v482, %v481
      %v558 = vpack.c.b16 %v484, %v483
      %v559 = vpack.c.b16 %v486, %v485
      %v560 = vpack.c.b16 %v488, %v487
      %v561 = vpack.c.b16 %v490, %v489
      %v562 = vpack.c.b16 %v492, %v491
      %v563 = vpack.c.b16 %v494, %v493
      %v564 = vpack.c.b16 %v496, %v495
      %v565 = vpack.c.b16 %v498, %v497
      %v566 = vpack.c.b16 %v500, %v499
      %v567 = vpack.c.b16 %v502, %v501
      %v568 = vpack.c.b16 %v504, %v503
      %v569 = vpack.c.b16 %v506, %v505
      %v570 = vpack.c.b16 %v508, %v507
      %v571 = vpack.c.b16 %v510, %v509
      %v572 = vpack.c.b16 %v512, %v511
      %v573 = vpack.c.b16 %v514, %v513
      %v574 = vpack.c.b16 %v516, %v515
      %v575 = vpack.c.b16 %v518, %v517
      %v576 = vpack.c.b16 %v520, %v519
      %v577 = vpack.c.b16 %v522, %v521
      %v578 = vpack.c.b16 %v524, %v523
      %v579 = vpack.c.b16 %v526, %v525
      %v580 = vpack.c.b16 %v528, %v527
      %v581 = vpack.c.b16 %v530, %v529
      %v582 = vpack.c.b16 %v532, %v531
      %v583 = vpack.c.b16 %v534, %v533
      %v584 = vpack.c.b16 %v536, %v535
      %v585 = vpack.c.b16 %v538, %v537
      %v586 = vpack.c.b16 %v540, %v539
      %v587 = vpack.c.b16 %v542, %v541
      %v588 = vpack.c.b16 %v544, %v543
      %v589 = vpack.c.b16 %v546, %v545
      %v590 = vpack.c.b16 %v548, %v547
      %v591 = vpack.c.b16 %v550, %v549
      %v592 = vpack.c.b16 %v552, %v551
      %633 = vmatprep.subr.bf16.mxu0 0
      %634 = vmatpush1.bf16.msra.mxu0 %v560
      %635 = vmatprep.subr.bf16.mxu0 0
      %636 = vmatpush1.bf16.msra.mxu0 %v559
      %637 = vmatprep.subr.bf16.mxu0 0
      %638 = vmatpush1.bf16.msra.mxu0 %v558
      %639 = vmatprep.subr.bf16.mxu0 0
      %640 = vmatpush1.bf16.msra.mxu0 %v557
      %641 = vmatprep.subr.bf16.mxu0 0
      %642 = vmatpush1.bf16.msra.mxu0 %v556
      %643 = vmatprep.subr.bf16.mxu0 0
      %644 = vmatpush1.bf16.msra.mxu0 %v555
      %645 = vmatprep.subr.bf16.mxu0 0
      %646 = vmatpush1.bf16.msra.mxu0 %v554
      %647 = vmatprep.subr.bf16.mxu0 0
      %648 = vmatpush1.bf16.msra.mxu0 %v553
      %649 = vmatprep.subr.bf16.mxu0 0
      %650 = vmatpush2.bf16.msra.mxu0 %v568
      %651 = vmatprep.subr.bf16.mxu0 0
      %652 = vmatpush2.bf16.msra.mxu0 %v567
      %653 = vmatprep.subr.bf16.mxu0 0
      %654 = vmatpush2.bf16.msra.mxu0 %v566
      %655 = vmatprep.subr.bf16.mxu0 0
      %656 = vmatpush2.bf16.msra.mxu0 %v565
      %657 = vmatprep.subr.bf16.mxu0 0
      %658 = vmatpush2.bf16.msra.mxu0 %v564
      %659 = vmatprep.subr.bf16.mxu0 0
      %660 = vmatpush2.bf16.msra.mxu0 %v563
      %661 = vmatprep.subr.bf16.mxu0 0
      %662 = vmatpush2.bf16.msra.mxu0 %v562
      %663 = vmatprep.subr.bf16.mxu0 0
      %664 = vmatpush2.bf16.msra.mxu0 %v561
      %665 = vmatprep.mubr.bf16.mxu0 %v354
      %666 = vmatmul.mubr.bf16.gmra.mxu0 %v353
      %v667 = vpop.f32.mrf.mxu0
      %v668 = vadd.f32 %v287, %v667
      %v669 = vpop.f32.mrf.mxu0
      %v670 = vpop.f32.mrf.mxu0
      %v671 = vadd.f32 %v287, %v670
      %v672 = vpop.f32.mrf.mxu0
      %673 = vmatprep.mubr.bf16.mxu0 %v359
      %674 = vmatmul.mubr.bf16.gmra.mxu0 %v358
      %v675 = vpop.f32.mrf.mxu0
      %v676 = vadd.f32 %v287, %v675
      %v677 = vpop.f32.mrf.mxu0
      %v678 = vpop.f32.mrf.mxu0
      %v679 = vadd.f32 %v287, %v678
      %v680 = vpop.f32.mrf.mxu0
      %681 = vmatprep.mubr.bf16.mxu0 %v364
      %682 = vmatmul.mubr.bf16.gmra.mxu0 %v363
      %v683 = vpop.f32.mrf.mxu0
      %v684 = vadd.f32 %v287, %v683
      %v685 = vpop.f32.mrf.mxu0
      %v686 = vpop.f32.mrf.mxu0
      %v687 = vadd.f32 %v287, %v686
      %v688 = vpop.f32.mrf.mxu0
      %689 = vmatprep.mubr.bf16.mxu0 %v369
      %690 = vmatmul.mubr.bf16.gmra.mxu0 %v368
      %v691 = vpop.f32.mrf.mxu0
      %v692 = vadd.f32 %v287, %v691
      %v693 = vpop.f32.mrf.mxu0
      %v694 = vpop.f32.mrf.mxu0
      %v695 = vadd.f32 %v287, %v694
      %v696 = vpop.f32.mrf.mxu0
      %697 = vdwg.mxu0
      %698 = vmatprep.subr.bf16.mxu0 0
      %699 = vmatpush1.bf16.msra.mxu0 %v576
      %700 = vmatprep.subr.bf16.mxu0 0
      %701 = vmatpush1.bf16.msra.mxu0 %v575
      %702 = vmatprep.subr.bf16.mxu0 0
      %703 = vmatpush1.bf16.msra.mxu0 %v574
      %704 = vmatprep.subr.bf16.mxu0 0
      %705 = vmatpush1.bf16.msra.mxu0 %v573
      %706 = vmatprep.subr.bf16.mxu0 0
      %707 = vmatpush1.bf16.msra.mxu0 %v572
      %708 = vmatprep.subr.bf16.mxu0 0
      %709 = vmatpush1.bf16.msra.mxu0 %v571
      %710 = vmatprep.subr.bf16.mxu0 0
      %711 = vmatpush1.bf16.msra.mxu0 %v570
      %712 = vmatprep.subr.bf16.mxu0 0
      %713 = vmatpush1.bf16.msra.mxu0 %v569
      %714 = vmatprep.subr.bf16.mxu0 0
      %715 = vmatpush2.bf16.msra.mxu0 %v584
      %716 = vmatprep.subr.bf16.mxu0 0
      %717 = vmatpush2.bf16.msra.mxu0 %v583
      %718 = vmatprep.subr.bf16.mxu0 0
      %719 = vmatpush2.bf16.msra.mxu0 %v582
      %720 = vmatprep.subr.bf16.mxu0 0
      %721 = vmatpush2.bf16.msra.mxu0 %v581
      %722 = vmatprep.subr.bf16.mxu0 0
      %723 = vmatpush2.bf16.msra.mxu0 %v580
      %724 = vmatprep.subr.bf16.mxu0 0
      %725 = vmatpush2.bf16.msra.mxu0 %v579
      %726 = vmatprep.subr.bf16.mxu0 0
      %727 = vmatpush2.bf16.msra.mxu0 %v578
      %728 = vmatprep.subr.bf16.mxu0 0
      %729 = vmatpush2.bf16.msra.mxu0 %v577
      %730 = vmatprep.mubr.bf16.mxu0 %v356
      %731 = vmatmul.mubr.bf16.gmra.mxu0 %v355
      %v732 = vpop.f32.mrf.mxu0
      %v733 = vadd.f32 %v668, %v732
      %v734 = vpop.f32.mrf.mxu0
      %v735 = vpop.f32.mrf.mxu0
      %v736 = vadd.f32 %v671, %v735
      %v737 = vpop.f32.mrf.mxu0
      %738 = vmatprep.mubr.bf16.mxu0 %v361
      %739 = vmatmul.mubr.bf16.gmra.mxu0 %v360
      %v740 = vpop.f32.mrf.mxu0
      %v741 = vadd.f32 %v676, %v740
      %v742 = vpop.f32.mrf.mxu0
      %v743 = vpop.f32.mrf.mxu0
      %v744 = vadd.f32 %v679, %v743
      %v745 = vpop.f32.mrf.mxu0
      %746 = vmatprep.mubr.bf16.mxu0 %v366
      %747 = vmatmul.mubr.bf16.gmra.mxu0 %v365
      %v748 = vpop.f32.mrf.mxu0
      %v749 = vadd.f32 %v684, %v748
      %v750 = vpop.f32.mrf.mxu0
      %v751 = vpop.f32.mrf.mxu0
      %v752 = vadd.f32 %v687, %v751
      %v753 = vpop.f32.mrf.mxu0
      %754 = vmatprep.mubr.bf16.mxu0 %v371
      %755 = vmatmul.mubr.bf16.gmra.mxu0 %v370
      %v756 = vpop.f32.mrf.mxu0
      %v757 = vadd.f32 %v692, %v756
      %v758 = vpop.f32.mrf.mxu0
      %v759 = vpop.f32.mrf.mxu0
      %v760 = vadd.f32 %v695, %v759
      %v761 = vpop.f32.mrf.mxu0
      %762 = vdwg.mxu0
      %763 = vmatprep.subr.bf16.mxu0 0
      %764 = vmatpush1.bf16.msra.mxu0 %v592
      %765 = vmatprep.subr.bf16.mxu0 0
      %766 = vmatpush1.bf16.msra.mxu0 %v591
      %767 = vmatprep.subr.bf16.mxu0 0
      %768 = vmatpush1.bf16.msra.mxu0 %v590
      %769 = vmatprep.subr.bf16.mxu0 0
      %770 = vmatpush1.bf16.msra.mxu0 %v589
      %771 = vmatprep.subr.bf16.mxu0 0
      %772 = vmatpush1.bf16.msra.mxu0 %v588
      %773 = vmatprep.subr.bf16.mxu0 0
      %774 = vmatpush1.bf16.msra.mxu0 %v587
      %775 = vmatprep.subr.bf16.mxu0 0
      %776 = vmatpush1.bf16.msra.mxu0 %v586
      %777 = vmatprep.subr.bf16.mxu0 0
      %778 = vmatpush1.bf16.msra.mxu0 %v585
      %779 = vmatprep.subr.bf16.mxu0 0
      %780 = vmatpush2.bf16.msra.mxu0 0
      %781 = vmatprep.subr.bf16.mxu0 0
      %782 = vmatpush2.bf16.msra.mxu0 0
      %783 = vmatprep.subr.bf16.mxu0 0
      %784 = vmatpush2.bf16.msra.mxu0 0
      %785 = vmatprep.subr.bf16.mxu0 0
      %786 = vmatpush2.bf16.msra.mxu0 0
      %787 = vmatprep.subr.bf16.mxu0 0
      %788 = vmatpush2.bf16.msra.mxu0 0
      %789 = vmatprep.subr.bf16.mxu0 0
      %790 = vmatpush2.bf16.msra.mxu0 0
      %791 = vmatprep.subr.bf16.mxu0 0
      %792 = vmatpush2.bf16.msra.mxu0 0
      %793 = vmatprep.subr.bf16.mxu0 0
      %794 = vmatpush2.bf16.msra.mxu0 0
      %795 = vmatprep.mubr.bf16.mxu0 0
      %796 = vmatmul.mubr.bf16.gmra.mxu0 %v357
      %v797 = vpop.f32.mrf.mxu0
      %v798 = vadd.f32 %v733, %v797
      %v799 = vpop.f32.mrf.mxu0
      %v800 = vpop.f32.mrf.mxu0
      %v801 = vadd.f32 %v736, %v800
      %v802 = vpop.f32.mrf.mxu0
      %803 = vmatprep.mubr.bf16.mxu0 0
      %804 = vmatmul.mubr.bf16.gmra.mxu0 %v362
      %v805 = vpop.f32.mrf.mxu0
      %v806 = vadd.f32 %v741, %v805
      %v807 = vpop.f32.mrf.mxu0
      %v808 = vpop.f32.mrf.mxu0
      %v809 = vadd.f32 %v744, %v808
      %v810 = vpop.f32.mrf.mxu0
      %811 = vmatprep.mubr.bf16.mxu0 0
      %812 = vmatmul.mubr.bf16.gmra.mxu0 %v367
      %v813 = vpop.f32.mrf.mxu0
      %v814 = vadd.f32 %v749, %v813
      %v815 = vpop.f32.mrf.mxu0
      %v816 = vpop.f32.mrf.mxu0
      %v817 = vadd.f32 %v752, %v816
      %v818 = vpop.f32.mrf.mxu0
      %819 = vmatprep.mubr.bf16.mxu0 0
      %820 = vmatmul.mubr.bf16.gmra.mxu0 %v372
      %v821 = vpop.f32.mrf.mxu0
      %v822 = vadd.f32 %v757, %v821
      %v823 = vpop.f32.mrf.mxu0
      %v824 = vpop.f32.mrf.mxu0
      %v825 = vadd.f32 %v760, %v824
      %v826 = vpop.f32.mrf.mxu0
      %827 = vdwg.mxu0
      %v828 = vlaneseq
      %v829 = vand.u32 %v828, 127
      %vm830 = vcmp.ge.s32.totalorder %v829, 27
      %vm831 = vcmp.lt.s32.totalorder %v829, 51
      %vm832 = vmand %vm830, %vm831
      %v833 = vtanh.pop %v798
      %v834 = vtanh.pop %v801
      %v835 = vtanh.pop %v806
      %v836 = vtanh.pop %v809
      %v837 = vtanh.pop %v814
      %v838 = vtanh.pop %v817
      %v839 = vtanh.pop %v822
      %v840 = vtanh.pop %v825
      %v841 = vsel %vm832, %v833, %v798
      %v842 = vsel %vm832, %v834, %v801
      %v843 = vsel %vm832, %v835, %v806
      %v844 = vsel %vm832, %v836, %v809
      %v845 = vsel %vm832, %v837, %v814
      %v846 = vsel %vm832, %v838, %v817
      %v847 = vsel %vm832, %v839, %v822
      %v848 = vsel %vm832, %v840, %v825
      %vm849 = vcmp.ge.s32.totalorder %v829, 51
      %vm850 = vcmp.lt.s32.totalorder %v829, 83
      %vm851 = vmand %vm849, %vm850
      %v852 = vmax.f32 %v841, 0.0
      %v853 = vmax.f32 %v842, 0.0
      %v854 = vmax.f32 %v843, 0.0
      %v855 = vmax.f32 %v844, 0.0
      %v856 = vmax.f32 %v845, 0.0
      %v857 = vmax.f32 %v846, 0.0
      %v858 = vmax.f32 %v847, 0.0
      %v859 = vmax.f32 %v848, 0.0
      %v860 = vsel %vm851, %v852, %v841
      %v861 = vsel %vm851, %v853, %v842
      %v862 = vsel %vm851, %v854, %v843
      %v863 = vsel %vm851, %v855, %v844
      %v864 = vsel %vm851, %v856, %v845
      %v865 = vsel %vm851, %v857, %v846
      %v866 = vsel %vm851, %v858, %v847
      %v867 = vsel %vm851, %v859, %v848
      %868 = vst [vmem:[%s175] sm:$0xff] %v860
      %869 = vst [vmem:[%s175 + $0x8] sm:$0xff] %v861
      %870 = vst [vmem:[%s175 + $0x10] sm:$0xff] %v862
      %871 = vst [vmem:[%s175 + $0x18] sm:$0xff] %v863
      %872 = vst [vmem:[%s175 + $0x20] sm:$0xff] %v864
      %873 = vst [vmem:[%s175 + $0x28] sm:$0xff] %v865
      %874 = vst [vmem:[%s175 + $0x30] sm:$0xff] %v866
      %875 = vst [vmem:[%s175 + $0x38] sm:$0xff] %v867
      %s876 = smul.u32 8, %s14
      %p877 = scmp.lt.s32.totalorder %s876, 15
      %s878 = scalar_select %p877, %s876, 15
      %s879 = smul.addr %s878, 8
      %s880 = scalar_lea.vmem %s3, %s879
      // Predicated region
      $region33: #{yolact_wrapper_forward.9} parent=31 // pred_check
        %p881 = pneg %p100
      $region34: #{yolact_wrapper_forward.9} parent=31 // pred_check_branch
        %883 = sbr.rel (%p881) target = $region36
      $region35: #{yolact_wrapper_forward.9} parent=31 // pred_region
        %s884 = smul.u32 8, %s14
      $region36: #{yolact_wrapper_forward.9} parent=31 // pred_fallthru
        _
    $region32: #{yolact_wrapper_forward.9} parent=5 // pred_fallthru
      _
    %p885 = scmp.le.s32.totalorder 2, %s9
    // Predicated region
    $region37: #{yolact_wrapper_forward.9} parent=5 // pred_check
      %p886 = pneg %p885
    $region38: #{yolact_wrapper_forward.9} parent=5 // pred_check_branch
      %888 = sbr.rel (%p886) target = $region40
    $region39: #{yolact_wrapper_forward.9} parent=5 // pred_region
      %s889 = ssub.s32 %s9, 2
      // Predicated region
      $region41: #{yolact_wrapper_forward.9} parent=39 // pred_check
        %p890 = pneg %p106
      $region42: #{yolact_wrapper_forward.9} parent=39 // pred_check_branch
        %892 = sbr.rel (%p890) target = $region44
      $region43: #{yolact_wrapper_forward.9} parent=39 // pred_region
        %s893 = smul.u32 8, %s15
        %p894 = scmp.lt.s32.totalorder %s893, 15
        %s895 = scalar_select %p894, %s893, 15
        %s896 = smul.addr %s895, 8
        %s897 = scalar_lea.vmem %s3, %s896
      $region44: #{yolact_wrapper_forward.9} parent=39 // pred_fallthru
        _
    $region40: #{yolact_wrapper_forward.9} parent=5 // pred_fallthru
      _
  $region6: #{yolact_wrapper_forward.9} parent=0 // loop_footer
    %s13 = sadd.s32 1, %s9
  $region7: #{yolact_wrapper_forward.9} parent=0 // loop_footer_branch
    %8 = sbr.rel target = $region3
  $region8: #{yolact_wrapper_forward.9} parent=0 // loop_exit
    _

// kernel: yolact_wrapper_forward.11
$region0: #{yolact_wrapper_forward.11}
  #allocation0 [shape = 'u32[]', space=smem, size = 0x4, offset = 0x4, fixed_abs, tag = 'smem constant byte address 0x4 - core index']
  #allocation1 [shape = 'u32[144,128]{1,0:T(1,128)}', space=vmem, size = 0x12000, scoped, tag = 'internal scratch']
  %s0 = inlined_call_operand.vmem [shape: f32[5,192], index: 0, kind: input, shape index: {}]
  %s1 = inlined_call_operand.vmem [shape: f32[1,192], index: 1, kind: output, shape index: {0}]
  %s2 = inlined_call_operand.vmem [shape: s32[1,192], index: 2, kind: output, shape index: {1}]
  %3 = xla_tuple %s1, %s2
  %s4 = sld [smem:[#allocation0]]
  $region22: #{yolact_wrapper_forward.11} parent=0
    _
  %s6 = ssub.s32 1, %s4
  %s7 = scalar_select 0, %s6, %s4
  // Predicated region
  $region2: #{yolact_wrapper_forward.11} parent=0 // pred_check
    _
  $region3: #{yolact_wrapper_forward.11} parent=0 // pred_check_branch
    %9 = sbr.rel (0) target = $region5
  $region4: #{yolact_wrapper_forward.11} parent=0 // pred_region
    _
  $region5: #{yolact_wrapper_forward.11} parent=0 // pred_fallthru
    _
  %v10 = vld [vmem:[%s0] sm:$0x1f]
  %v11 = vld [vmem:[%s0 + $0x8] sm:$0x1f]
  %vm12 = vcmask 1044480
  %v13 = vsel %vm12, %v10, -inf
  %v14 = vrot.slane %v13, 4
  %v15 = vmax.f32 %v13, %v14
  %v16 = vrot.slane %v15, 2
  %v17 = vmax.f32 %v15, %v16
  %v18 = vrot.slane %v17, 1
  %v19 = vmax.f32 %v17, %v18
  %vm20 = vcmask 520192
  %v21 = vsel %vm20, %v11, -inf
  %v22 = vrot.slane %v21, 4
  %v23 = vmax.f32 %v21, %v22
  %v24 = vrot.slane %v23, 2
  %v25 = vmax.f32 %v23, %v24
  %v26 = vrot.slane %v25, 1
  %v27 = vmax.f32 %v25, %v26
  %v28 = vsub.f32 %v10, %v19
  %v29 = vsub.f32 %v11, %v27
  %v30 = vmul.f32 %v28, 1.442695
  %v31 = vpow.pop %v30
  %v32 = vmul.f32 %v29, 1.442695
  %v33 = vpow.pop %v32
  %v34 = vsel %vm12, %v31, 0.0
  %v35 = vrot.slane %v34, 4
  %v36 = vadd.f32 %v34, %v35
  %v37 = vrot.slane %v36, 2
  %v38 = vadd.f32 %v36, %v37
  %v39 = vrot.slane %v38, 1
  %v40 = vadd.f32 %v38, %v39
  %v41 = vsel %vm20, %v33, 0.0
  %v42 = vrot.slane %v41, 4
  %v43 = vadd.f32 %v41, %v42
  %v44 = vrot.slane %v43, 2
  %v45 = vadd.f32 %v43, %v44
  %v46 = vrot.slane %v45, 1
  %v47 = vadd.f32 %v45, %v46
  %v50 = vrot.slane %v10, 7
  %v51 = vrot.slane %v11, 7
  %vm54 = vcmp.gt.f32.partialorder %v10, %v50
  %vm55 = vcmp.gt.f32.partialorder %v11, %v51
  %v56 = vsel %vm54, %v10, %v50
  %v57 = vsel %vm55, %v11, %v51
  %v58 = vsel %vm54, 1, 0
  %v59 = vsel %vm55, 1, 0
  %v62 = vrot.slane %v56, 7
  %v63 = vrot.slane %v57, 7
  %vm66 = vcmp.gt.f32.partialorder %v10, %v62
  %vm67 = vcmp.gt.f32.partialorder %v11, %v63
  %v68 = vsel %vm66, %v10, %v62
  %v69 = vsel %vm67, %v11, %v63
  %v70 = vrot.slane %v58, 7
  %v71 = vrot.slane %v59, 7
  %v72 = vsel %vm66, 2, %v70
  %v73 = vsel %vm67, 2, %v71
  %v76 = vrot.slane %v68, 7
  %v77 = vrot.slane %v69, 7
  %vm80 = vcmp.gt.f32.partialorder %v10, %v76
  %vm81 = vcmp.gt.f32.partialorder %v11, %v77
  %v82 = vsel %vm80, %v10, %v76
  %v83 = vsel %vm81, %v11, %v77
  %v84 = vrot.slane %v72, 7
  %v85 = vrot.slane %v73, 7
  %v86 = vsel %vm80, 3, %v84
  %v87 = vsel %vm81, 3, %v85
  %v88 = vsub.f32 %v82, %v19
  %v89 = vsub.f32 %v83, %v27
  %v90 = vmul.f32 %v88, 1.442695
  %v91 = vpow.pop %v90
  %v92 = vmul.f32 %v89, 1.442695
  %v93 = vpow.pop %v92
  %v94 = vrcp.pop %v40
  %v95 = vmul.f32 %v91, %v94
  %v96 = vrcp.pop %v47
  %v97 = vmul.f32 %v93, %v96
  %v100 = vcombine.high %v95, %v97
  %v102 = vunpack.c.l.s4 1966171168
  %v103 = vunpack.c.0.s8 %v102
  %v104 = vlaneseq
  %v105 = vshrl.u32 %v104, 7
  %v106 = vsub.s32 %v103, %v105
  %v107 = vrot.slane %v100, %v106
  %v109 = vunpack.c.l.s4 1966171168
  %v110 = vunpack.c.0.s8 %v109
  %v111 = vlaneseq
  %v112 = vshrl.u32 %v111, 7
  %v113 = vsub.s32 %v110, %v112
  %v114 = vrot.slane %v107, %v113
  %v116 = vlaneseq
  %vm117 = vcmp.ge.s32.totalorder %v116, 0
  %vm118 = vcmp.lt.s32.totalorder %v116, 192
  %vm119 = vmand %vm117, %vm118
  %120 = vst.msk [vmem:[%s1] sm:$0x3] %vm119, %v114
  %v121 = vcombine.high %v86, %v87
  %v123 = vunpack.c.l.s4 1966171168
  %v124 = vunpack.c.0.s8 %v123
  %v125 = vlaneseq
  %v126 = vshrl.u32 %v125, 7
  %v127 = vsub.s32 %v124, %v126
  %v128 = vrot.slane %v121, %v127
  %v130 = vunpack.c.l.s4 1966171168
  %v131 = vunpack.c.0.s8 %v130
  %v132 = vlaneseq
  %v133 = vshrl.u32 %v132, 7
  %v134 = vsub.s32 %v131, %v133
  %v135 = vrot.slane %v128, %v134
  %136 = vst.msk [vmem:[%s2] sm:$0x3] %vm119, %v135
  // Predicated region
  $region6: #{yolact_wrapper_forward.11} parent=0 // pred_check
    _
  $region7: #{yolact_wrapper_forward.11} parent=0 // pred_check_branch
    %138 = sbr.rel (0) target = $region9
  $region8: #{yolact_wrapper_forward.11} parent=0 // pred_region
    _
  $region9: #{yolact_wrapper_forward.11} parent=0 // pred_fallthru
    _
  // Predicated region
  $region10: #{yolact_wrapper_forward.11} parent=0 // pred_check
    _
  $region11: #{yolact_wrapper_forward.11} parent=0 // pred_check_branch
    %140 = sbr.rel (0) target = $region13
  $region12: #{yolact_wrapper_forward.11} parent=0 // pred_region
    _
  $region13: #{yolact_wrapper_forward.11} parent=0 // pred_fallthru
    _
  // Predicated region
  $region14: #{yolact_wrapper_forward.11} parent=0 // pred_check
    _
  $region15: #{yolact_wrapper_forward.11} parent=0 // pred_check_branch
    %142 = sbr.rel (0) target = $region17
  $region16: #{yolact_wrapper_forward.11} parent=0 // pred_region
    _
  $region17: #{yolact_wrapper_forward.11} parent=0 // pred_fallthru
    _
  // Predicated region
  $region18: #{yolact_wrapper_forward.11} parent=0 // pred_check
    _
  $region19: #{yolact_wrapper_forward.11} parent=0 // pred_check_branch
    %144 = sbr.rel (0) target = $region21
  $region20: #{yolact_wrapper_forward.11} parent=0 // pred_region
    _
  $region21: #{yolact_wrapper_forward.11} parent=0 // pred_fallthru
    _

// kernel: yolact_wrapper_forward.10
$region0: #{yolact_wrapper_forward.10}
  #allocation0 [shape = 'u32[]', space=smem, size = 0x4, offset = 0x4, fixed_abs, tag = 'smem constant byte address 0x4 - core index']
  #allocation1 [shape = 'u32[144,128]{1,0:T(1,128)}', space=vmem, size = 0x12000, scoped, tag = 'internal scratch']
  %s0 = inlined_call_operand.vmem [shape: bf16[512,384], index: 0, kind: input, shape index: {}]
  %s1 = inlined_call_operand.vmem [shape: bf16[384,128], index: 1, kind: input, shape index: {}]
  %s2 = inlined_call_operand.vmem [shape: f32[1,128], index: 2, kind: input, shape index: {}]
  %s3 = inlined_call_operand.vmem [shape: f32[512,128], index: 3, kind: output, shape index: {}]
  %s4 = sld [smem:[#allocation0]]
  $region45: #{yolact_wrapper_forward.10} parent=0
    _
  %s6 = ssub.s32 1, %s4
  %s7 = scalar_select 0, %s6, %s4
  loop: start=0, step=1, limit=4
  $region2: #{yolact_wrapper_forward.10} parent=0 // loop_pre_header
    _
  $region3: #{yolact_wrapper_forward.10} parent=0 // loop_header
    %s9 = sphi 0, %s13
    %p10 = scmp.ge.s32.totalorder %s9, 4
    %s19 = sphi 0, %s21
    %s22 = sphi 0, %s19
    %s23 = sphi 0, %s22
    %s39 = sphi 0, %s23
    %s43 = sphi 0, %s43
    %s45 = sphi 0, %s43
    %s46 = sphi 0, %s45
    %s60 = sphi 0, %s46
    %s64 = sphi 0, %s64
    %s66 = sphi 0, %s64
    %s67 = sphi 0, %s66
    %s81 = sphi 0, %s67
    %s87 = sphi 0, %s89
    %s90 = sphi 0, %s87
    %s91 = sphi 0, %s90
    %s107 = sphi 0, %s91
  $region4: #{yolact_wrapper_forward.10} parent=0 // loop_header_branch
    %12 = sbr.rel (%p10) target = $region8
  $region5: #{yolact_wrapper_forward.10} parent=0 // loop_body
    %s14 = ssub.s32 %s9, 1
    %s15 = ssub.s32 %s9, 2
    %s16 = sadd.s32 %s9, 1
    %s17 = ssub.s32 %s9, %s16
    %p18 = scmp.eq.s32.totalorder %s17, 0
    %s20 = sadd.s32 %s19, 1
    %s21 = scalar_select %p18, %s19, %s20
    %p24 = pneg %p18
    %p25 = scmp.eq.s32.totalorder %s9, 1
    %p26 = por %p24, %p25
    %p27 = scmp.ne.s32.totalorder %s19, %s22
    %p28 = scmp.eq.s32.totalorder %s9, 0
    %p29 = por %p27, %p28
    %p30 = scmp.ne.s32.totalorder %s19, %s22
    %p31 = scmp.eq.s32.totalorder %s14, 1
    %p32 = por %p30, %p31
    %p33 = scmp.ne.s32.totalorder %s22, %s23
    %p34 = scmp.eq.s32.totalorder %s14, 0
    %p35 = por %p33, %p34
    %p36 = scmp.ne.s32.totalorder %s22, %s23
    %p37 = scmp.eq.s32.totalorder %s15, 1
    %p38 = por %p36, %p37
    %p40 = scmp.ne.s32.totalorder %s23, %s39
    %p41 = scmp.eq.s32.totalorder %s15, 0
    %p42 = por %p40, %p41
    %s44 = sadd.s32 %s43, 1
    %p47 = scmp.eq.s32.totalorder %s9, 1
    %p48 = scmp.ne.s32.totalorder %s43, %s45
    %p49 = scmp.eq.s32.totalorder %s9, 0
    %p50 = por %p48, %p49
    %p51 = scmp.ne.s32.totalorder %s43, %s45
    %p52 = scmp.eq.s32.totalorder %s14, 1
    %p53 = por %p51, %p52
    %p54 = scmp.ne.s32.totalorder %s45, %s46
    %p55 = scmp.eq.s32.totalorder %s14, 0
    %p56 = por %p54, %p55
    %p57 = scmp.ne.s32.totalorder %s45, %s46
    %p58 = scmp.eq.s32.totalorder %s15, 1
    %p59 = por %p57, %p58
    %p61 = scmp.ne.s32.totalorder %s46, %s60
    %p62 = scmp.eq.s32.totalorder %s15, 0
    %p63 = por %p61, %p62
    %s65 = sadd.s32 %s64, 1
    %p68 = scmp.eq.s32.totalorder %s9, 1
    %p69 = scmp.ne.s32.totalorder %s64, %s66
    %p70 = scmp.eq.s32.totalorder %s9, 0
    %p71 = por %p69, %p70
    %p72 = scmp.ne.s32.totalorder %s64, %s66
    %p73 = scmp.eq.s32.totalorder %s14, 1
    %p74 = por %p72, %p73
    %p75 = scmp.ne.s32.totalorder %s66, %s67
    %p76 = scmp.eq.s32.totalorder %s14, 0
    %p77 = por %p75, %p76
    %p78 = scmp.ne.s32.totalorder %s66, %s67
    %p79 = scmp.eq.s32.totalorder %s15, 1
    %p80 = por %p78, %p79
    %p82 = scmp.ne.s32.totalorder %s67, %s81
    %p83 = scmp.eq.s32.totalorder %s15, 0
    %p84 = por %p82, %p83
    %s85 = ssub.s32 %s9, %s16
    %p86 = scmp.eq.s32.totalorder %s85, 0
    %s88 = sadd.s32 %s87, 1
    %s89 = scalar_select %p86, %s87, %s88
    %p92 = pneg %p86
    %p93 = scmp.eq.s32.totalorder %s9, 1
    %p94 = por %p92, %p93
    %p95 = scmp.ne.s32.totalorder %s87, %s90
    %p96 = scmp.eq.s32.totalorder %s9, 0
    %p97 = por %p95, %p96
    %p98 = scmp.ne.s32.totalorder %s87, %s90
    %p99 = scmp.eq.s32.totalorder %s14, 1
    %p100 = por %p98, %p99
    %p101 = scmp.ne.s32.totalorder %s90, %s91
    %p102 = scmp.eq.s32.totalorder %s14, 0
    %p103 = por %p101, %p102
    %p104 = scmp.ne.s32.totalorder %s90, %s91
    %p105 = scmp.eq.s32.totalorder %s15, 1
    %p106 = por %p104, %p105
    %p108 = scmp.ne.s32.totalorder %s91, %s107
    %p109 = scmp.eq.s32.totalorder %s15, 0
    %p110 = por %p108, %p109
    %p111 = scmp.le.s32.totalorder 1, %s9
    %p112 = scmp.lt.s32.totalorder %s9, 3
    %p113 = pnand %p111, %p112
    %p114 = pneg %p113
    // Predicated region
    $region9: #{yolact_wrapper_forward.10} parent=5 // pred_check
      _
    $region10: #{yolact_wrapper_forward.10} parent=5 // pred_check_branch
      %116 = sbr.rel (%p113) target = $region12
    $region11: #{yolact_wrapper_forward.10} parent=5 // pred_region
      %s117 = ssub.s32 %s9, 1
      // Predicated region
      $region13: #{yolact_wrapper_forward.10} parent=11 // pred_check
        %p118 = pneg %p56
      $region14: #{yolact_wrapper_forward.10} parent=11 // pred_check_branch
        %120 = sbr.rel (%p118) target = $region16
      $region15: #{yolact_wrapper_forward.10} parent=11 // pred_region
        _
      $region16: #{yolact_wrapper_forward.10} parent=11 // pred_fallthru
        _
      // Predicated region
      $region17: #{yolact_wrapper_forward.10} parent=11 // pred_check
        %p121 = pneg %p77
      $region18: #{yolact_wrapper_forward.10} parent=11 // pred_check_branch
        %123 = sbr.rel (%p121) target = $region20
      $region19: #{yolact_wrapper_forward.10} parent=11 // pred_region
        _
      $region20: #{yolact_wrapper_forward.10} parent=11 // pred_fallthru
        _
    $region12: #{yolact_wrapper_forward.10} parent=5 // pred_fallthru
      _
    %p124 = scmp.lt.s32.totalorder %s9, 2
    // Predicated region
    $region21: #{yolact_wrapper_forward.10} parent=5 // pred_check
      %p125 = pneg %p124
    $region22: #{yolact_wrapper_forward.10} parent=5 // pred_check_branch
      %127 = sbr.rel (%p125) target = $region24
    $region23: #{yolact_wrapper_forward.10} parent=5 // pred_region
      // Predicated region
      $region25: #{yolact_wrapper_forward.10} parent=23 // pred_check
        %p128 = pneg %p29
      $region26: #{yolact_wrapper_forward.10} parent=23 // pred_check_branch
        %130 = sbr.rel (%p128) target = $region28
      $region27: #{yolact_wrapper_forward.10} parent=23 // pred_region
        %s131 = smul.u32 32, %s9
        %p132 = scmp.lt.s32.totalorder %s131, 63
        %s133 = scalar_select %p132, %s131, 63
        %s134 = smul.addr %s133, 3
        %s135 = smul.addr %s134, 4
        %s136 = scalar_lea.vmem %s0, %s135
        %s137 = smul.u32 32, %s9
      $region28: #{yolact_wrapper_forward.10} parent=23 // pred_fallthru
        _
    $region24: #{yolact_wrapper_forward.10} parent=5 // pred_fallthru
      _
    %p138 = scmp.le.s32.totalorder 1, %s9
    %p139 = scmp.lt.s32.totalorder %s9, 3
    %p140 = pnand %p138, %p139
    %p141 = pneg %p140
    // Predicated region
    $region29: #{yolact_wrapper_forward.10} parent=5 // pred_check
      _
    $region30: #{yolact_wrapper_forward.10} parent=5 // pred_check_branch
      %143 = sbr.rel (%p140) target = $region32
    $region31: #{yolact_wrapper_forward.10} parent=5 // pred_region
      %s144 = ssub.s32 %s9, 1
      %s145 = smul.u32 32, %s14
      %p146 = scmp.lt.s32.totalorder %s145, 63
      %s147 = scalar_select %p146, %s145, 63
      %s148 = smul.addr %s147, 3
      %s149 = smul.addr %s148, 4
      %s150 = scalar_lea.vmem %s0, %s149
      %p151 = pneg %p35
      %p152 = pneg %p32
      %p153 = pneg %p56
      %p154 = pneg %p53
      %p155 = pneg %p77
      %p156 = pneg %p74
      %p157 = pneg %p103
      %p158 = pneg %p100
      %s159 = smul.u32 32, %s14
      %p160 = scmp.lt.s32.totalorder %s159, 63
      %s161 = scalar_select %p160, %s159, 63
      %s162 = smul.addr %s161, 8
      %s163 = scalar_lea.vmem %s3, %s162
      %s164 = smul.u32 32, %s14
      %p165 = scmp.lt.s32.totalorder %s164, 63
      %s166 = scalar_select %p165, %s164, 63
      %s167 = smul.addr %s166, 3
      %s168 = smul.addr %s167, 4
      %s169 = scalar_lea.vmem %s0, %s168
      %s170 = smul.u32 32, %s14
      %s171 = smul.u32 32, %s14
      %p172 = scmp.lt.s32.totalorder %s171, 63
      %s173 = scalar_select %p172, %s171, 63
      %s174 = smul.addr %s173, 8
      %s175 = scalar_lea.vmem %s3, %s174
      %s176 = smul.u32 32, %s14
      %v178 = vld [vmem:[%s169] sm:$0xff]
      %v179 = vld [vmem:[%s169 + $0x8] sm:$0xf]
      %v180 = vld [vmem:[%s169 + $0xc] sm:$0xff]
      %v181 = vld [vmem:[%s169 + $0x14] sm:$0xf]
      %v182 = vld [vmem:[%s169 + $0x18] sm:$0xff]
      %v183 = vld [vmem:[%s169 + $0x20] sm:$0xf]
      %v184 = vld [vmem:[%s169 + $0x24] sm:$0xff]
      %v185 = vld [vmem:[%s169 + $0x2c] sm:$0xf]
      %v186 = vld [vmem:[%s169 + $0x30] sm:$0xff]
      %v187 = vld [vmem:[%s169 + $0x38] sm:$0xf]
      %v188 = vld [vmem:[%s169 + $0x3c] sm:$0xff]
      %v189 = vld [vmem:[%s169 + $0x44] sm:$0xf]
      %v190 = vld [vmem:[%s169 + $0x48] sm:$0xff]
      %v191 = vld [vmem:[%s169 + $0x50] sm:$0xf]
      %v192 = vld [vmem:[%s169 + $0x54] sm:$0xff]
      %v193 = vld [vmem:[%s169 + $0x5c] sm:$0xf]
      %v194 = vld [vmem:[%s169 + $0x60] sm:$0xff]
      %v195 = vld [vmem:[%s169 + $0x68] sm:$0xf]
      %v196 = vld [vmem:[%s169 + $0x6c] sm:$0xff]
      %v197 = vld [vmem:[%s169 + $0x74] sm:$0xf]
      %v198 = vld [vmem:[%s169 + $0x78] sm:$0xff]
      %v199 = vld [vmem:[%s169 + $0x80] sm:$0xf]
      %v200 = vld [vmem:[%s169 + $0x84] sm:$0xff]
      %v201 = vld [vmem:[%s169 + $0x8c] sm:$0xf]
      %v202 = vld [vmem:[%s169 + $0x90] sm:$0xff]
      %v203 = vld [vmem:[%s169 + $0x98] sm:$0xf]
      %v204 = vld [vmem:[%s169 + $0x9c] sm:$0xff]
      %v205 = vld [vmem:[%s169 + $0xa4] sm:$0xf]
      %v206 = vld [vmem:[%s169 + $0xa8] sm:$0xff]
      %v207 = vld [vmem:[%s169 + $0xb0] sm:$0xf]
      %v208 = vld [vmem:[%s169 + $0xb4] sm:$0xff]
      %v209 = vld [vmem:[%s169 + $0xbc] sm:$0xf]
      %v210 = vld [vmem:[%s169 + $0xc0] sm:$0xff]
      %v211 = vld [vmem:[%s169 + $0xc8] sm:$0xf]
      %v212 = vld [vmem:[%s169 + $0xcc] sm:$0xff]
      %v213 = vld [vmem:[%s169 + $0xd4] sm:$0xf]
      %v214 = vld [vmem:[%s169 + $0xd8] sm:$0xff]
      %v215 = vld [vmem:[%s169 + $0xe0] sm:$0xf]
      %v216 = vld [vmem:[%s169 + $0xe4] sm:$0xff]
      %v217 = vld [vmem:[%s169 + $0xec] sm:$0xf]
      %v218 = vld [vmem:[%s169 + $0xf0] sm:$0xff]
      %v219 = vld [vmem:[%s169 + $0xf8] sm:$0xf]
      %v220 = vld [vmem:[%s169 + $0xfc] sm:$0xff]
      %v221 = vld [vmem:[%s169 + $0x104] sm:$0xf]
      %v222 = vld [vmem:[%s169 + $0x108] sm:$0xff]
      %v223 = vld [vmem:[%s169 + $0x110] sm:$0xf]
      %v224 = vld [vmem:[%s169 + $0x114] sm:$0xff]
      %v225 = vld [vmem:[%s169 + $0x11c] sm:$0xf]
      %v226 = vld [vmem:[%s169 + $0x120] sm:$0xff]
      %v227 = vld [vmem:[%s169 + $0x128] sm:$0xf]
      %v228 = vld [vmem:[%s169 + $0x12c] sm:$0xff]
      %v229 = vld [vmem:[%s169 + $0x134] sm:$0xf]
      %v230 = vld [vmem:[%s169 + $0x138] sm:$0xff]
      %v231 = vld [vmem:[%s169 + $0x140] sm:$0xf]
      %v232 = vld [vmem:[%s169 + $0x144] sm:$0xff]
      %v233 = vld [vmem:[%s169 + $0x14c] sm:$0xf]
      %v234 = vld [vmem:[%s169 + $0x150] sm:$0xff]
      %v235 = vld [vmem:[%s169 + $0x158] sm:$0xf]
      %v236 = vld [vmem:[%s169 + $0x15c] sm:$0xff]
      %v237 = vld [vmem:[%s169 + $0x164] sm:$0xf]
      %v238 = vld [vmem:[%s169 + $0x168] sm:$0xff]
      %v239 = vld [vmem:[%s169 + $0x170] sm:$0xf]
      %v240 = vld [vmem:[%s169 + $0x174] sm:$0xff]
      %v241 = vld [vmem:[%s169 + $0x17c] sm:$0xf]
      %v242 = vld [vmem:[%s1] sm:$0xf]
      %v243 = vld [vmem:[%s1 + $0x4] sm:$0xf]
      %v244 = vld [vmem:[%s1 + $0x8] sm:$0xf]
      %v245 = vld [vmem:[%s1 + $0xc] sm:$0xf]
      %v246 = vld [vmem:[%s1 + $0x10] sm:$0xf]
      %v247 = vld [vmem:[%s1 + $0x14] sm:$0xf]
      %v248 = vld [vmem:[%s1 + $0x18] sm:$0xf]
      %v249 = vld [vmem:[%s1 + $0x1c] sm:$0xf]
      %v250 = vld [vmem:[%s1 + $0x20] sm:$0xf]
      %v251 = vld [vmem:[%s1 + $0x24] sm:$0xf]
      %v252 = vld [vmem:[%s1 + $0x28] sm:$0xf]
      %v253 = vld [vmem:[%s1 + $0x2c] sm:$0xf]
      %v254 = vld [vmem:[%s1 + $0x30] sm:$0xf]
      %v255 = vld [vmem:[%s1 + $0x34] sm:$0xf]
      %v256 = vld [vmem:[%s1 + $0x38] sm:$0xf]
      %v257 = vld [vmem:[%s1 + $0x3c] sm:$0xf]
      %v258 = vld [vmem:[%s1 + $0x40] sm:$0xf]
      %v259 = vld [vmem:[%s1 + $0x44] sm:$0xf]
      %v260 = vld [vmem:[%s1 + $0x48] sm:$0xf]
      %v261 = vld [vmem:[%s1 + $0x4c] sm:$0xf]
      %v262 = vld [vmem:[%s1 + $0x50] sm:$0xf]
      %v263 = vld [vmem:[%s1 + $0x54] sm:$0xf]
      %v264 = vld [vmem:[%s1 + $0x58] sm:$0xf]
      %v265 = vld [vmem:[%s1 + $0x5c] sm:$0xf]
      %v266 = vld [vmem:[%s1 + $0x60] sm:$0xf]
      %v267 = vld [vmem:[%s1 + $0x64] sm:$0xf]
      %v268 = vld [vmem:[%s1 + $0x68] sm:$0xf]
      %v269 = vld [vmem:[%s1 + $0x6c] sm:$0xf]
      %v270 = vld [vmem:[%s1 + $0x70] sm:$0xf]
      %v271 = vld [vmem:[%s1 + $0x74] sm:$0xf]
      %v272 = vld [vmem:[%s1 + $0x78] sm:$0xf]
      %v273 = vld [vmem:[%s1 + $0x7c] sm:$0xf]
      %v274 = vld [vmem:[%s1 + $0x80] sm:$0xf]
      %v275 = vld [vmem:[%s1 + $0x84] sm:$0xf]
      %v276 = vld [vmem:[%s1 + $0x88] sm:$0xf]
      %v277 = vld [vmem:[%s1 + $0x8c] sm:$0xf]
      %v278 = vld [vmem:[%s1 + $0x90] sm:$0xf]
      %v279 = vld [vmem:[%s1 + $0x94] sm:$0xf]
      %v280 = vld [vmem:[%s1 + $0x98] sm:$0xf]
      %v281 = vld [vmem:[%s1 + $0x9c] sm:$0xf]
      %v282 = vld [vmem:[%s1 + $0xa0] sm:$0xf]
      %v283 = vld [vmem:[%s1 + $0xa4] sm:$0xf]
      %v284 = vld [vmem:[%s1 + $0xa8] sm:$0xf]
      %v285 = vld [vmem:[%s1 + $0xac] sm:$0xf]
      %v286 = vld [vmem:[%s1 + $0xb0] sm:$0xf]
      %v287 = vld [vmem:[%s1 + $0xb4] sm:$0xf]
      %v288 = vld [vmem:[%s1 + $0xb8] sm:$0xf]
      %v289 = vld [vmem:[%s1 + $0xbc] sm:$0xf]
      %v290 = vld [vmem:[%s2] sm:$0x1]
      %v292 = vlaneseq
      %v293 = vshrl.u32 %v292, 7
      %v294 = vsub.s32 0, %v293
      %v295 = vrot.slane %v290, %v294
      %v361 = vunpack.c.l.b16 %v178
      %v362 = vunpack.c.h.b16 %v178
      %v363 = vunpack.c.l.b16 %v179
      %v364 = vunpack.c.l.b16 %v180
      %v365 = vunpack.c.h.b16 %v180
      %v366 = vunpack.c.l.b16 %v181
      %v367 = vunpack.c.l.b16 %v182
      %v368 = vunpack.c.h.b16 %v182
      %v369 = vunpack.c.l.b16 %v183
      %v370 = vunpack.c.l.b16 %v184
      %v371 = vunpack.c.h.b16 %v184
      %v372 = vunpack.c.l.b16 %v185
      %v373 = vunpack.c.l.b16 %v186
      %v374 = vunpack.c.h.b16 %v186
      %v375 = vunpack.c.l.b16 %v187
      %v376 = vunpack.c.l.b16 %v188
      %v377 = vunpack.c.h.b16 %v188
      %v378 = vunpack.c.l.b16 %v189
      %v379 = vunpack.c.l.b16 %v190
      %v380 = vunpack.c.h.b16 %v190
      %v381 = vunpack.c.l.b16 %v191
      %v382 = vunpack.c.l.b16 %v192
      %v383 = vunpack.c.h.b16 %v192
      %v384 = vunpack.c.l.b16 %v193
      %v385 = vunpack.c.l.b16 %v194
      %v386 = vunpack.c.h.b16 %v194
      %v387 = vunpack.c.l.b16 %v195
      %v388 = vunpack.c.l.b16 %v196
      %v389 = vunpack.c.h.b16 %v196
      %v390 = vunpack.c.l.b16 %v197
      %v391 = vunpack.c.l.b16 %v198
      %v392 = vunpack.c.h.b16 %v198
      %v393 = vunpack.c.l.b16 %v199
      %v394 = vunpack.c.l.b16 %v200
      %v395 = vunpack.c.h.b16 %v200
      %v396 = vunpack.c.l.b16 %v201
      %v397 = vunpack.c.l.b16 %v202
      %v398 = vunpack.c.h.b16 %v202
      %v399 = vunpack.c.l.b16 %v203
      %v400 = vunpack.c.l.b16 %v204
      %v401 = vunpack.c.h.b16 %v204
      %v402 = vunpack.c.l.b16 %v205
      %v403 = vunpack.c.l.b16 %v206
      %v404 = vunpack.c.h.b16 %v206
      %v405 = vunpack.c.l.b16 %v207
      %v406 = vunpack.c.l.b16 %v208
      %v407 = vunpack.c.h.b16 %v208
      %v408 = vunpack.c.l.b16 %v209
      %v409 = vunpack.c.l.b16 %v210
      %v410 = vunpack.c.h.b16 %v210
      %v411 = vunpack.c.l.b16 %v211
      %v412 = vunpack.c.l.b16 %v212
      %v413 = vunpack.c.h.b16 %v212
      %v414 = vunpack.c.l.b16 %v213
      %v415 = vunpack.c.l.b16 %v214
      %v416 = vunpack.c.h.b16 %v214
      %v417 = vunpack.c.l.b16 %v215
      %v418 = vunpack.c.l.b16 %v216
      %v419 = vunpack.c.h.b16 %v216
      %v420 = vunpack.c.l.b16 %v217
      %v421 = vunpack.c.l.b16 %v218
      %v422 = vunpack.c.h.b16 %v218
      %v423 = vunpack.c.l.b16 %v219
      %v424 = vunpack.c.l.b16 %v220
      %v425 = vunpack.c.h.b16 %v220
      %v426 = vunpack.c.l.b16 %v221
      %v427 = vunpack.c.l.b16 %v222
      %v428 = vunpack.c.h.b16 %v222
      %v429 = vunpack.c.l.b16 %v223
      %v430 = vunpack.c.l.b16 %v224
      %v431 = vunpack.c.h.b16 %v224
      %v432 = vunpack.c.l.b16 %v225
      %v433 = vunpack.c.l.b16 %v226
      %v434 = vunpack.c.h.b16 %v226
      %v435 = vunpack.c.l.b16 %v227
      %v436 = vunpack.c.l.b16 %v228
      %v437 = vunpack.c.h.b16 %v228
      %v438 = vunpack.c.l.b16 %v229
      %v439 = vunpack.c.l.b16 %v230
      %v440 = vunpack.c.h.b16 %v230
      %v441 = vunpack.c.l.b16 %v231
      %v442 = vunpack.c.l.b16 %v232
      %v443 = vunpack.c.h.b16 %v232
      %v444 = vunpack.c.l.b16 %v233
      %v445 = vunpack.c.l.b16 %v234
      %v446 = vunpack.c.h.b16 %v234
      %v447 = vunpack.c.l.b16 %v235
      %v448 = vunpack.c.l.b16 %v236
      %v449 = vunpack.c.h.b16 %v236
      %v450 = vunpack.c.l.b16 %v237
      %v451 = vunpack.c.l.b16 %v238
      %v452 = vunpack.c.h.b16 %v238
      %v453 = vunpack.c.l.b16 %v239
      %v454 = vunpack.c.l.b16 %v240
      %v455 = vunpack.c.h.b16 %v240
      %v456 = vunpack.c.l.b16 %v241
      %v457 = vpack.c.b16 %v364, %v361
      %v458 = vpack.c.b16 %v365, %v362
      %v459 = vpack.c.b16 %v366, %v363
      %v460 = vpack.c.b16 %v370, %v367
      %v461 = vpack.c.b16 %v371, %v368
      %v462 = vpack.c.b16 %v372, %v369
      %v463 = vpack.c.b16 %v376, %v373
      %v464 = vpack.c.b16 %v377, %v374
      %v465 = vpack.c.b16 %v378, %v375
      %v466 = vpack.c.b16 %v382, %v379
      %v467 = vpack.c.b16 %v383, %v380
      %v468 = vpack.c.b16 %v384, %v381
      %v469 = vpack.c.b16 %v388, %v385
      %v470 = vpack.c.b16 %v389, %v386
      %v471 = vpack.c.b16 %v390, %v387
      %v472 = vpack.c.b16 %v394, %v391
      %v473 = vpack.c.b16 %v395, %v392
      %v474 = vpack.c.b16 %v396, %v393
      %v475 = vpack.c.b16 %v400, %v397
      %v476 = vpack.c.b16 %v401, %v398
      %v477 = vpack.c.b16 %v402, %v399
      %v478 = vpack.c.b16 %v406, %v403
      %v479 = vpack.c.b16 %v407, %v404
      %v480 = vpack.c.b16 %v408, %v405
      %v481 = vpack.c.b16 %v412, %v409
      %v482 = vpack.c.b16 %v413, %v410
      %v483 = vpack.c.b16 %v414, %v411
      %v484 = vpack.c.b16 %v418, %v415
      %v485 = vpack.c.b16 %v419, %v416
      %v486 = vpack.c.b16 %v420, %v417
      %v487 = vpack.c.b16 %v424, %v421
      %v488 = vpack.c.b16 %v425, %v422
      %v489 = vpack.c.b16 %v426, %v423
      %v490 = vpack.c.b16 %v430, %v427
      %v491 = vpack.c.b16 %v431, %v428
      %v492 = vpack.c.b16 %v432, %v429
      %v493 = vpack.c.b16 %v436, %v433
      %v494 = vpack.c.b16 %v437, %v434
      %v495 = vpack.c.b16 %v438, %v435
      %v496 = vpack.c.b16 %v442, %v439
      %v497 = vpack.c.b16 %v443, %v440
      %v498 = vpack.c.b16 %v444, %v441
      %v499 = vpack.c.b16 %v448, %v445
      %v500 = vpack.c.b16 %v449, %v446
      %v501 = vpack.c.b16 %v450, %v447
      %v502 = vpack.c.b16 %v454, %v451
      %v503 = vpack.c.b16 %v455, %v452
      %v504 = vpack.c.b16 %v456, %v453
      %v601 = vunpack.c.l.b16 %v242
      %v602 = vunpack.c.l.b16 %v243
      %v603 = vunpack.c.l.b16 %v244
      %v604 = vunpack.c.l.b16 %v245
      %v605 = vunpack.c.l.b16 %v246
      %v606 = vunpack.c.l.b16 %v247
      %v607 = vunpack.c.l.b16 %v248
      %v608 = vunpack.c.l.b16 %v249
      %v609 = vunpack.c.l.b16 %v250
      %v610 = vunpack.c.l.b16 %v251
      %v611 = vunpack.c.l.b16 %v252
      %v612 = vunpack.c.l.b16 %v253
      %v613 = vunpack.c.l.b16 %v254
      %v614 = vunpack.c.l.b16 %v255
      %v615 = vunpack.c.l.b16 %v256
      %v616 = vunpack.c.l.b16 %v257
      %v617 = vunpack.c.l.b16 %v258
      %v618 = vunpack.c.l.b16 %v259
      %v619 = vunpack.c.l.b16 %v260
      %v620 = vunpack.c.l.b16 %v261
      %v621 = vunpack.c.l.b16 %v262
      %v622 = vunpack.c.l.b16 %v263
      %v623 = vunpack.c.l.b16 %v264
      %v624 = vunpack.c.l.b16 %v265
      %v625 = vunpack.c.l.b16 %v266
      %v626 = vunpack.c.l.b16 %v267
      %v627 = vunpack.c.l.b16 %v268
      %v628 = vunpack.c.l.b16 %v269
      %v629 = vunpack.c.l.b16 %v270
      %v630 = vunpack.c.l.b16 %v271
      %v631 = vunpack.c.l.b16 %v272
      %v632 = vunpack.c.l.b16 %v273
      %v633 = vunpack.c.l.b16 %v274
      %v634 = vunpack.c.l.b16 %v275
      %v635 = vunpack.c.l.b16 %v276
      %v636 = vunpack.c.l.b16 %v277
      %v637 = vunpack.c.l.b16 %v278
      %v638 = vunpack.c.l.b16 %v279
      %v639 = vunpack.c.l.b16 %v280
      %v640 = vunpack.c.l.b16 %v281
      %v641 = vunpack.c.l.b16 %v282
      %v642 = vunpack.c.l.b16 %v283
      %v643 = vunpack.c.l.b16 %v284
      %v644 = vunpack.c.l.b16 %v285
      %v645 = vunpack.c.l.b16 %v286
      %v646 = vunpack.c.l.b16 %v287
      %v647 = vunpack.c.l.b16 %v288
      %v648 = vunpack.c.l.b16 %v289
      %v649 = vpack.c.b16 %v602, %v601
      %v650 = vpack.c.b16 %v604, %v603
      %v651 = vpack.c.b16 %v606, %v605
      %v652 = vpack.c.b16 %v608, %v607
      %v653 = vpack.c.b16 %v610, %v609
      %v654 = vpack.c.b16 %v612, %v611
      %v655 = vpack.c.b16 %v614, %v613
      %v656 = vpack.c.b16 %v616, %v615
      %v657 = vpack.c.b16 %v618, %v617
      %v658 = vpack.c.b16 %v620, %v619
      %v659 = vpack.c.b16 %v622, %v621
      %v660 = vpack.c.b16 %v624, %v623
      %v661 = vpack.c.b16 %v626, %v625
      %v662 = vpack.c.b16 %v628, %v627
      %v663 = vpack.c.b16 %v630, %v629
      %v664 = vpack.c.b16 %v632, %v631
      %v665 = vpack.c.b16 %v634, %v633
      %v666 = vpack.c.b16 %v636, %v635
      %v667 = vpack.c.b16 %v638, %v637
      %v668 = vpack.c.b16 %v640, %v639
      %v669 = vpack.c.b16 %v642, %v641
      %v670 = vpack.c.b16 %v644, %v643
      %v671 = vpack.c.b16 %v646, %v645
      %v672 = vpack.c.b16 %v648, %v647
      %697 = vmatprep.subr.bf16.mxu0 0
      %698 = vmatpush1.bf16.msra.mxu0 %v656
      %699 = vmatprep.subr.bf16.mxu0 0
      %700 = vmatpush1.bf16.msra.mxu0 %v655
      %701 = vmatprep.subr.bf16.mxu0 0
      %702 = vmatpush1.bf16.msra.mxu0 %v654
      %703 = vmatprep.subr.bf16.mxu0 0
      %704 = vmatpush1.bf16.msra.mxu0 %v653
      %705 = vmatprep.subr.bf16.mxu0 0
      %706 = vmatpush1.bf16.msra.mxu0 %v652
      %707 = vmatprep.subr.bf16.mxu0 0
      %708 = vmatpush1.bf16.msra.mxu0 %v651
      %709 = vmatprep.subr.bf16.mxu0 0
      %710 = vmatpush1.bf16.msra.mxu0 %v650
      %711 = vmatprep.subr.bf16.mxu0 0
      %712 = vmatpush1.bf16.msra.mxu0 %v649
      %713 = vmatprep.subr.bf16.mxu0 0
      %714 = vmatpush2.bf16.msra.mxu0 %v664
      %715 = vmatprep.subr.bf16.mxu0 0
      %716 = vmatpush2.bf16.msra.mxu0 %v663
      %717 = vmatprep.subr.bf16.mxu0 0
      %718 = vmatpush2.bf16.msra.mxu0 %v662
      %719 = vmatprep.subr.bf16.mxu0 0
      %720 = vmatpush2.bf16.msra.mxu0 %v661
      %721 = vmatprep.subr.bf16.mxu0 0
      %722 = vmatpush2.bf16.msra.mxu0 %v660
      %723 = vmatprep.subr.bf16.mxu0 0
      %724 = vmatpush2.bf16.msra.mxu0 %v659
      %725 = vmatprep.subr.bf16.mxu0 0
      %726 = vmatpush2.bf16.msra.mxu0 %v658
      %727 = vmatprep.subr.bf16.mxu0 0
      %728 = vmatpush2.bf16.msra.mxu0 %v657
      %729 = vmatprep.mubr.bf16.mxu0 %v458
      %730 = vmatmul.mubr.bf16.gmra.mxu0 %v457
      %v731 = vpop.f32.mrf.mxu0
      %v732 = vadd.f32 %v295, %v731
      %v733 = vpop.f32.mrf.mxu0
      %v734 = vpop.f32.mrf.mxu0
      %v735 = vadd.f32 %v295, %v734
      %v736 = vpop.f32.mrf.mxu0
      %737 = vmatprep.mubr.bf16.mxu0 %v461
      %738 = vmatmul.mubr.bf16.gmra.mxu0 %v460
      %v739 = vpop.f32.mrf.mxu0
      %v740 = vadd.f32 %v295, %v739
      %v741 = vpop.f32.mrf.mxu0
      %v742 = vpop.f32.mrf.mxu0
      %v743 = vadd.f32 %v295, %v742
      %v744 = vpop.f32.mrf.mxu0
      %745 = vmatprep.mubr.bf16.mxu0 %v464
      %746 = vmatmul.mubr.bf16.gmra.mxu0 %v463
      %v747 = vpop.f32.mrf.mxu0
      %v748 = vadd.f32 %v295, %v747
      %v749 = vpop.f32.mrf.mxu0
      %v750 = vpop.f32.mrf.mxu0
      %v751 = vadd.f32 %v295, %v750
      %v752 = vpop.f32.mrf.mxu0
      %753 = vmatprep.mubr.bf16.mxu0 %v467
      %754 = vmatmul.mubr.bf16.gmra.mxu0 %v466
      %v755 = vpop.f32.mrf.mxu0
      %v756 = vadd.f32 %v295, %v755
      %v757 = vpop.f32.mrf.mxu0
      %v758 = vpop.f32.mrf.mxu0
      %v759 = vadd.f32 %v295, %v758
      %v760 = vpop.f32.mrf.mxu0
      %761 = vmatprep.mubr.bf16.mxu0 %v470
      %762 = vmatmul.mubr.bf16.gmra.mxu0 %v469
      %v763 = vpop.f32.mrf.mxu0
      %v764 = vadd.f32 %v295, %v763
      %v765 = vpop.f32.mrf.mxu0
      %v766 = vpop.f32.mrf.mxu0
      %v767 = vadd.f32 %v295, %v766
      %v768 = vpop.f32.mrf.mxu0
      %769 = vmatprep.mubr.bf16.mxu0 %v473
      %770 = vmatmul.mubr.bf16.gmra.mxu0 %v472
      %v771 = vpop.f32.mrf.mxu0
      %v772 = vadd.f32 %v295, %v771
      %v773 = vpop.f32.mrf.mxu0
      %v774 = vpop.f32.mrf.mxu0
      %v775 = vadd.f32 %v295, %v774
      %v776 = vpop.f32.mrf.mxu0
      %777 = vmatprep.mubr.bf16.mxu0 %v476
      %778 = vmatmul.mubr.bf16.gmra.mxu0 %v475
      %v779 = vpop.f32.mrf.mxu0
      %v780 = vadd.f32 %v295, %v779
      %v781 = vpop.f32.mrf.mxu0
      %v782 = vpop.f32.mrf.mxu0
      %v783 = vadd.f32 %v295, %v782
      %v784 = vpop.f32.mrf.mxu0
      %785 = vmatprep.mubr.bf16.mxu0 %v479
      %786 = vmatmul.mubr.bf16.gmra.mxu0 %v478
      %v787 = vpop.f32.mrf.mxu0
      %v788 = vadd.f32 %v295, %v787
      %v789 = vpop.f32.mrf.mxu0
      %v790 = vpop.f32.mrf.mxu0
      %v791 = vadd.f32 %v295, %v790
      %v792 = vpop.f32.mrf.mxu0
      %793 = vmatprep.mubr.bf16.mxu0 %v482
      %794 = vmatmul.mubr.bf16.gmra.mxu0 %v481
      %v795 = vpop.f32.mrf.mxu0
      %v796 = vadd.f32 %v295, %v795
      %v797 = vpop.f32.mrf.mxu0
      %v798 = vpop.f32.mrf.mxu0
      %v799 = vadd.f32 %v295, %v798
      %v800 = vpop.f32.mrf.mxu0
      %801 = vmatprep.mubr.bf16.mxu0 %v485
      %802 = vmatmul.mubr.bf16.gmra.mxu0 %v484
      %v803 = vpop.f32.mrf.mxu0
      %v804 = vadd.f32 %v295, %v803
      %v805 = vpop.f32.mrf.mxu0
      %v806 = vpop.f32.mrf.mxu0
      %v807 = vadd.f32 %v295, %v806
      %v808 = vpop.f32.mrf.mxu0
      %809 = vmatprep.mubr.bf16.mxu0 %v488
      %810 = vmatmul.mubr.bf16.gmra.mxu0 %v487
      %v811 = vpop.f32.mrf.mxu0
      %v812 = vadd.f32 %v295, %v811
      %v813 = vpop.f32.mrf.mxu0
      %v814 = vpop.f32.mrf.mxu0
      %v815 = vadd.f32 %v295, %v814
      %v816 = vpop.f32.mrf.mxu0
      %817 = vmatprep.mubr.bf16.mxu0 %v491
      %818 = vmatmul.mubr.bf16.gmra.mxu0 %v490
      %v819 = vpop.f32.mrf.mxu0
      %v820 = vadd.f32 %v295, %v819
      %v821 = vpop.f32.mrf.mxu0
      %v822 = vpop.f32.mrf.mxu0
      %v823 = vadd.f32 %v295, %v822
      %v824 = vpop.f32.mrf.mxu0
      %825 = vmatprep.mubr.bf16.mxu0 %v494
      %826 = vmatmul.mubr.bf16.gmra.mxu0 %v493
      %v827 = vpop.f32.mrf.mxu0
      %v828 = vadd.f32 %v295, %v827
      %v829 = vpop.f32.mrf.mxu0
      %v830 = vpop.f32.mrf.mxu0
      %v831 = vadd.f32 %v295, %v830
      %v832 = vpop.f32.mrf.mxu0
      %833 = vmatprep.mubr.bf16.mxu0 %v497
      %834 = vmatmul.mubr.bf16.gmra.mxu0 %v496
      %v835 = vpop.f32.mrf.mxu0
      %v836 = vadd.f32 %v295, %v835
      %v837 = vpop.f32.mrf.mxu0
      %v838 = vpop.f32.mrf.mxu0
      %v839 = vadd.f32 %v295, %v838
      %v840 = vpop.f32.mrf.mxu0
      %841 = vmatprep.mubr.bf16.mxu0 %v500
      %842 = vmatmul.mubr.bf16.gmra.mxu0 %v499
      %v843 = vpop.f32.mrf.mxu0
      %v844 = vadd.f32 %v295, %v843
      %v845 = vpop.f32.mrf.mxu0
      %v846 = vpop.f32.mrf.mxu0
      %v847 = vadd.f32 %v295, %v846
      %v848 = vpop.f32.mrf.mxu0
      %849 = vmatprep.mubr.bf16.mxu0 %v503
      %850 = vmatmul.mubr.bf16.gmra.mxu0 %v502
      %v851 = vpop.f32.mrf.mxu0
      %v852 = vadd.f32 %v295, %v851
      %v853 = vpop.f32.mrf.mxu0
      %v854 = vpop.f32.mrf.mxu0
      %v855 = vadd.f32 %v295, %v854
      %v856 = vpop.f32.mrf.mxu0
      %857 = vdwg.mxu0
      %858 = vmatprep.subr.bf16.mxu0 0
      %859 = vmatpush1.bf16.msra.mxu0 %v672
      %860 = vmatprep.subr.bf16.mxu0 0
      %861 = vmatpush1.bf16.msra.mxu0 %v671
      %862 = vmatprep.subr.bf16.mxu0 0
      %863 = vmatpush1.bf16.msra.mxu0 %v670
      %864 = vmatprep.subr.bf16.mxu0 0
      %865 = vmatpush1.bf16.msra.mxu0 %v669
      %866 = vmatprep.subr.bf16.mxu0 0
      %867 = vmatpush1.bf16.msra.mxu0 %v668
      %868 = vmatprep.subr.bf16.mxu0 0
      %869 = vmatpush1.bf16.msra.mxu0 %v667
      %870 = vmatprep.subr.bf16.mxu0 0
      %871 = vmatpush1.bf16.msra.mxu0 %v666
      %872 = vmatprep.subr.bf16.mxu0 0
      %873 = vmatpush1.bf16.msra.mxu0 %v665
      %874 = vmatprep.subr.bf16.mxu0 0
      %875 = vmatpush2.bf16.msra.mxu0 0
      %876 = vmatprep.subr.bf16.mxu0 0
      %877 = vmatpush2.bf16.msra.mxu0 0
      %878 = vmatprep.subr.bf16.mxu0 0
      %879 = vmatpush2.bf16.msra.mxu0 0
      %880 = vmatprep.subr.bf16.mxu0 0
      %881 = vmatpush2.bf16.msra.mxu0 0
      %882 = vmatprep.subr.bf16.mxu0 0
      %883 = vmatpush2.bf16.msra.mxu0 0
      %884 = vmatprep.subr.bf16.mxu0 0
      %885 = vmatpush2.bf16.msra.mxu0 0
      %886 = vmatprep.subr.bf16.mxu0 0
      %887 = vmatpush2.bf16.msra.mxu0 0
      %888 = vmatprep.subr.bf16.mxu0 0
      %889 = vmatpush2.bf16.msra.mxu0 0
      %890 = vmatprep.mubr.bf16.mxu0 0
      %891 = vmatmul.mubr.bf16.gmra.mxu0 %v459
      %v892 = vpop.f32.mrf.mxu0
      %v893 = vadd.f32 %v732, %v892
      %v894 = vpop.f32.mrf.mxu0
      %v895 = vpop.f32.mrf.mxu0
      %v896 = vadd.f32 %v735, %v895
      %v897 = vpop.f32.mrf.mxu0
      %898 = vmatprep.mubr.bf16.mxu0 0
      %899 = vmatmul.mubr.bf16.gmra.mxu0 %v462
      %v900 = vpop.f32.mrf.mxu0
      %v901 = vadd.f32 %v740, %v900
      %v902 = vpop.f32.mrf.mxu0
      %v903 = vpop.f32.mrf.mxu0
      %v904 = vadd.f32 %v743, %v903
      %v905 = vpop.f32.mrf.mxu0
      %906 = vmatprep.mubr.bf16.mxu0 0
      %907 = vmatmul.mubr.bf16.gmra.mxu0 %v465
      %v908 = vpop.f32.mrf.mxu0
      %v909 = vadd.f32 %v748, %v908
      %v910 = vpop.f32.mrf.mxu0
      %v911 = vpop.f32.mrf.mxu0
      %v912 = vadd.f32 %v751, %v911
      %v913 = vpop.f32.mrf.mxu0
      %914 = vmatprep.mubr.bf16.mxu0 0
      %915 = vmatmul.mubr.bf16.gmra.mxu0 %v468
      %v916 = vpop.f32.mrf.mxu0
      %v917 = vadd.f32 %v756, %v916
      %v918 = vpop.f32.mrf.mxu0
      %v919 = vpop.f32.mrf.mxu0
      %v920 = vadd.f32 %v759, %v919
      %v921 = vpop.f32.mrf.mxu0
      %922 = vmatprep.mubr.bf16.mxu0 0
      %923 = vmatmul.mubr.bf16.gmra.mxu0 %v471
      %v924 = vpop.f32.mrf.mxu0
      %v925 = vadd.f32 %v764, %v924
      %v926 = vpop.f32.mrf.mxu0
      %v927 = vpop.f32.mrf.mxu0
      %v928 = vadd.f32 %v767, %v927
      %v929 = vpop.f32.mrf.mxu0
      %930 = vmatprep.mubr.bf16.mxu0 0
      %931 = vmatmul.mubr.bf16.gmra.mxu0 %v474
      %v932 = vpop.f32.mrf.mxu0
      %v933 = vadd.f32 %v772, %v932
      %v934 = vpop.f32.mrf.mxu0
      %v935 = vpop.f32.mrf.mxu0
      %v936 = vadd.f32 %v775, %v935
      %v937 = vpop.f32.mrf.mxu0
      %938 = vmatprep.mubr.bf16.mxu0 0
      %939 = vmatmul.mubr.bf16.gmra.mxu0 %v477
      %v940 = vpop.f32.mrf.mxu0
      %v941 = vadd.f32 %v780, %v940
      %v942 = vpop.f32.mrf.mxu0
      %v943 = vpop.f32.mrf.mxu0
      %v944 = vadd.f32 %v783, %v943
      %v945 = vpop.f32.mrf.mxu0
      %946 = vmatprep.mubr.bf16.mxu0 0
      %947 = vmatmul.mubr.bf16.gmra.mxu0 %v480
      %v948 = vpop.f32.mrf.mxu0
      %v949 = vadd.f32 %v788, %v948
      %v950 = vpop.f32.mrf.mxu0
      %v951 = vpop.f32.mrf.mxu0
      %v952 = vadd.f32 %v791, %v951
      %v953 = vpop.f32.mrf.mxu0
      %954 = vmatprep.mubr.bf16.mxu0 0
      %955 = vmatmul.mubr.bf16.gmra.mxu0 %v483
      %v956 = vpop.f32.mrf.mxu0
      %v957 = vadd.f32 %v796, %v956
      %v958 = vpop.f32.mrf.mxu0
      %v959 = vpop.f32.mrf.mxu0
      %v960 = vadd.f32 %v799, %v959
      %v961 = vpop.f32.mrf.mxu0
      %962 = vmatprep.mubr.bf16.mxu0 0
      %963 = vmatmul.mubr.bf16.gmra.mxu0 %v486
      %v964 = vpop.f32.mrf.mxu0
      %v965 = vadd.f32 %v804, %v964
      %v966 = vpop.f32.mrf.mxu0
      %v967 = vpop.f32.mrf.mxu0
      %v968 = vadd.f32 %v807, %v967
      %v969 = vpop.f32.mrf.mxu0
      %970 = vmatprep.mubr.bf16.mxu0 0
      %971 = vmatmul.mubr.bf16.gmra.mxu0 %v489
      %v972 = vpop.f32.mrf.mxu0
      %v973 = vadd.f32 %v812, %v972
      %v974 = vpop.f32.mrf.mxu0
      %v975 = vpop.f32.mrf.mxu0
      %v976 = vadd.f32 %v815, %v975
      %v977 = vpop.f32.mrf.mxu0
      %978 = vmatprep.mubr.bf16.mxu0 0
      %979 = vmatmul.mubr.bf16.gmra.mxu0 %v492
      %v980 = vpop.f32.mrf.mxu0
      %v981 = vadd.f32 %v820, %v980
      %v982 = vpop.f32.mrf.mxu0
      %v983 = vpop.f32.mrf.mxu0
      %v984 = vadd.f32 %v823, %v983
      %v985 = vpop.f32.mrf.mxu0
      %986 = vmatprep.mubr.bf16.mxu0 0
      %987 = vmatmul.mubr.bf16.gmra.mxu0 %v495
      %v988 = vpop.f32.mrf.mxu0
      %v989 = vadd.f32 %v828, %v988
      %v990 = vpop.f32.mrf.mxu0
      %v991 = vpop.f32.mrf.mxu0
      %v992 = vadd.f32 %v831, %v991
      %v993 = vpop.f32.mrf.mxu0
      %994 = vmatprep.mubr.bf16.mxu0 0
      %995 = vmatmul.mubr.bf16.gmra.mxu0 %v498
      %v996 = vpop.f32.mrf.mxu0
      %v997 = vadd.f32 %v836, %v996
      %v998 = vpop.f32.mrf.mxu0
      %v999 = vpop.f32.mrf.mxu0
      %v1000 = vadd.f32 %v839, %v999
      %v1001 = vpop.f32.mrf.mxu0
      %1002 = vmatprep.mubr.bf16.mxu0 0
      %1003 = vmatmul.mubr.bf16.gmra.mxu0 %v501
      %v1004 = vpop.f32.mrf.mxu0
      %v1005 = vadd.f32 %v844, %v1004
      %v1006 = vpop.f32.mrf.mxu0
      %v1007 = vpop.f32.mrf.mxu0
      %v1008 = vadd.f32 %v847, %v1007
      %v1009 = vpop.f32.mrf.mxu0
      %1010 = vmatprep.mubr.bf16.mxu0 0
      %1011 = vmatmul.mubr.bf16.gmra.mxu0 %v504
      %v1012 = vpop.f32.mrf.mxu0
      %v1013 = vadd.f32 %v852, %v1012
      %v1014 = vpop.f32.mrf.mxu0
      %v1015 = vpop.f32.mrf.mxu0
      %v1016 = vadd.f32 %v855, %v1015
      %v1017 = vpop.f32.mrf.mxu0
      %1018 = vdwg.mxu0
      %v1019 = vmax.f32 %v893, 0.0
      %v1020 = vmax.f32 %v896, 0.0
      %v1021 = vmax.f32 %v901, 0.0
      %v1022 = vmax.f32 %v904, 0.0
      %v1023 = vmax.f32 %v909, 0.0
      %v1024 = vmax.f32 %v912, 0.0
      %v1025 = vmax.f32 %v917, 0.0
      %v1026 = vmax.f32 %v920, 0.0
      %v1027 = vmax.f32 %v925, 0.0
      %v1028 = vmax.f32 %v928, 0.0
      %v1029 = vmax.f32 %v933, 0.0
      %v1030 = vmax.f32 %v936, 0.0
      %v1031 = vmax.f32 %v941, 0.0
      %v1032 = vmax.f32 %v944, 0.0
      %v1033 = vmax.f32 %v949, 0.0
      %v1034 = vmax.f32 %v952, 0.0
      %v1035 = vmax.f32 %v957, 0.0
      %v1036 = vmax.f32 %v960, 0.0
      %v1037 = vmax.f32 %v965, 0.0
      %v1038 = vmax.f32 %v968, 0.0
      %v1039 = vmax.f32 %v973, 0.0
      %v1040 = vmax.f32 %v976, 0.0
      %v1041 = vmax.f32 %v981, 0.0
      %v1042 = vmax.f32 %v984, 0.0
      %v1043 = vmax.f32 %v989, 0.0
      %v1044 = vmax.f32 %v992, 0.0
      %v1045 = vmax.f32 %v997, 0.0
      %v1046 = vmax.f32 %v1000, 0.0
      %v1047 = vmax.f32 %v1005, 0.0
      %v1048 = vmax.f32 %v1008, 0.0
      %v1049 = vmax.f32 %v1013, 0.0
      %v1050 = vmax.f32 %v1016, 0.0
      %1051 = vst [vmem:[%s175] sm:$0xff] %v1019
      %1052 = vst [vmem:[%s175 + $0x8] sm:$0xff] %v1020
      %1053 = vst [vmem:[%s175 + $0x10] sm:$0xff] %v1021
      %1054 = vst [vmem:[%s175 + $0x18] sm:$0xff] %v1022
      %1055 = vst [vmem:[%s175 + $0x20] sm:$0xff] %v1023
      %1056 = vst [vmem:[%s175 + $0x28] sm:$0xff] %v1024
      %1057 = vst [vmem:[%s175 + $0x30] sm:$0xff] %v1025
      %1058 = vst [vmem:[%s175 + $0x38] sm:$0xff] %v1026
      %1059 = vst [vmem:[%s175 + $0x40] sm:$0xff] %v1027
      %1060 = vst [vmem:[%s175 + $0x48] sm:$0xff] %v1028
      %1061 = vst [vmem:[%s175 + $0x50] sm:$0xff] %v1029
      %1062 = vst [vmem:[%s175 + $0x58] sm:$0xff] %v1030
      %1063 = vst [vmem:[%s175 + $0x60] sm:$0xff] %v1031
      %1064 = vst [vmem:[%s175 + $0x68] sm:$0xff] %v1032
      %1065 = vst [vmem:[%s175 + $0x70] sm:$0xff] %v1033
      %1066 = vst [vmem:[%s175 + $0x78] sm:$0xff] %v1034
      %1067 = vst [vmem:[%s175 + $0x80] sm:$0xff] %v1035
      %1068 = vst [vmem:[%s175 + $0x88] sm:$0xff] %v1036
      %1069 = vst [vmem:[%s175 + $0x90] sm:$0xff] %v1037
      %1070 = vst [vmem:[%s175 + $0x98] sm:$0xff] %v1038
      %1071 = vst [vmem:[%s175 + $0xa0] sm:$0xff] %v1039
      %1072 = vst [vmem:[%s175 + $0xa8] sm:$0xff] %v1040
      %1073 = vst [vmem:[%s175 + $0xb0] sm:$0xff] %v1041
      %1074 = vst [vmem:[%s175 + $0xb8] sm:$0xff] %v1042
      %1075 = vst [vmem:[%s175 + $0xc0] sm:$0xff] %v1043
      %1076 = vst [vmem:[%s175 + $0xc8] sm:$0xff] %v1044
      %1077 = vst [vmem:[%s175 + $0xd0] sm:$0xff] %v1045
      %1078 = vst [vmem:[%s175 + $0xd8] sm:$0xff] %v1046
      %1079 = vst [vmem:[%s175 + $0xe0] sm:$0xff] %v1047
      %1080 = vst [vmem:[%s175 + $0xe8] sm:$0xff] %v1048
      %1081 = vst [vmem:[%s175 + $0xf0] sm:$0xff] %v1049
      %1082 = vst [vmem:[%s175 + $0xf8] sm:$0xff] %v1050
      %s1083 = smul.u32 32, %s14
      %p1084 = scmp.lt.s32.totalorder %s1083, 63
      %s1085 = scalar_select %p1084, %s1083, 63
      %s1086 = smul.addr %s1085, 8
      %s1087 = scalar_lea.vmem %s3, %s1086
      // Predicated region
      $region33: #{yolact_wrapper_forward.10} parent=31 // pred_check
        %p1088 = pneg %p100
      $region34: #{yolact_wrapper_forward.10} parent=31 // pred_check_branch
        %1090 = sbr.rel (%p1088) target = $region36
      $region35: #{yolact_wrapper_forward.10} parent=31 // pred_region
        %s1091 = smul.u32 32, %s14
      $region36: #{yolact_wrapper_forward.10} parent=31 // pred_fallthru
        _
    $region32: #{yolact_wrapper_forward.10} parent=5 // pred_fallthru
      _
    %p1092 = scmp.le.s32.totalorder 2, %s9
    // Predicated region
    $region37: #{yolact_wrapper_forward.10} parent=5 // pred_check
      %p1093 = pneg %p1092
    $region38: #{yolact_wrapper_forward.10} parent=5 // pred_check_branch
      %1095 = sbr.rel (%p1093) target = $region40
    $region39: #{yolact_wrapper_forward.10} parent=5 // pred_region
      %s1096 = ssub.s32 %s9, 2
      // Predicated region
      $region41: #{yolact_wrapper_forward.10} parent=39 // pred_check
        %p1097 = pneg %p106
      $region42: #{yolact_wrapper_forward.10} parent=39 // pred_check_branch
        %1099 = sbr.rel (%p1097) target = $region44
      $region43: #{yolact_wrapper_forward.10} parent=39 // pred_region
        %s1100 = smul.u32 32, %s15
        %p1101 = scmp.lt.s32.totalorder %s1100, 63
        %s1102 = scalar_select %p1101, %s1100, 63
        %s1103 = smul.addr %s1102, 8
        %s1104 = scalar_lea.vmem %s3, %s1103
      $region44: #{yolact_wrapper_forward.10} parent=39 // pred_fallthru
        _
    $region40: #{yolact_wrapper_forward.10} parent=5 // pred_fallthru
      _
  $region6: #{yolact_wrapper_forward.10} parent=0 // loop_footer
    %s13 = sadd.s32 1, %s9
  $region7: #{yolact_wrapper_forward.10} parent=0 // loop_footer_branch
    %8 = sbr.rel target = $region3
  $region8: #{yolact_wrapper_forward.10} parent=0 // loop_exit
    _

</llo_original>
